<compile_context>
chip_gen: v6e
topology: v6e:2x2x1
jax: 0.10.0
libtpu: 0.0.40
codegen_flags: <defaults>
</compile_context>

<pallas_src>
import functools
import math

import jax
import jax.numpy as jnp
from jax.experimental import pallas as pl
from jax.experimental.pallas import tpu as pltpu

# ------------------------- synthetic small config -------------------------
PAD_IDX = 0
VOCAB = 64
HIDDEN = 32
N_LAYERS = 2
N_HEADS = 4
HEAD_DIM = HIDDEN // N_HEADS
INTERMEDIATE = 64
MAX_POS = 64
TYPE_VOCAB = 2
N_OFFSETS = 128          # num_possible_word_offsets in the module
LN_EPS = 1e-12
INIT_RANGE = 0.02
NEG_INF = -10000.0


# --------------------------- in-kernel helpers ----------------------------
def _mxu_dot(a, b):
    """bf16 MXU matmul with f32 accumulation."""
    return jnp.dot(a.astype(jnp.bfloat16), b.astype(jnp.bfloat16),
                   preferred_element_type=jnp.float32)


def _mxu_dot_t(a, b):
    """a [M,K] contracted with b [N,K] on K (b used transposed, no copy)."""
    return jax.lax.dot_general(
        a.astype(jnp.bfloat16), b.astype(jnp.bfloat16),
        dimension_numbers=(((1,), (1,)), ((), ())),
        preferred_element_type=jnp.float32)


def _layer_norm(x, gamma, beta, eps=LN_EPS):
    mu = jnp.mean(x, axis=-1, keepdims=True)
    var = jnp.mean(jnp.square(x - mu), axis=-1, keepdims=True)
    return (x - mu) * jax.lax.rsqrt(var + eps) * gamma + beta


def _gelu(x):
    # TODO(synk): reference pytorch-pretrained-bert uses exact erf-GELU; the
    # original-BERT tanh approximation is used here (EUP-friendly lowering).
    return 0.5 * x * (1.0 + jnp.tanh(0.7978845608028654 * (x + 0.044715 * x * x * x)))


# ---------------------- fused encoder-stack kernel ------------------------
def _encoder_stack_kernel(pad_ref, tt_ref, x_in_ref, embg_ref, embb_ref,
                          qkvw_ref, qkvb_ref, ow_ref, ob_ref, ln1g_ref, ln1b_ref,
                          iw_ref, ib_ref, outw_ref, outb_ref, ln2g_ref, ln2b_ref,
                          x_ref, *, seq_len, n_heads, head_dim, inference):
    l = pl.program_id(1)
    S = seq_len
    H = n_heads * head_dim

    # Layer 0: embedding LayerNorm fused here (no residual, no extra launch).
    @pl.when(l == 0)
    def _():
        x0 = x_in_ref[...].astype(jnp.float32)
        x_ref[...] = _layer_norm(x0, embg_ref[...], embb_ref[...]).astype(x_ref.dtype)

    x = x_ref[...].astype(jnp.float32)                       # [S, H], VMEM-resident

    # ---- fused QKV projection ----
    qkv = _mxu_dot(x, qkvw_ref[0]) + qkvb_ref[0]             # [S, 3H]

    # ---- attention bias computed in-kernel from the [1, S] masks ----
    pad_j = jnp.broadcast_to(pad_ref[0] != 0, (S, S))        # key j is padding
    if inference:
        masked = pad_j
    else:
        row = jax.lax.broadcasted_iota(jnp.int32, (S, S), 0)
        col = jax.lax.broadcasted_iota(jnp.int32, (S, S), 1)
        causal = col > row                                   # strictly-future keys
        tt_j = jnp.broadcast_to(tt_ref[0] == 1, (S, S))      # causal only for type-1 keys
        masked = jnp.logical_or(jnp.logical_and(causal, tt_j), pad_j)
    bias = jnp.where(masked, jnp.float32(NEG_INF), jnp.float32(0.0))

    # ---- multi-head attention (heads as static lane slices, f32 softmax) ----
    scale = jnp.float32(1.0 / math.sqrt(head_dim))
    o_w = ow_ref[0]                                          # [H, H]
    acc = jnp.zeros((S, H), jnp.float32)
    for h in range(n_heads):
        lo = h * head_dim
        hi = lo + head_dim
        q_h = qkv[:, lo:hi] * scale                          # scale folded into q
        k_h = qkv[:, H + lo:H + hi]
        v_h = qkv[:, 2 * H + lo:2 * H + hi]
        s = _mxu_dot_t(q_h, k_h) + bias                      # [S, S]
        s = s - jnp.max(s, axis=-1, keepdims=True)
        p = jnp.exp(s)
        p = p * pl.reciprocal(jnp.sum(p, axis=-1, keepdims=True), approx=True)
        ctx_h = _mxu_dot(p, v_h)                             # [S, dh]
        # per-head slice of the output projection => no concat needed
        acc = acc + _mxu_dot(ctx_h, o_w[lo:hi, :])
    attn = acc + ob_ref[0]

    # ---- residual + LayerNorm (fused epilogue) ----
    x = _layer_norm(attn + x, ln1g_ref[0], ln1b_ref[0])

    # ---- FFN (GELU) + residual + LayerNorm ----
    inter = _gelu(_mxu_dot(x, iw_ref[0]) + ib_ref[0])
    ffn = _mxu_dot(inter, outw_ref[0]) + outb_ref[0]
    x = _layer_norm(ffn + x, ln2g_ref[0], ln2b_ref[0])

    x_ref[...] = x.astype(x_ref.dtype)


def encoder_stack(params, x_emb, pad_mask, tt_mask, inference):
    B = pad_mask.shape[0]
    S = pad_mask.shape[2]
    M, H = x_emb.shape
    L = params["qkv_w"].shape[0]
    I = params["i_w"].shape[2]

    kernel = functools.partial(_encoder_stack_kernel, seq_len=S, n_heads=N_HEADS,
                               head_dim=HEAD_DIM, inference=inference)

    def lyr(nr, nc):          # per-layer stacked weight, indexed by the layer axis
        return pl.BlockSpec((1, nr, nc), lambda b, l: (l, 0, 0))

    def fixed(nr, nc):        # layer-independent small tensor
        return pl.BlockSpec((nr, nc), lambda b, l: (0, 0))

    per_b_mask = pl.BlockSpec((1, 1, S), lambda b, l: (b, 0, 0))

    return pl.pallas_call(
        kernel,
        out_shape=jax.ShapeDtypeStruct((M, H), jnp.float32),
        grid=(B, L),
        in_specs=[
            per_b_mask,                                    # padding mask
            per_b_mask,                                    # token-type mask
            pl.BlockSpec((S, H), lambda b, l: (b, 0)),     # embeddings
            fixed(1, H), fixed(1, H),                      # embedding LN
            lyr(H, 3 * H), lyr(1, 3 * H),                  # fused QKV
            lyr(H, H), lyr(1, H),                          # attn output proj
            lyr(1, H), lyr(1, H),                          # attn LN
            lyr(H, I), lyr(1, I),                          # intermediate
            lyr(I, H), lyr(1, H),                          # FFN output proj
            lyr(1, H), lyr(1, H),                          # output LN
        ],
        # same block index across the layer axis => activation stays in VMEM
        out_specs=pl.BlockSpec((S, H), lambda b, l: (b, 0)),
        compiler_params=pltpu.CompilerParams(
            dimension_semantics=("parallel", "arbitrary")),
    )(pad_mask, tt_mask, x_emb,
      params["emb_ln_g"], params["emb_ln_b"],
      params["qkv_w"], params["qkv_b"],
      params["o_w"], params["o_b"],
      params["attn_ln_g"], params["attn_ln_b"],
      params["i_w"], params["i_b"],
      params["out_w"], params["out_b"],
      params["out_ln_g"], params["out_ln_b"])


# ------------------------- fused prediction heads --------------------------
def _head_kernel(x_ref, dw_ref, db_ref, lng_ref, lnb_ref, emb_ref, decb_ref,
                 offw_ref, offb_ref, lm_ref, off_ref):
    x = x_ref[...].astype(jnp.float32)                       # [TM, H]

    # offset tagger on the (dropout=identity) sequence output; 128-lane-dense out
    off_ref[...] = (_mxu_dot(x, offw_ref[...]) + offb_ref[...]).astype(off_ref.dtype)

    # BertPredictionHead: dense + GELU + LayerNorm, decoder tied to word_emb
    t = _gelu(_mxu_dot(x, dw_ref[...]) + db_ref[...])
    t = _layer_norm(t, lng_ref[...], lnb_ref[...])
    logits = _mxu_dot_t(t, emb_ref[...]) + decb_ref[...]     # no transpose copy of word_emb
    lm_ref[...] = logits.astype(lm_ref.dtype)


def prediction_heads(params, seq_out):
    M, H = seq_out.shape
    V = params["word_emb"].shape[0]
    TM = 8 if (M % 8 == 0 and M > 8) else M                  # row-parallel axis (uses both TCs on v7x)

    def full(nr, nc):
        return pl.BlockSpec((nr, nc), lambda i: (0, 0))

    return pl.pallas_call(
        _head_kernel,
        out_shape=(jax.ShapeDtypeStruct((M, V), jnp.float32),
                   jax.ShapeDtypeStruct((M, N_OFFSETS), jnp.float32)),
        grid=(M // TM,),
        in_specs=[
            pl.BlockSpec((TM, H), lambda i: (i, 0)),
            full(H, H), full(1, H),                          # cls dense
            full(1, H), full(1, H),                          # cls LN
            full(V, H), full(1, V),                          # tied decoder (+bias)
            full(H, N_OFFSETS), full(1, N_OFFSETS),          # offset tagger
        ],
        out_specs=[pl.BlockSpec((TM, V), lambda i: (i, 0)),
                   pl.BlockSpec((TM, N_OFFSETS), lambda i: (i, 0))],
        compiler_params=pltpu.CompilerParams(dimension_semantics=("parallel",)),
    )(seq_out, params["cls_dense_w"], params["cls_dense_b"],
      params["cls_ln_g"], params["cls_ln_b"],
      params["word_emb"], params["cls_decoder_b"],
      params["offset_w"], params["offset_b"])


# ------------------------------- parameters --------------------------------
def init_params(key):
    keys = iter(jax.random.split(key, 32))

    def normal(shape):
        return (INIT_RANGE * jax.random.normal(next(keys), shape)).astype(jnp.float32)

    L, H, I = N_LAYERS, HIDDEN, INTERMEDIATE
    ones = lambda *s: jnp.ones(s, jnp.float32)
    zeros = lambda *s: jnp.zeros(s, jnp.float32)

    # per-layer weights stacked along a leading layer axis; q/k/v fused to [H, 3H]
    return {
        "word_emb": normal((VOCAB, H)),
        "pos_emb": normal((MAX_POS, H)),
        "type_emb": normal((TYPE_VOCAB, H)),
        "emb_ln_g": ones(1, H), "emb_ln_b": zeros(1, H),
        "qkv_w": normal((L, H, 3 * H)), "qkv_b": zeros(L, 1, 3 * H),
        "o_w": normal((L, H, H)), "o_b": zeros(L, 1, H),
        "attn_ln_g": ones(L, 1, H), "attn_ln_b": zeros(L, 1, H),
        "i_w": normal((L, H, I)), "i_b": zeros(L, 1, I),
        "out_w": normal((L, I, H)), "out_b": zeros(L, 1, H),
        "out_ln_g": ones(L, 1, H), "out_ln_b": zeros(L, 1, H),
        "cls_dense_w": normal((H, H)), "cls_dense_b": zeros(1, H),
        "cls_ln_g": ones(1, H), "cls_ln_b": zeros(1, H),
        "cls_decoder_b": zeros(1, VOCAB),                    # decoder weight tied to word_emb
        "offset_w": normal((H, N_OFFSETS)), "offset_b": zeros(1, N_OFFSETS),
    }


# ------------------------- jitted dense forward -----------------------------
@functools.partial(jax.jit, static_argnames=("inference",))
def _dense_forward(params, input_ids, token_type_ids, position_ids,
                   attention_mask, kp_tgt_mask, inference):
    B, S = input_ids.shape
    H = HIDDEN

    # embeddings (gather glue; LayerNorm fused into encoder kernel at layer 0)
    emb = (params["word_emb"][input_ids]
           + params["pos_emb"][position_ids]
           + params["type_emb"][token_type_ids]).astype(jnp.float32)
    x_emb = emb.reshape(B * S, H)

    pad = attention_mask.astype(jnp.int32).reshape(B, 1, S)
    tt = token_type_ids.astype(jnp.int32).reshape(B, 1, S)

    seq_out = encoder_stack(params, x_emb, pad, tt, inference)       # [B*S, H]
    lm_out, wo_out = prediction_heads(params, seq_out)               # [B*S, V], [B*S, 128]

    lm_out = lm_out.reshape(B, S, VOCAB)
    wo_out = wo_out.reshape(B, S, N_OFFSETS)
    seq_out = seq_out.reshape(B, S, H)

    if inference:
        counts = jnp.zeros((B,), jnp.int32)
        return lm_out, seq_out, wo_out, wo_out, counts

    # static-shape kp-tgt gather: scatter selected rows to the front, zero-pad.
    m = kp_tgt_mask.astype(jnp.int32)
    counts = jnp.sum(m, axis=1)                                      # [B]
    rank = jnp.cumsum(m, axis=1) - 1
    dest = jnp.where(m == 1, rank, S)                                # invalid rows -> slot S (dropped)
    batch_idx = jnp.broadcast_to(jnp.arange(B)[:, None], (B, S))
    gathered = jnp.zeros((B, S + 1, N_OFFSETS), wo_out.dtype)
    gathered = gathered.at[batch_idx, dest].add(wo_out)[:, :S]       # [B, S, 128]
    return lm_out, seq_out, wo_out, gathered, counts


# --------------------------------- forward ----------------------------------
def bert_planning_forward(params, input_ids, kp_tgt_mask=None, attention_mask=None,
                          token_type_ids=None, position_ids=None, inference=False):
    B, S = input_ids.shape
    if attention_mask is None:
        attention_mask = (input_ids == PAD_IDX)                      # True = padding (masked)
    if token_type_ids is None:
        token_type_ids = jnp.zeros((B, S), jnp.int32)
    if position_ids is None:
        position_ids = jnp.broadcast_to(jnp.arange(S, dtype=jnp.int32), (B, S))
    if kp_tgt_mask is None:
        kp_tgt_mask = jnp.zeros((B, S), jnp.int32)

    lm_out, seq_out, wo_full, wo_gathered, counts = _dense_forward(
        params, input_ids, token_type_ids, position_ids,
        attention_mask.astype(jnp.int32), kp_tgt_mask, inference=inference)

    if inference:
        offset_out = wo_full
    else:
        # Output length is data dependent (max kp-tgt count); only this scalar
        # needs a host sync — all heavy compute above is a single jitted graph.
        max_len = int(jax.device_get(jnp.max(counts)))
        offset_out = wo_gathered[:, :max_len]

    return {
        "lm_out": lm_out,
        "transformer_padding_mask": attention_mask,
        "encoder_states": (seq_out,),
        "offset_out": offset_out,
    }


# ----------------------------------- main ------------------------------------
if __name__ == "__main__":
    key = jax.random.PRNGKey(0)
    pkey, dkey = jax.random.split(key)
    params = init_params(pkey)

    B, S = 2, 8
    input_ids = jax.random.randint(dkey, (B, S), 1, VOCAB, dtype=jnp.int32)
    input_ids = input_ids.at[1, S - 2:].set(PAD_IDX)        # padding in second sequence
    token_type_ids = jnp.array([[0, 0, 0, 1, 1, 1, 1, 1],
                                [0, 0, 0, 0, 1, 1, 0, 0]], jnp.int32)
    kp_tgt_mask = jnp.array([[0, 0, 0, 1, 1, 1, 1, 1],
                             [0, 0, 0, 0, 1, 1, 0, 0]], jnp.int32)

    # training-mode forward (hybrid-causal mask + kp-tgt gather)
    out = bert_planning_forward(params, input_ids,
                                kp_tgt_mask=kp_tgt_mask,
                                token_type_ids=token_type_ids,
                                inference=False)
    jax.tree_util.tree_map(jax.block_until_ready, out)
    expected_kp = int(kp_tgt_mask.sum(axis=1).max())
    assert out["lm_out"].shape == (B, S, VOCAB)
    assert out["offset_out"].shape == (B, expected_kp, N_OFFSETS)
    assert out["encoder_states"][0].shape == (B, S, HIDDEN)

    # inference-mode forward (padding-only mask, no gather)
    out_inf = bert_planning_forward(params, input_ids,
                                    token_type_ids=token_type_ids,
                                    inference=True)
    jax.tree_util.tree_map(jax.block_until_ready, out_inf)
    assert out_inf["lm_out"].shape == (B, S, VOCAB)
    assert out_inf["offset_out"].shape == (B, S, N_OFFSETS)

    print("KERNEL_OK")
</pallas_src>

<mosaic_0001>
module attributes {stable_mosaic.version = 11 : i64} {
  func.func @_head_kernel(%arg0: i32, %arg1: memref<8x32xf32, #tpu.memory_space<vmem>>, %arg2: memref<32x32xf32, #tpu.memory_space<vmem>>, %arg3: memref<1x32xf32, #tpu.memory_space<vmem>>, %arg4: memref<1x32xf32, #tpu.memory_space<vmem>>, %arg5: memref<1x32xf32, #tpu.memory_space<vmem>>, %arg6: memref<64x32xf32, #tpu.memory_space<vmem>>, %arg7: memref<1x64xf32, #tpu.memory_space<vmem>>, %arg8: memref<32x128xf32, #tpu.memory_space<vmem>>, %arg9: memref<1x128xf32, #tpu.memory_space<vmem>>, %arg10: memref<8x64xf32, #tpu.memory_space<vmem>>, %arg11: memref<8x128xf32, #tpu.memory_space<vmem>>) attributes {dimension_semantics = [#tpu.dimension_semantics<parallel>], iteration_bounds = array<i64: 2>, scalar_prefetch = 0 : i64, scratch_operands = 0 : i64, tpu.core_type = #tpu.core_type<tc>, window_params = [{transform_indices = @transform_0, window_bounds = array<i64: 8, 32>}, {pipeline_mode = #tpu.pipeline_mode<synchronous>, transform_indices = @transform_1, window_bounds = array<i64: 32, 32>}, {pipeline_mode = #tpu.pipeline_mode<synchronous>, transform_indices = @transform_2, window_bounds = array<i64: 1, 32>}, {pipeline_mode = #tpu.pipeline_mode<synchronous>, transform_indices = @transform_3, window_bounds = array<i64: 1, 32>}, {pipeline_mode = #tpu.pipeline_mode<synchronous>, transform_indices = @transform_4, window_bounds = array<i64: 1, 32>}, {pipeline_mode = #tpu.pipeline_mode<synchronous>, transform_indices = @transform_5, window_bounds = array<i64: 64, 32>}, {pipeline_mode = #tpu.pipeline_mode<synchronous>, transform_indices = @transform_6, window_bounds = array<i64: 1, 64>}, {pipeline_mode = #tpu.pipeline_mode<synchronous>, transform_indices = @transform_7, window_bounds = array<i64: 32, 128>}, {pipeline_mode = #tpu.pipeline_mode<synchronous>, transform_indices = @transform_8, window_bounds = array<i64: 1, 128>}, {transform_indices = @transform_9, window_bounds = array<i64: 8, 64>}, {transform_indices = @transform_10, window_bounds = array<i64: 8, 128>}]} {
    %c0 = arith.constant 0 : index
    %c0_0 = arith.constant 0 : index
    %0 = vector.load %arg1[%c0, %c0_0] : memref<8x32xf32, #tpu.memory_space<vmem>>, vector<8x32xf32>
    %c0_1 = arith.constant 0 : index
    %c0_2 = arith.constant 0 : index
    %1 = vector.load %arg8[%c0_1, %c0_2] : memref<32x128xf32, #tpu.memory_space<vmem>>, vector<32x128xf32>
    %2 = arith.truncf %0 : vector<8x32xf32> to vector<8x32xbf16>
    %3 = arith.truncf %1 : vector<32x128xf32> to vector<32x128xbf16>
    %cst = arith.constant dense<0.000000e+00> : vector<8x128xf32>
    %4 = tpu.matmul %2, %3, %cst {dimension_numbers = #tpu.dot_dimension_numbers<[1], [0], [0], [1], [0, 0, 1, 1], [], []>} : vector<8x32xbf16>, vector<32x128xbf16>, vector<8x128xf32> -> vector<8x128xf32>
    %c0_3 = arith.constant 0 : index
    %c0_4 = arith.constant 0 : index
    %5 = vector.load %arg9[%c0_3, %c0_4] : memref<1x128xf32, #tpu.memory_space<vmem>>, vector<1x128xf32>
    %6 = vector.broadcast %5 : vector<1x128xf32> to vector<8x128xf32>
    %7 = arith.addf %4, %6 : vector<8x128xf32>
    %c0_5 = arith.constant 0 : index
    %c0_6 = arith.constant 0 : index
    %8 = vector.load %arg11[%c0_5, %c0_6] : memref<8x128xf32, #tpu.memory_space<vmem>>, vector<8x128xf32>
    tpu.vector_store %arg11[%c0_5, %c0_6], %7 {strides = array<i32>} : memref<8x128xf32, #tpu.memory_space<vmem>>, vector<8x128xf32>,
    %c0_7 = arith.constant 0 : index
    %c0_8 = arith.constant 0 : index
    %9 = vector.load %arg2[%c0_7, %c0_8] : memref<32x32xf32, #tpu.memory_space<vmem>>, vector<32x32xf32>
    %10 = arith.truncf %0 : vector<8x32xf32> to vector<8x32xbf16>
    %11 = arith.truncf %9 : vector<32x32xf32> to vector<32x32xbf16>
    %cst_9 = arith.constant dense<0.000000e+00> : vector<8x32xf32>
    %12 = tpu.matmul %10, %11, %cst_9 {dimension_numbers = #tpu.dot_dimension_numbers<[1], [0], [0], [1], [0, 0, 1, 1], [], []>} : vector<8x32xbf16>, vector<32x32xbf16>, vector<8x32xf32> -> vector<8x32xf32>
    %c0_10 = arith.constant 0 : index
    %c0_11 = arith.constant 0 : index
    %13 = vector.load %arg3[%c0_10, %c0_11] : memref<1x32xf32, #tpu.memory_space<vmem>>, vector<1x32xf32>
    %14 = vector.broadcast %13 : vector<1x32xf32> to vector<8x32xf32>
    %15 = arith.addf %12, %14 : vector<8x32xf32>
    %cst_12 = arith.constant 5.000000e-01 : f32
    %16 = vector.broadcast %cst_12 : f32 to vector<8x32xf32>
    %17 = arith.mulf %16, %15 : vector<8x32xf32>
    %cst_13 = arith.constant 4.471500e-02 : f32
    %18 = vector.broadcast %cst_13 : f32 to vector<8x32xf32>
    %19 = arith.mulf %18, %15 : vector<8x32xf32>
    %20 = arith.mulf %19, %15 : vector<8x32xf32>
    %21 = arith.mulf %20, %15 : vector<8x32xf32>
    %22 = arith.addf %15, %21 : vector<8x32xf32>
    %cst_14 = arith.constant 0.797884583 : f32
    %23 = vector.broadcast %cst_14 : f32 to vector<8x32xf32>
    %24 = arith.mulf %23, %22 : vector<8x32xf32>
    %25 = math.tanh %24 : vector<8x32xf32>
    %cst_15 = arith.constant 1.000000e+00 : f32
    %26 = vector.broadcast %cst_15 : f32 to vector<8x32xf32>
    %27 = arith.addf %26, %25 : vector<8x32xf32>
    %28 = arith.mulf %17, %27 : vector<8x32xf32>
    %c0_16 = arith.constant 0 : index
    %c0_17 = arith.constant 0 : index
    %29 = vector.load %arg4[%c0_16, %c0_17] : memref<1x32xf32, #tpu.memory_space<vmem>>, vector<1x32xf32>
    %c0_18 = arith.constant 0 : index
    %c0_19 = arith.constant 0 : index
    %30 = vector.load %arg5[%c0_18, %c0_19] : memref<1x32xf32, #tpu.memory_space<vmem>>, vector<1x32xf32>
    %cst_20 = arith.constant dense<0.000000e+00> : vector<8xf32>
    %31 = vector.multi_reduction <add>, %28, %cst_20 [1] : vector<8x32xf32> to vector<8xf32>
    %32 = vector.shape_cast %31 : vector<8xf32> to vector<8x1xf32>
    %cst_21 = arith.constant 3.200000e+01 : f32
    %33 = vector.broadcast %cst_21 : f32 to vector<8x1xf32>
    %34 = arith.divf %32, %33 : vector<8x1xf32>
    %35 = vector.broadcast %34 : vector<8x1xf32> to vector<8x32xf32>
    %36 = arith.subf %28, %35 : vector<8x32xf32>
    %37 = arith.mulf %36, %36 : vector<8x32xf32>
    %cst_22 = arith.constant dense<0.000000e+00> : vector<8xf32>
    %38 = vector.multi_reduction <add>, %37, %cst_22 [1] : vector<8x32xf32> to vector<8xf32>
    %39 = vector.shape_cast %38 : vector<8xf32> to vector<8x1xf32>
    %cst_23 = arith.constant 3.200000e+01 : f32
    %40 = vector.broadcast %cst_23 : f32 to vector<8x1xf32>
    %41 = arith.divf %39, %40 : vector<8x1xf32>
    %42 = vector.broadcast %34 : vector<8x1xf32> to vector<8x32xf32>
    %43 = arith.subf %28, %42 : vector<8x32xf32>
    %cst_24 = arith.constant 9.99999996E-13 : f32
    %44 = vector.broadcast %cst_24 : f32 to vector<8x1xf32>
    %45 = arith.addf %41, %44 : vector<8x1xf32>
    %46 = math.rsqrt %45 : vector<8x1xf32>
    %47 = vector.broadcast %46 : vector<8x1xf32> to vector<8x32xf32>
    %48 = arith.mulf %43, %47 : vector<8x32xf32>
    %49 = vector.broadcast %29 : vector<1x32xf32> to vector<8x32xf32>
    %50 = arith.mulf %48, %49 : vector<8x32xf32>
    %51 = vector.broadcast %30 : vector<1x32xf32> to vector<8x32xf32>
    %52 = arith.addf %50, %51 : vector<8x32xf32>
    %c0_25 = arith.constant 0 : index
    %c0_26 = arith.constant 0 : index
    %53 = vector.load %arg6[%c0_25, %c0_26] : memref<64x32xf32, #tpu.memory_space<vmem>>, vector<64x32xf32>
    %54 = arith.truncf %52 : vector<8x32xf32> to vector<8x32xbf16>
    %55 = arith.truncf %53 : vector<64x32xf32> to vector<64x32xbf16>
    %cst_27 = arith.constant dense<0.000000e+00> : vector<8x64xf32>
    %56 = tpu.matmul %54, %55, %cst_27 {dimension_numbers = #tpu.dot_dimension_numbers<[1], [1], [0], [0], [0, 0, 1, 0], [], []>} : vector<8x32xbf16>, vector<64x32xbf16>, vector<8x64xf32> -> vector<8x64xf32>
    %c0_28 = arith.constant 0 : index
    %c0_29 = arith.constant 0 : index
    %57 = vector.load %arg7[%c0_28, %c0_29] : memref<1x64xf32, #tpu.memory_space<vmem>>, vector<1x64xf32>
    %58 = vector.broadcast %57 : vector<1x64xf32> to vector<8x64xf32>
    %59 = arith.addf %56, %58 : vector<8x64xf32>
    %c0_30 = arith.constant 0 : index
    %c0_31 = arith.constant 0 : index
    %60 = vector.load %arg10[%c0_30, %c0_31] : memref<8x64xf32, #tpu.memory_space<vmem>>, vector<8x64xf32>
    tpu.vector_store %arg10[%c0_30, %c0_31], %59 {strides = array<i32>} : memref<8x64xf32, #tpu.memory_space<vmem>>, vector<8x64xf32>,
    return
  }
  func.func @transform_0(%arg0: i32) -> (i32, i32) {
    %c0_i32 = arith.constant 0 : i32
    %c0_i32_0 = arith.constant 0 : i32
    return %arg0, %c0_i32 : i32, i32
  }
  func.func @transform_1(%arg0: i32) -> (i32, i32) {
    %c0_i32 = arith.constant 0 : i32
    %c0_i32_0 = arith.constant 0 : i32
    %c0_i32_1 = arith.constant 0 : i32
    return %c0_i32, %c0_i32_0 : i32, i32
  }
  func.func @transform_2(%arg0: i32) -> (i32, i32) {
    %c0_i32 = arith.constant 0 : i32
    %c0_i32_0 = arith.constant 0 : i32
    %c0_i32_1 = arith.constant 0 : i32
    return %c0_i32, %c0_i32_0 : i32, i32
  }
  func.func @transform_3(%arg0: i32) -> (i32, i32) {
    %c0_i32 = arith.constant 0 : i32
    %c0_i32_0 = arith.constant 0 : i32
    %c0_i32_1 = arith.constant 0 : i32
    return %c0_i32, %c0_i32_0 : i32, i32
  }
  func.func @transform_4(%arg0: i32) -> (i32, i32) {
    %c0_i32 = arith.constant 0 : i32
    %c0_i32_0 = arith.constant 0 : i32
    %c0_i32_1 = arith.constant 0 : i32
    return %c0_i32, %c0_i32_0 : i32, i32
  }
  func.func @transform_5(%arg0: i32) -> (i32, i32) {
    %c0_i32 = arith.constant 0 : i32
    %c0_i32_0 = arith.constant 0 : i32
    %c0_i32_1 = arith.constant 0 : i32
    return %c0_i32, %c0_i32_0 : i32, i32
  }
  func.func @transform_6(%arg0: i32) -> (i32, i32) {
    %c0_i32 = arith.constant 0 : i32
    %c0_i32_0 = arith.constant 0 : i32
    %c0_i32_1 = arith.constant 0 : i32
    return %c0_i32, %c0_i32_0 : i32, i32
  }
  func.func @transform_7(%arg0: i32) -> (i32, i32) {
    %c0_i32 = arith.constant 0 : i32
    %c0_i32_0 = arith.constant 0 : i32
    %c0_i32_1 = arith.constant 0 : i32
    return %c0_i32, %c0_i32_0 : i32, i32
  }
  func.func @transform_8(%arg0: i32) -> (i32, i32) {
    %c0_i32 = arith.constant 0 : i32
    %c0_i32_0 = arith.constant 0 : i32
    %c0_i32_1 = arith.constant 0 : i32
    return %c0_i32, %c0_i32_0 : i32, i32
  }
  func.func @transform_9(%arg0: i32) -> (i32, i32) {
    %c0_i32 = arith.constant 0 : i32
    %c0_i32_0 = arith.constant 0 : i32
    return %arg0, %c0_i32 : i32, i32
  }
  func.func @transform_10(%arg0: i32) -> (i32, i32) {
    %c0_i32 = arith.constant 0 : i32
    %c0_i32_0 = arith.constant 0 : i32
    return %arg0, %c0_i32 : i32, i32
  }
}

module attributes {stable_mosaic.version = 11 : i64} {
  func.func @_encoder_stack_kernel(%arg0: i32, %arg1: i32, %arg2: memref<1x1x8xi32, #tpu.memory_space<vmem>>, %arg3: memref<1x1x8xi32, #tpu.memory_space<vmem>>, %arg4: memref<8x32xf32, #tpu.memory_space<vmem>>, %arg5: memref<1x32xf32, #tpu.memory_space<vmem>>, %arg6: memref<1x32xf32, #tpu.memory_space<vmem>>, %arg7: memref<1x32x96xf32, #tpu.memory_space<vmem>>, %arg8: memref<1x1x96xf32, #tpu.memory_space<vmem>>, %arg9: memref<1x32x32xf32, #tpu.memory_space<vmem>>, %arg10: memref<1x1x32xf32, #tpu.memory_space<vmem>>, %arg11: memref<1x1x32xf32, #tpu.memory_space<vmem>>, %arg12: memref<1x1x32xf32, #tpu.memory_space<vmem>>, %arg13: memref<1x32x64xf32, #tpu.memory_space<vmem>>, %arg14: memref<1x1x64xf32, #tpu.memory_space<vmem>>, %arg15: memref<1x64x32xf32, #tpu.memory_space<vmem>>, %arg16: memref<1x1x32xf32, #tpu.memory_space<vmem>>, %arg17: memref<1x1x32xf32, #tpu.memory_space<vmem>>, %arg18: memref<1x1x32xf32, #tpu.memory_space<vmem>>, %arg19: memref<8x32xf32, #tpu.memory_space<vmem>>) attributes {dimension_semantics = [#tpu.dimension_semantics<parallel>, #tpu.dimension_semantics<arbitrary>], iteration_bounds = array<i64: 2, 2>, scalar_prefetch = 0 : i64, scratch_operands = 0 : i64, tpu.core_type = #tpu.core_type<tc>, window_params = [{transform_indices = @transform_0, window_bounds = array<i64: 1, 1, 8>}, {transform_indices = @transform_1, window_bounds = array<i64: 1, 1, 8>}, {transform_indices = @transform_2, window_bounds = array<i64: 8, 32>}, {pipeline_mode = #tpu.pipeline_mode<synchronous>, transform_indices = @transform_3, window_bounds = array<i64: 1, 32>}, {pipeline_mode = #tpu.pipeline_mode<synchronous>, transform_indices = @transform_4, window_bounds = array<i64: 1, 32>}, {transform_indices = @transform_5, window_bounds = array<i64: 1, 32, 96>}, {transform_indices = @transform_6, window_bounds = array<i64: 1, 1, 96>}, {transform_indices = @transform_7, window_bounds = array<i64: 1, 32, 32>}, {transform_indices = @transform_8, window_bounds = array<i64: 1, 1, 32>}, {transform_indices = @transform_9, window_bounds = array<i64: 1, 1, 32>}, {transform_indices = @transform_10, window_bounds = array<i64: 1, 1, 32>}, {transform_indices = @transform_11, window_bounds = array<i64: 1, 32, 64>}, {transform_indices = @transform_12, window_bounds = array<i64: 1, 1, 64>}, {transform_indices = @transform_13, window_bounds = array<i64: 1, 64, 32>}, {transform_indices = @transform_14, window_bounds = array<i64: 1, 1, 32>}, {transform_indices = @transform_15, window_bounds = array<i64: 1, 1, 32>}, {transform_indices = @transform_16, window_bounds = array<i64: 1, 1, 32>}, {transform_indices = @transform_17, window_bounds = array<i64: 8, 32>}]} {
    %c0_i32 = arith.constant 0 : i32
    %0 = arith.cmpi eq, %arg1, %c0_i32 : i32
    %1 = arith.extui %0 : i1 to i32
    %c0_i32_0 = arith.constant 0 : i32
    %2 = arith.cmpi ne, %1, %c0_i32_0 : i32
    scf.if %2 {
      %c0_90 = arith.constant 0 : index
      %c0_91 = arith.constant 0 : index
      %234 = vector.load %arg4[%c0_90, %c0_91] : memref<8x32xf32, #tpu.memory_space<vmem>>, vector<8x32xf32>
      %c0_92 = arith.constant 0 : index
      %c0_93 = arith.constant 0 : index
      %235 = vector.load %arg5[%c0_92, %c0_93] : memref<1x32xf32, #tpu.memory_space<vmem>>, vector<1x32xf32>
      %c0_94 = arith.constant 0 : index
      %c0_95 = arith.constant 0 : index
      %236 = vector.load %arg6[%c0_94, %c0_95] : memref<1x32xf32, #tpu.memory_space<vmem>>, vector<1x32xf32>
      %cst_96 = arith.constant dense<0.000000e+00> : vector<8xf32>
      %237 = vector.multi_reduction <add>, %234, %cst_96 [1] : vector<8x32xf32> to vector<8xf32>
      %238 = vector.shape_cast %237 : vector<8xf32> to vector<8x1xf32>
      %cst_97 = arith.constant 3.200000e+01 : f32
      %239 = vector.broadcast %cst_97 : f32 to vector<8x1xf32>
      %240 = arith.divf %238, %239 : vector<8x1xf32>
      %241 = vector.broadcast %240 : vector<8x1xf32> to vector<8x32xf32>
      %242 = arith.subf %234, %241 : vector<8x32xf32>
      %243 = arith.mulf %242, %242 : vector<8x32xf32>
      %cst_98 = arith.constant dense<0.000000e+00> : vector<8xf32>
      %244 = vector.multi_reduction <add>, %243, %cst_98 [1] : vector<8x32xf32> to vector<8xf32>
      %245 = vector.shape_cast %244 : vector<8xf32> to vector<8x1xf32>
      %cst_99 = arith.constant 3.200000e+01 : f32
      %246 = vector.broadcast %cst_99 : f32 to vector<8x1xf32>
      %247 = arith.divf %245, %246 : vector<8x1xf32>
      %248 = vector.broadcast %240 : vector<8x1xf32> to vector<8x32xf32>
      %249 = arith.subf %234, %248 : vector<8x32xf32>
      %cst_100 = arith.constant 9.99999996E-13 : f32
      %250 = vector.broadcast %cst_100 : f32 to vector<8x1xf32>
      %251 = arith.addf %247, %250 : vector<8x1xf32>
      %252 = math.rsqrt %251 : vector<8x1xf32>
      %253 = vector.broadcast %252 : vector<8x1xf32> to vector<8x32xf32>
      %254 = arith.mulf %249, %253 : vector<8x32xf32>
      %255 = vector.broadcast %235 : vector<1x32xf32> to vector<8x32xf32>
      %256 = arith.mulf %254, %255 : vector<8x32xf32>
      %257 = vector.broadcast %236 : vector<1x32xf32> to vector<8x32xf32>
      %258 = arith.addf %256, %257 : vector<8x32xf32>
      %c0_101 = arith.constant 0 : index
      %c0_102 = arith.constant 0 : index
      %259 = vector.load %arg19[%c0_101, %c0_102] : memref<8x32xf32, #tpu.memory_space<vmem>>, vector<8x32xf32>
      tpu.vector_store %arg19[%c0_101, %c0_102], %258 {strides = array<i32>} : memref<8x32xf32, #tpu.memory_space<vmem>>, vector<8x32xf32>,
    } else {
    }
    %c0 = arith.constant 0 : index
    %c0_1 = arith.constant 0 : index
    %3 = vector.load %arg19[%c0, %c0_1] : memref<8x32xf32, #tpu.memory_space<vmem>>, vector<8x32xf32>
    %c0_2 = arith.constant 0 : index
    %c0_3 = arith.constant 0 : index
    %c0_4 = arith.constant 0 : index
    %4 = vector.load %arg7[%c0_2, %c0_3, %c0_4] : memref<1x32x96xf32, #tpu.memory_space<vmem>>, vector<1x32x96xf32>
    %5 = vector.shape_cast %4 : vector<1x32x96xf32> to vector<32x96xf32>
    %6 = arith.truncf %3 : vector<8x32xf32> to vector<8x32xbf16>
    %7 = arith.truncf %5 : vector<32x96xf32> to vector<32x96xbf16>
    %cst = arith.constant dense<0.000000e+00> : vector<8x96xf32>
    %8 = tpu.matmul %6, %7, %cst {dimension_numbers = #tpu.dot_dimension_numbers<[1], [0], [0], [1], [0, 0, 1, 1], [], []>} : vector<8x32xbf16>, vector<32x96xbf16>, vector<8x96xf32> -> vector<8x96xf32>
    %c0_5 = arith.constant 0 : index
    %c0_6 = arith.constant 0 : index
    %c0_7 = arith.constant 0 : index
    %9 = vector.load %arg8[%c0_5, %c0_6, %c0_7] : memref<1x1x96xf32, #tpu.memory_space<vmem>>, vector<1x1x96xf32>
    %10 = vector.shape_cast %9 : vector<1x1x96xf32> to vector<1x96xf32>
    %11 = vector.broadcast %10 : vector<1x96xf32> to vector<8x96xf32>
    %12 = arith.addf %8, %11 : vector<8x96xf32>
    %c0_8 = arith.constant 0 : index
    %c0_9 = arith.constant 0 : index
    %c0_10 = arith.constant 0 : index
    %13 = vector.load %arg2[%c0_8, %c0_9, %c0_10] : memref<1x1x8xi32, #tpu.memory_space<vmem>>, vector<1x1x8xi32>
    %14 = vector.shape_cast %13 : vector<1x1x8xi32> to vector<1x8xi32>
    %c0_i32_11 = arith.constant 0 : i32
    %15 = vector.broadcast %c0_i32_11 : i32 to vector<1x8xi32>
    %16 = arith.cmpi ne, %14, %15 : vector<1x8xi32>
    %17 = vector.shape_cast %16 : vector<1x8xi1> to vector<1x8xi1>
    %18 = vector.broadcast %17 : vector<1x8xi1> to vector<8x8xi1>
    %19 = tpu.iota {dimensions = array<i32: 0>} : vector<8x8xi32>
    %20 = tpu.iota {dimensions = array<i32: 1>} : vector<8x8xi32>
    %21 = arith.cmpi sgt, %20, %19 : vector<8x8xi32>
    %c0_12 = arith.constant 0 : index
    %c0_13 = arith.constant 0 : index
    %c0_14 = arith.constant 0 : index
    %22 = vector.load %arg3[%c0_12, %c0_13, %c0_14] : memref<1x1x8xi32, #tpu.memory_space<vmem>>, vector<1x1x8xi32>
    %23 = vector.shape_cast %22 : vector<1x1x8xi32> to vector<1x8xi32>
    %c1_i32 = arith.constant 1 : i32
    %24 = vector.broadcast %c1_i32 : i32 to vector<1x8xi32>
    %25 = arith.cmpi eq, %23, %24 : vector<1x8xi32>
    %26 = vector.shape_cast %25 : vector<1x8xi1> to vector<1x8xi1>
    %27 = vector.broadcast %26 : vector<1x8xi1> to vector<8x8xi1>
    %28 = arith.andi %21, %27 : vector<8x8xi1>
    %29 = arith.ori %28, %18 : vector<8x8xi1>
    %cst_15 = arith.constant -1.000000e+04 : f32
    %cst_16 = arith.constant 0.000000e+00 : f32
    %30 = vector.broadcast %cst_15 : f32 to vector<8x8xf32>
    %31 = vector.broadcast %cst_16 : f32 to vector<8x8xf32>
    %32 = arith.select %29, %30, %31 : vector<8x8xi1>, vector<8x8xf32>
    %c0_17 = arith.constant 0 : index
    %c0_18 = arith.constant 0 : index
    %c0_19 = arith.constant 0 : index
    %33 = vector.load %arg9[%c0_17, %c0_18, %c0_19] : memref<1x32x32xf32, #tpu.memory_space<vmem>>, vector<1x32x32xf32>
    %34 = vector.shape_cast %33 : vector<1x32x32xf32> to vector<32x32xf32>
    %cst_20 = arith.constant 0.000000e+00 : f32
    %35 = vector.broadcast %cst_20 : f32 to vector<8x32xf32>
    %36 = vector.extract_strided_slice %12 {offsets = [0, 0], sizes = [8, 8], strides = [1, 1]} : vector<8x96xf32> to vector<8x8xf32>
    %cst_21 = arith.constant 0.353553385 : f32
    %37 = vector.broadcast %cst_21 : f32 to vector<8x8xf32>
    %38 = arith.mulf %36, %37 : vector<8x8xf32>
    %39 = vector.extract_strided_slice %12 {offsets = [0, 32], sizes = [8, 8], strides = [1, 1]} : vector<8x96xf32> to vector<8x8xf32>
    %40 = vector.extract_strided_slice %12 {offsets = [0, 64], sizes = [8, 8], strides = [1, 1]} : vector<8x96xf32> to vector<8x8xf32>
    %41 = arith.truncf %38 : vector<8x8xf32> to vector<8x8xbf16>
    %42 = arith.truncf %39 : vector<8x8xf32> to vector<8x8xbf16>
    %cst_22 = arith.constant dense<0.000000e+00> : vector<8x8xf32>
    %43 = tpu.matmul %41, %42, %cst_22 {dimension_numbers = #tpu.dot_dimension_numbers<[1], [1], [0], [0], [0, 0, 1, 0], [], []>} : vector<8x8xbf16>, vector<8x8xbf16>, vector<8x8xf32> -> vector<8x8xf32>
    %44 = arith.addf %43, %32 : vector<8x8xf32>
    %cst_23 = arith.constant dense<0xFF800000> : vector<8xf32>
    %45 = vector.multi_reduction <maximumf>, %44, %cst_23 [1] : vector<8x8xf32> to vector<8xf32>
    %46 = vector.shape_cast %45 : vector<8xf32> to vector<8x1xf32>
    %47 = vector.broadcast %46 : vector<8x1xf32> to vector<8x8xf32>
    %48 = arith.subf %44, %47 : vector<8x8xf32>
    %49 = math.exp %48 : vector<8x8xf32>
    %cst_24 = arith.constant dense<0.000000e+00> : vector<8xf32>
    %50 = vector.multi_reduction <add>, %49, %cst_24 [1] : vector<8x8xf32> to vector<8xf32>
    %51 = vector.shape_cast %50 : vector<8xf32> to vector<8x1xf32>
    %52 = tpu.reciprocal %51 {approx = true} : vector<8x1xf32> -> vector<8x1xf32>
    %53 = vector.broadcast %52 : vector<8x1xf32> to vector<8x8xf32>
    %54 = arith.mulf %49, %53 : vector<8x8xf32>
    %55 = arith.truncf %54 : vector<8x8xf32> to vector<8x8xbf16>
    %56 = arith.truncf %40 : vector<8x8xf32> to vector<8x8xbf16>
    %cst_25 = arith.constant dense<0.000000e+00> : vector<8x8xf32>
    %57 = tpu.matmul %55, %56, %cst_25 {dimension_numbers = #tpu.dot_dimension_numbers<[1], [0], [0], [1], [0, 0, 1, 1], [], []>} : vector<8x8xbf16>, vector<8x8xbf16>, vector<8x8xf32> -> vector<8x8xf32>
    %58 = vector.extract_strided_slice %34 {offsets = [0, 0], sizes = [8, 32], strides = [1, 1]} : vector<32x32xf32> to vector<8x32xf32>
    %59 = arith.truncf %57 : vector<8x8xf32> to vector<8x8xbf16>
    %60 = arith.truncf %58 : vector<8x32xf32> to vector<8x32xbf16>
    %cst_26 = arith.constant dense<0.000000e+00> : vector<8x32xf32>
    %61 = tpu.matmul %59, %60, %cst_26 {dimension_numbers = #tpu.dot_dimension_numbers<[1], [0], [0], [1], [0, 0, 1, 1], [], []>} : vector<8x8xbf16>, vector<8x32xbf16>, vector<8x32xf32> -> vector<8x32xf32>
    %62 = arith.addf %35, %61 : vector<8x32xf32>
    %63 = vector.extract_strided_slice %12 {offsets = [0, 8], sizes = [8, 8], strides = [1, 1]} : vector<8x96xf32> to vector<8x8xf32>
    %cst_27 = arith.constant 0.353553385 : f32
    %64 = vector.broadcast %cst_27 : f32 to vector<8x8xf32>
    %65 = arith.mulf %63, %64 : vector<8x8xf32>
    %66 = vector.extract_strided_slice %12 {offsets = [0, 40], sizes = [8, 8], strides = [1, 1]} : vector<8x96xf32> to vector<8x8xf32>
    %67 = vector.extract_strided_slice %12 {offsets = [0, 72], sizes = [8, 8], strides = [1, 1]} : vector<8x96xf32> to vector<8x8xf32>
    %68 = arith.truncf %65 : vector<8x8xf32> to vector<8x8xbf16>
    %69 = arith.truncf %66 : vector<8x8xf32> to vector<8x8xbf16>
    %cst_28 = arith.constant dense<0.000000e+00> : vector<8x8xf32>
    %70 = tpu.matmul %68, %69, %cst_28 {dimension_numbers = #tpu.dot_dimension_numbers<[1], [1], [0], [0], [0, 0, 1, 0], [], []>} : vector<8x8xbf16>, vector<8x8xbf16>, vector<8x8xf32> -> vector<8x8xf32>
    %71 = arith.addf %70, %32 : vector<8x8xf32>
    %cst_29 = arith.constant dense<0xFF800000> : vector<8xf32>
    %72 = vector.multi_reduction <maximumf>, %71, %cst_29 [1] : vector<8x8xf32> to vector<8xf32>
    %73 = vector.shape_cast %72 : vector<8xf32> to vector<8x1xf32>
    %74 = vector.broadcast %73 : vector<8x1xf32> to vector<8x8xf32>
    %75 = arith.subf %71, %74 : vector<8x8xf32>
    %76 = math.exp %75 : vector<8x8xf32>
    %cst_30 = arith.constant dense<0.000000e+00> : vector<8xf32>
    %77 = vector.multi_reduction <add>, %76, %cst_30 [1] : vector<8x8xf32> to vector<8xf32>
    %78 = vector.shape_cast %77 : vector<8xf32> to vector<8x1xf32>
    %79 = tpu.reciprocal %78 {approx = true} : vector<8x1xf32> -> vector<8x1xf32>
    %80 = vector.broadcast %79 : vector<8x1xf32> to vector<8x8xf32>
    %81 = arith.mulf %76, %80 : vector<8x8xf32>
    %82 = arith.truncf %81 : vector<8x8xf32> to vector<8x8xbf16>
    %83 = arith.truncf %67 : vector<8x8xf32> to vector<8x8xbf16>
    %cst_31 = arith.constant dense<0.000000e+00> : vector<8x8xf32>
    %84 = tpu.matmul %82, %83, %cst_31 {dimension_numbers = #tpu.dot_dimension_numbers<[1], [0], [0], [1], [0, 0, 1, 1], [], []>} : vector<8x8xbf16>, vector<8x8xbf16>, vector<8x8xf32> -> vector<8x8xf32>
    %85 = vector.extract_strided_slice %34 {offsets = [8, 0], sizes = [8, 32], strides = [1, 1]} : vector<32x32xf32> to vector<8x32xf32>
    %86 = arith.truncf %84 : vector<8x8xf32> to vector<8x8xbf16>
    %87 = arith.truncf %85 : vector<8x32xf32> to vector<8x32xbf16>
    %cst_32 = arith.constant dense<0.000000e+00> : vector<8x32xf32>
    %88 = tpu.matmul %86, %87, %cst_32 {dimension_numbers = #tpu.dot_dimension_numbers<[1], [0], [0], [1], [0, 0, 1, 1], [], []>} : vector<8x8xbf16>, vector<8x32xbf16>, vector<8x32xf32> -> vector<8x32xf32>
    %89 = arith.addf %62, %88 : vector<8x32xf32>
    %90 = vector.extract_strided_slice %12 {offsets = [0, 16], sizes = [8, 8], strides = [1, 1]} : vector<8x96xf32> to vector<8x8xf32>
    %cst_33 = arith.constant 0.353553385 : f32
    %91 = vector.broadcast %cst_33 : f32 to vector<8x8xf32>
    %92 = arith.mulf %90, %91 : vector<8x8xf32>
    %93 = vector.extract_strided_slice %12 {offsets = [0, 48], sizes = [8, 8], strides = [1, 1]} : vector<8x96xf32> to vector<8x8xf32>
    %94 = vector.extract_strided_slice %12 {offsets = [0, 80], sizes = [8, 8], strides = [1, 1]} : vector<8x96xf32> to vector<8x8xf32>
    %95 = arith.truncf %92 : vector<8x8xf32> to vector<8x8xbf16>
    %96 = arith.truncf %93 : vector<8x8xf32> to vector<8x8xbf16>
    %cst_34 = arith.constant dense<0.000000e+00> : vector<8x8xf32>
    %97 = tpu.matmul %95, %96, %cst_34 {dimension_numbers = #tpu.dot_dimension_numbers<[1], [1], [0], [0], [0, 0, 1, 0], [], []>} : vector<8x8xbf16>, vector<8x8xbf16>, vector<8x8xf32> -> vector<8x8xf32>
    %98 = arith.addf %97, %32 : vector<8x8xf32>
    %cst_35 = arith.constant dense<0xFF800000> : vector<8xf32>
    %99 = vector.multi_reduction <maximumf>, %98, %cst_35 [1] : vector<8x8xf32> to vector<8xf32>
    %100 = vector.shape_cast %99 : vector<8xf32> to vector<8x1xf32>
    %101 = vector.broadcast %100 : vector<8x1xf32> to vector<8x8xf32>
    %102 = arith.subf %98, %101 : vector<8x8xf32>
    %103 = math.exp %102 : vector<8x8xf32>
    %cst_36 = arith.constant dense<0.000000e+00> : vector<8xf32>
    %104 = vector.multi_reduction <add>, %103, %cst_36 [1] : vector<8x8xf32> to vector<8xf32>
    %105 = vector.shape_cast %104 : vector<8xf32> to vector<8x1xf32>
    %106 = tpu.reciprocal %105 {approx = true} : vector<8x1xf32> -> vector<8x1xf32>
    %107 = vector.broadcast %106 : vector<8x1xf32> to vector<8x8xf32>
    %108 = arith.mulf %103, %107 : vector<8x8xf32>
    %109 = arith.truncf %108 : vector<8x8xf32> to vector<8x8xbf16>
    %110 = arith.truncf %94 : vector<8x8xf32> to vector<8x8xbf16>
    %cst_37 = arith.constant dense<0.000000e+00> : vector<8x8xf32>
    %111 = tpu.matmul %109, %110, %cst_37 {dimension_numbers = #tpu.dot_dimension_numbers<[1], [0], [0], [1], [0, 0, 1, 1], [], []>} : vector<8x8xbf16>, vector<8x8xbf16>, vector<8x8xf32> -> vector<8x8xf32>
    %112 = vector.extract_strided_slice %34 {offsets = [16, 0], sizes = [8, 32], strides = [1, 1]} : vector<32x32xf32> to vector<8x32xf32>
    %113 = arith.truncf %111 : vector<8x8xf32> to vector<8x8xbf16>
    %114 = arith.truncf %112 : vector<8x32xf32> to vector<8x32xbf16>
    %cst_38 = arith.constant dense<0.000000e+00> : vector<8x32xf32>
    %115 = tpu.matmul %113, %114, %cst_38 {dimension_numbers = #tpu.dot_dimension_numbers<[1], [0], [0], [1], [0, 0, 1, 1], [], []>} : vector<8x8xbf16>, vector<8x32xbf16>, vector<8x32xf32> -> vector<8x32xf32>
    %116 = arith.addf %89, %115 : vector<8x32xf32>
    %117 = vector.extract_strided_slice %12 {offsets = [0, 24], sizes = [8, 8], strides = [1, 1]} : vector<8x96xf32> to vector<8x8xf32>
    %cst_39 = arith.constant 0.353553385 : f32
    %118 = vector.broadcast %cst_39 : f32 to vector<8x8xf32>
    %119 = arith.mulf %117, %118 : vector<8x8xf32>
    %120 = vector.extract_strided_slice %12 {offsets = [0, 56], sizes = [8, 8], strides = [1, 1]} : vector<8x96xf32> to vector<8x8xf32>
    %121 = vector.extract_strided_slice %12 {offsets = [0, 88], sizes = [8, 8], strides = [1, 1]} : vector<8x96xf32> to vector<8x8xf32>
    %122 = arith.truncf %119 : vector<8x8xf32> to vector<8x8xbf16>
    %123 = arith.truncf %120 : vector<8x8xf32> to vector<8x8xbf16>
    %cst_40 = arith.constant dense<0.000000e+00> : vector<8x8xf32>
    %124 = tpu.matmul %122, %123, %cst_40 {dimension_numbers = #tpu.dot_dimension_numbers<[1], [1], [0], [0], [0, 0, 1, 0], [], []>} : vector<8x8xbf16>, vector<8x8xbf16>, vector<8x8xf32> -> vector<8x8xf32>
    %125 = arith.addf %124, %32 : vector<8x8xf32>
    %cst_41 = arith.constant dense<0xFF800000> : vector<8xf32>
    %126 = vector.multi_reduction <maximumf>, %125, %cst_41 [1] : vector<8x8xf32> to vector<8xf32>
    %127 = vector.shape_cast %126 : vector<8xf32> to vector<8x1xf32>
    %128 = vector.broadcast %127 : vector<8x1xf32> to vector<8x8xf32>
    %129 = arith.subf %125, %128 : vector<8x8xf32>
    %130 = math.exp %129 : vector<8x8xf32>
    %cst_42 = arith.constant dense<0.000000e+00> : vector<8xf32>
    %131 = vector.multi_reduction <add>, %130, %cst_42 [1] : vector<8x8xf32> to vector<8xf32>
    %132 = vector.shape_cast %131 : vector<8xf32> to vector<8x1xf32>
    %133 = tpu.reciprocal %132 {approx = true} : vector<8x1xf32> -> vector<8x1xf32>
    %134 = vector.broadcast %133 : vector<8x1xf32> to vector<8x8xf32>
    %135 = arith.mulf %130, %134 : vector<8x8xf32>
    %136 = arith.truncf %135 : vector<8x8xf32> to vector<8x8xbf16>
    %137 = arith.truncf %121 : vector<8x8xf32> to vector<8x8xbf16>
    %cst_43 = arith.constant dense<0.000000e+00> : vector<8x8xf32>
    %138 = tpu.matmul %136, %137, %cst_43 {dimension_numbers = #tpu.dot_dimension_numbers<[1], [0], [0], [1], [0, 0, 1, 1], [], []>} : vector<8x8xbf16>, vector<8x8xbf16>, vector<8x8xf32> -> vector<8x8xf32>
    %139 = vector.extract_strided_slice %34 {offsets = [24, 0], sizes = [8, 32], strides = [1, 1]} : vector<32x32xf32> to vector<8x32xf32>
    %140 = arith.truncf %138 : vector<8x8xf32> to vector<8x8xbf16>
    %141 = arith.truncf %139 : vector<8x32xf32> to vector<8x32xbf16>
    %cst_44 = arith.constant dense<0.000000e+00> : vector<8x32xf32>
    %142 = tpu.matmul %140, %141, %cst_44 {dimension_numbers = #tpu.dot_dimension_numbers<[1], [0], [0], [1], [0, 0, 1, 1], [], []>} : vector<8x8xbf16>, vector<8x32xbf16>, vector<8x32xf32> -> vector<8x32xf32>
    %143 = arith.addf %116, %142 : vector<8x32xf32>
    %c0_45 = arith.constant 0 : index
    %c0_46 = arith.constant 0 : index
    %c0_47 = arith.constant 0 : index
    %144 = vector.load %arg10[%c0_45, %c0_46, %c0_47] : memref<1x1x32xf32, #tpu.memory_space<vmem>>, vector<1x1x32xf32>
    %145 = vector.shape_cast %144 : vector<1x1x32xf32> to vector<1x32xf32>
    %146 = vector.broadcast %145 : vector<1x32xf32> to vector<8x32xf32>
    %147 = arith.addf %143, %146 : vector<8x32xf32>
    %148 = arith.addf %147, %3 : vector<8x32xf32>
    %c0_48 = arith.constant 0 : index
    %c0_49 = arith.constant 0 : index
    %c0_50 = arith.constant 0 : index
    %149 = vector.load %arg11[%c0_48, %c0_49, %c0_50] : memref<1x1x32xf32, #tpu.memory_space<vmem>>, vector<1x1x32xf32>
    %150 = vector.shape_cast %149 : vector<1x1x32xf32> to vector<1x32xf32>
    %c0_51 = arith.constant 0 : index
    %c0_52 = arith.constant 0 : index
    %c0_53 = arith.constant 0 : index
    %151 = vector.load %arg12[%c0_51, %c0_52, %c0_53] : memref<1x1x32xf32, #tpu.memory_space<vmem>>, vector<1x1x32xf32>
    %152 = vector.shape_cast %151 : vector<1x1x32xf32> to vector<1x32xf32>
    %cst_54 = arith.constant dense<0.000000e+00> : vector<8xf32>
    %153 = vector.multi_reduction <add>, %148, %cst_54 [1] : vector<8x32xf32> to vector<8xf32>
    %154 = vector.shape_cast %153 : vector<8xf32> to vector<8x1xf32>
    %cst_55 = arith.constant 3.200000e+01 : f32
    %155 = vector.broadcast %cst_55 : f32 to vector<8x1xf32>
    %156 = arith.divf %154, %155 : vector<8x1xf32>
    %157 = vector.broadcast %156 : vector<8x1xf32> to vector<8x32xf32>
    %158 = arith.subf %148, %157 : vector<8x32xf32>
    %159 = arith.mulf %158, %158 : vector<8x32xf32>
    %cst_56 = arith.constant dense<0.000000e+00> : vector<8xf32>
    %160 = vector.multi_reduction <add>, %159, %cst_56 [1] : vector<8x32xf32> to vector<8xf32>
    %161 = vector.shape_cast %160 : vector<8xf32> to vector<8x1xf32>
    %cst_57 = arith.constant 3.200000e+01 : f32
    %162 = vector.broadcast %cst_57 : f32 to vector<8x1xf32>
    %163 = arith.divf %161, %162 : vector<8x1xf32>
    %164 = vector.broadcast %156 : vector<8x1xf32> to vector<8x32xf32>
    %165 = arith.subf %148, %164 : vector<8x32xf32>
    %cst_58 = arith.constant 9.99999996E-13 : f32
    %166 = vector.broadcast %cst_58 : f32 to vector<8x1xf32>
    %167 = arith.addf %163, %166 : vector<8x1xf32>
    %168 = math.rsqrt %167 : vector<8x1xf32>
    %169 = vector.broadcast %168 : vector<8x1xf32> to vector<8x32xf32>
    %170 = arith.mulf %165, %169 : vector<8x32xf32>
    %171 = vector.broadcast %150 : vector<1x32xf32> to vector<8x32xf32>
    %172 = arith.mulf %170, %171 : vector<8x32xf32>
    %173 = vector.broadcast %152 : vector<1x32xf32> to vector<8x32xf32>
    %174 = arith.addf %172, %173 : vector<8x32xf32>
    %c0_59 = arith.constant 0 : index
    %c0_60 = arith.constant 0 : index
    %c0_61 = arith.constant 0 : index
    %175 = vector.load %arg13[%c0_59, %c0_60, %c0_61] : memref<1x32x64xf32, #tpu.memory_space<vmem>>, vector<1x32x64xf32>
    %176 = vector.shape_cast %175 : vector<1x32x64xf32> to vector<32x64xf32>
    %177 = arith.truncf %174 : vector<8x32xf32> to vector<8x32xbf16>
    %178 = arith.truncf %176 : vector<32x64xf32> to vector<32x64xbf16>
    %cst_62 = arith.constant dense<0.000000e+00> : vector<8x64xf32>
    %179 = tpu.matmul %177, %178, %cst_62 {dimension_numbers = #tpu.dot_dimension_numbers<[1], [0], [0], [1], [0, 0, 1, 1], [], []>} : vector<8x32xbf16>, vector<32x64xbf16>, vector<8x64xf32> -> vector<8x64xf32>
    %c0_63 = arith.constant 0 : index
    %c0_64 = arith.constant 0 : index
    %c0_65 = arith.constant 0 : index
    %180 = vector.load %arg14[%c0_63, %c0_64, %c0_65] : memref<1x1x64xf32, #tpu.memory_space<vmem>>, vector<1x1x64xf32>
    %181 = vector.shape_cast %180 : vector<1x1x64xf32> to vector<1x64xf32>
    %182 = vector.broadcast %181 : vector<1x64xf32> to vector<8x64xf32>
    %183 = arith.addf %179, %182 : vector<8x64xf32>
    %cst_66 = arith.constant 5.000000e-01 : f32
    %184 = vector.broadcast %cst_66 : f32 to vector<8x64xf32>
    %185 = arith.mulf %184, %183 : vector<8x64xf32>
    %cst_67 = arith.constant 4.471500e-02 : f32
    %186 = vector.broadcast %cst_67 : f32 to vector<8x64xf32>
    %187 = arith.mulf %186, %183 : vector<8x64xf32>
    %188 = arith.mulf %187, %183 : vector<8x64xf32>
    %189 = arith.mulf %188, %183 : vector<8x64xf32>
    %190 = arith.addf %183, %189 : vector<8x64xf32>
    %cst_68 = arith.constant 0.797884583 : f32
    %191 = vector.broadcast %cst_68 : f32 to vector<8x64xf32>
    %192 = arith.mulf %191, %190 : vector<8x64xf32>
    %193 = math.tanh %192 : vector<8x64xf32>
    %cst_69 = arith.constant 1.000000e+00 : f32
    %194 = vector.broadcast %cst_69 : f32 to vector<8x64xf32>
    %195 = arith.addf %194, %193 : vector<8x64xf32>
    %196 = arith.mulf %185, %195 : vector<8x64xf32>
    %c0_70 = arith.constant 0 : index
    %c0_71 = arith.constant 0 : index
    %c0_72 = arith.constant 0 : index
    %197 = vector.load %arg15[%c0_70, %c0_71, %c0_72] : memref<1x64x32xf32, #tpu.memory_space<vmem>>, vector<1x64x32xf32>
    %198 = vector.shape_cast %197 : vector<1x64x32xf32> to vector<64x32xf32>
    %199 = arith.truncf %196 : vector<8x64xf32> to vector<8x64xbf16>
    %200 = arith.truncf %198 : vector<64x32xf32> to vector<64x32xbf16>
    %cst_73 = arith.constant dense<0.000000e+00> : vector<8x32xf32>
    %201 = tpu.matmul %199, %200, %cst_73 {dimension_numbers = #tpu.dot_dimension_numbers<[1], [0], [0], [1], [0, 0, 1, 1], [], []>} : vector<8x64xbf16>, vector<64x32xbf16>, vector<8x32xf32> -> vector<8x32xf32>
    %c0_74 = arith.constant 0 : index
    %c0_75 = arith.constant 0 : index
    %c0_76 = arith.constant 0 : index
    %202 = vector.load %arg16[%c0_74, %c0_75, %c0_76] : memref<1x1x32xf32, #tpu.memory_space<vmem>>, vector<1x1x32xf32>
    %203 = vector.shape_cast %202 : vector<1x1x32xf32> to vector<1x32xf32>
    %204 = vector.broadcast %203 : vector<1x32xf32> to vector<8x32xf32>
    %205 = arith.addf %201, %204 : vector<8x32xf32>
    %206 = arith.addf %205, %174 : vector<8x32xf32>
    %c0_77 = arith.constant 0 : index
    %c0_78 = arith.constant 0 : index
    %c0_79 = arith.constant 0 : index
    %207 = vector.load %arg17[%c0_77, %c0_78, %c0_79] : memref<1x1x32xf32, #tpu.memory_space<vmem>>, vector<1x1x32xf32>
    %208 = vector.shape_cast %207 : vector<1x1x32xf32> to vector<1x32xf32>
    %c0_80 = arith.constant 0 : index
    %c0_81 = arith.constant 0 : index
    %c0_82 = arith.constant 0 : index
    %209 = vector.load %arg18[%c0_80, %c0_81, %c0_82] : memref<1x1x32xf32, #tpu.memory_space<vmem>>, vector<1x1x32xf32>
    %210 = vector.shape_cast %209 : vector<1x1x32xf32> to vector<1x32xf32>
    %cst_83 = arith.constant dense<0.000000e+00> : vector<8xf32>
    %211 = vector.multi_reduction <add>, %206, %cst_83 [1] : vector<8x32xf32> to vector<8xf32>
    %212 = vector.shape_cast %211 : vector<8xf32> to vector<8x1xf32>
    %cst_84 = arith.constant 3.200000e+01 : f32
    %213 = vector.broadcast %cst_84 : f32 to vector<8x1xf32>
    %214 = arith.divf %212, %213 : vector<8x1xf32>
    %215 = vector.broadcast %214 : vector<8x1xf32> to vector<8x32xf32>
    %216 = arith.subf %206, %215 : vector<8x32xf32>
    %217 = arith.mulf %216, %216 : vector<8x32xf32>
    %cst_85 = arith.constant dense<0.000000e+00> : vector<8xf32>
    %218 = vector.multi_reduction <add>, %217, %cst_85 [1] : vector<8x32xf32> to vector<8xf32>
    %219 = vector.shape_cast %218 : vector<8xf32> to vector<8x1xf32>
    %cst_86 = arith.constant 3.200000e+01 : f32
    %220 = vector.broadcast %cst_86 : f32 to vector<8x1xf32>
    %221 = arith.divf %219, %220 : vector<8x1xf32>
    %222 = vector.broadcast %214 : vector<8x1xf32> to vector<8x32xf32>
    %223 = arith.subf %206, %222 : vector<8x32xf32>
    %cst_87 = arith.constant 9.99999996E-13 : f32
    %224 = vector.broadcast %cst_87 : f32 to vector<8x1xf32>
    %225 = arith.addf %221, %224 : vector<8x1xf32>
    %226 = math.rsqrt %225 : vector<8x1xf32>
    %227 = vector.broadcast %226 : vector<8x1xf32> to vector<8x32xf32>
    %228 = arith.mulf %223, %227 : vector<8x32xf32>
    %229 = vector.broadcast %208 : vector<1x32xf32> to vector<8x32xf32>
    %230 = arith.mulf %228, %229 : vector<8x32xf32>
    %231 = vector.broadcast %210 : vector<1x32xf32> to vector<8x32xf32>
    %232 = arith.addf %230, %231 : vector<8x32xf32>
    %c0_88 = arith.constant 0 : index
    %c0_89 = arith.constant 0 : index
    %233 = vector.load %arg19[%c0_88, %c0_89] : memref<8x32xf32, #tpu.memory_space<vmem>>, vector<8x32xf32>
    tpu.vector_store %arg19[%c0_88, %c0_89], %232 {strides = array<i32>} : memref<8x32xf32, #tpu.memory_space<vmem>>, vector<8x32xf32>,
    return
  }
  func.func @transform_0(%arg0: i32, %arg1: i32) -> (i32, i32, i32) {
    %c0_i32 = arith.constant 0 : i32
    %c0_i32_0 = arith.constant 0 : i32
    %c0_i32_1 = arith.constant 0 : i32
    return %arg0, %c0_i32, %c0_i32_0 : i32, i32, i32
  }
  func.func @transform_1(%arg0: i32, %arg1: i32) -> (i32, i32, i32) {
    %c0_i32 = arith.constant 0 : i32
    %c0_i32_0 = arith.constant 0 : i32
    %c0_i32_1 = arith.constant 0 : i32
    return %arg0, %c0_i32, %c0_i32_0 : i32, i32, i32
  }
  func.func @transform_2(%arg0: i32, %arg1: i32) -> (i32, i32) {
    %c0_i32 = arith.constant 0 : i32
    %c0_i32_0 = arith.constant 0 : i32
    return %arg0, %c0_i32 : i32, i32
  }
  func.func @transform_3(%arg0: i32, %arg1: i32) -> (i32, i32) {
    %c0_i32 = arith.constant 0 : i32
    %c0_i32_0 = arith.constant 0 : i32
    %c0_i32_1 = arith.constant 0 : i32
    return %c0_i32, %c0_i32_0 : i32, i32
  }
  func.func @transform_4(%arg0: i32, %arg1: i32) -> (i32, i32) {
    %c0_i32 = arith.constant 0 : i32
    %c0_i32_0 = arith.constant 0 : i32
    %c0_i32_1 = arith.constant 0 : i32
    return %c0_i32, %c0_i32_0 : i32, i32
  }
  func.func @transform_5(%arg0: i32, %arg1: i32) -> (i32, i32, i32) {
    %c0_i32 = arith.constant 0 : i32
    %c0_i32_0 = arith.constant 0 : i32
    %c0_i32_1 = arith.constant 0 : i32
    return %arg1, %c0_i32, %c0_i32_0 : i32, i32, i32
  }
  func.func @transform_6(%arg0: i32, %arg1: i32) -> (i32, i32, i32) {
    %c0_i32 = arith.constant 0 : i32
    %c0_i32_0 = arith.constant 0 : i32
    %c0_i32_1 = arith.constant 0 : i32
    return %arg1, %c0_i32, %c0_i32_0 : i32, i32, i32
  }
  func.func @transform_7(%arg0: i32, %arg1: i32) -> (i32, i32, i32) {
    %c0_i32 = arith.constant 0 : i32
    %c0_i32_0 = arith.constant 0 : i32
    %c0_i32_1 = arith.constant 0 : i32
    return %arg1, %c0_i32, %c0_i32_0 : i32, i32, i32
  }
  func.func @transform_8(%arg0: i32, %arg1: i32) -> (i32, i32, i32) {
    %c0_i32 = arith.constant 0 : i32
    %c0_i32_0 = arith.constant 0 : i32
    %c0_i32_1 = arith.constant 0 : i32
    return %arg1, %c0_i32, %c0_i32_0 : i32, i32, i32
  }
  func.func @transform_9(%arg0: i32, %arg1: i32) -> (i32, i32, i32) {
    %c0_i32 = arith.constant 0 : i32
    %c0_i32_0 = arith.constant 0 : i32
    %c0_i32_1 = arith.constant 0 : i32
    return %arg1, %c0_i32, %c0_i32_0 : i32, i32, i32
  }
  func.func @transform_10(%arg0: i32, %arg1: i32) -> (i32, i32, i32) {
    %c0_i32 = arith.constant 0 : i32
    %c0_i32_0 = arith.constant 0 : i32
    %c0_i32_1 = arith.constant 0 : i32
    return %arg1, %c0_i32, %c0_i32_0 : i32, i32, i32
  }
  func.func @transform_11(%arg0: i32, %arg1: i32) -> (i32, i32, i32) {
    %c0_i32 = arith.constant 0 : i32
    %c0_i32_0 = arith.constant 0 : i32
    %c0_i32_1 = arith.constant 0 : i32
    return %arg1, %c0_i32, %c0_i32_0 : i32, i32, i32
  }
  func.func @transform_12(%arg0: i32, %arg1: i32) -> (i32, i32, i32) {
    %c0_i32 = arith.constant 0 : i32
    %c0_i32_0 = arith.constant 0 : i32
    %c0_i32_1 = arith.constant 0 : i32
    return %arg1, %c0_i32, %c0_i32_0 : i32, i32, i32
  }
  func.func @transform_13(%arg0: i32, %arg1: i32) -> (i32, i32, i32) {
    %c0_i32 = arith.constant 0 : i32
    %c0_i32_0 = arith.constant 0 : i32
    %c0_i32_1 = arith.constant 0 : i32
    return %arg1, %c0_i32, %c0_i32_0 : i32, i32, i32
  }
  func.func @transform_14(%arg0: i32, %arg1: i32) -> (i32, i32, i32) {
    %c0_i32 = arith.constant 0 : i32
    %c0_i32_0 = arith.constant 0 : i32
    %c0_i32_1 = arith.constant 0 : i32
    return %arg1, %c0_i32, %c0_i32_0 : i32, i32, i32
  }
  func.func @transform_15(%arg0: i32, %arg1: i32) -> (i32, i32, i32) {
    %c0_i32 = arith.constant 0 : i32
    %c0_i32_0 = arith.constant 0 : i32
    %c0_i32_1 = arith.constant 0 : i32
    return %arg1, %c0_i32, %c0_i32_0 : i32, i32, i32
  }
  func.func @transform_16(%arg0: i32, %arg1: i32) -> (i32, i32, i32) {
    %c0_i32 = arith.constant 0 : i32
    %c0_i32_0 = arith.constant 0 : i32
    %c0_i32_1 = arith.constant 0 : i32
    return %arg1, %c0_i32, %c0_i32_0 : i32, i32, i32
  }
  func.func @transform_17(%arg0: i32, %arg1: i32) -> (i32, i32) {
    %c0_i32 = arith.constant 0 : i32
    %c0_i32_0 = arith.constant 0 : i32
    return %arg0, %c0_i32 : i32, i32
  }
}

</mosaic_0001>

<llo_original>
// kernel: _dense_forward.3
$region0: #{_dense_forward.3}
  #allocation0 [shape = 'u32[]', space=smem, size = 0x4, offset = 0x4, fixed_abs, tag = 'smem constant byte address 0x4 - core index']
  #allocation1 [shape = 'u32[144,128]{1,0:T(1,128)}', space=vmem, size = 0x12000, scoped, tag = 'internal scratch']
  %s0 = inlined_call_operand.vmem [shape: f32[16,32], index: 0, kind: input, shape index: {}]
  %s1 = inlined_call_operand.vmem [shape: f32[32,32], index: 1, kind: input, shape index: {}]
  %s2 = inlined_call_operand.vmem [shape: f32[1,32], index: 2, kind: input, shape index: {}]
  %s3 = inlined_call_operand.vmem [shape: f32[1,32], index: 3, kind: input, shape index: {}]
  %s4 = inlined_call_operand.vmem [shape: f32[1,32], index: 4, kind: input, shape index: {}]
  %s5 = inlined_call_operand.vmem [shape: f32[64,32], index: 5, kind: input, shape index: {}]
  %s6 = inlined_call_operand.vmem [shape: f32[1,64], index: 6, kind: input, shape index: {}]
  %s7 = inlined_call_operand.vmem [shape: f32[32,128], index: 7, kind: input, shape index: {}]
  %s8 = inlined_call_operand.vmem [shape: f32[1,128], index: 8, kind: input, shape index: {}]
  %s9 = inlined_call_operand.hbm [shape: f32[16,64], index: 9, kind: output, shape index: {0}]
  %s10 = inlined_call_operand.vmem [shape: f32[16,128], index: 10, kind: output, shape index: {1}]
  %11 = xla_tuple %s9, %s10
  %s12 = sld [smem:[#allocation0]]
  $region77: #{_dense_forward.3} parent=0
    _
  %s14 = ssub.s32 1, %s12
  %s15 = scalar_select 0, %s14, %s12
  $region1: #{_dense_forward.3} parent=0
    #allocation2 [shape = 'u8[8192]{0}', space=vmem, size = 0x2000, scoped, tag = 'output window, operand 0']
    #allocation3 [shape = 's32[2]{0}', space=sflag, size = 0x8, scoped, tag = 'scoped memory for _dense_forward.3']
    %16 = vsyncpa [#allocation3], 0
    %s17 = scalar_lea.sflag [#allocation3], 1
    %18 = vsyncpa %s17, 0
    loop: start=0, step=1, limit=4
    $region2: #{_dense_forward.3} parent=1 // loop_pre_header
      _
    $region3: #{_dense_forward.3} parent=1 // loop_header
      %s20 = sphi 0, %s24
      %p21 = scmp.ge.s32.totalorder %s20, 4
      %s30 = sphi 0, %s32
      %s33 = sphi 0, %s30
      %s34 = sphi 0, %s33
      %s50 = sphi 0, %s34
      %s54 = sphi 0, %s54
      %s56 = sphi 0, %s54
      %s57 = sphi 0, %s56
      %s71 = sphi 0, %s57
      %s75 = sphi 0, %s75
      %s77 = sphi 0, %s75
      %s78 = sphi 0, %s77
      %s92 = sphi 0, %s78
      %s96 = sphi 0, %s96
      %s98 = sphi 0, %s96
      %s99 = sphi 0, %s98
      %s113 = sphi 0, %s99
      %s117 = sphi 0, %s117
      %s119 = sphi 0, %s117
      %s120 = sphi 0, %s119
      %s134 = sphi 0, %s120
      %s138 = sphi 0, %s138
      %s140 = sphi 0, %s138
      %s141 = sphi 0, %s140
      %s155 = sphi 0, %s141
      %s159 = sphi 0, %s159
      %s161 = sphi 0, %s159
      %s162 = sphi 0, %s161
      %s176 = sphi 0, %s162
      %s180 = sphi 0, %s180
      %s182 = sphi 0, %s180
      %s183 = sphi 0, %s182
      %s197 = sphi 0, %s183
      %s201 = sphi 0, %s201
      %s203 = sphi 0, %s201
      %s204 = sphi 0, %s203
      %s218 = sphi 0, %s204
      %s224 = sphi 0, %s226
      %s227 = sphi 0, %s224
      %s228 = sphi 0, %s227
      %s244 = sphi 0, %s228
      %s250 = sphi 0, %s252
      %s253 = sphi 0, %s250
      %s254 = sphi 0, %s253
      %s270 = sphi 0, %s254
    $region4: #{_dense_forward.3} parent=1 // loop_header_branch
      %23 = sbr.rel (%p21) target = $region8
    $region5: #{_dense_forward.3} parent=1 // loop_body
      %s25 = ssub.s32 %s20, 1
      %s26 = ssub.s32 %s20, 2
      %s27 = sadd.s32 %s20, 1
      %s28 = ssub.s32 %s20, %s27
      %p29 = scmp.eq.s32.totalorder %s28, 0
      %s31 = sadd.s32 %s30, 1
      %s32 = scalar_select %p29, %s30, %s31
      %p35 = pneg %p29
      %p36 = scmp.eq.s32.totalorder %s20, 1
      %p37 = por %p35, %p36
      %p38 = scmp.ne.s32.totalorder %s30, %s33
      %p39 = scmp.eq.s32.totalorder %s20, 0
      %p40 = por %p38, %p39
      %p41 = scmp.ne.s32.totalorder %s30, %s33
      %p42 = scmp.eq.s32.totalorder %s25, 1
      %p43 = por %p41, %p42
      %p44 = scmp.ne.s32.totalorder %s33, %s34
      %p45 = scmp.eq.s32.totalorder %s25, 0
      %p46 = por %p44, %p45
      %p47 = scmp.ne.s32.totalorder %s33, %s34
      %p48 = scmp.eq.s32.totalorder %s26, 1
      %p49 = por %p47, %p48
      %p51 = scmp.ne.s32.totalorder %s34, %s50
      %p52 = scmp.eq.s32.totalorder %s26, 0
      %p53 = por %p51, %p52
      %s55 = sadd.s32 %s54, 1
      %p58 = scmp.eq.s32.totalorder %s20, 1
      %p59 = scmp.ne.s32.totalorder %s54, %s56
      %p60 = scmp.eq.s32.totalorder %s20, 0
      %p61 = por %p59, %p60
      %p62 = scmp.ne.s32.totalorder %s54, %s56
      %p63 = scmp.eq.s32.totalorder %s25, 1
      %p64 = por %p62, %p63
      %p65 = scmp.ne.s32.totalorder %s56, %s57
      %p66 = scmp.eq.s32.totalorder %s25, 0
      %p67 = por %p65, %p66
      %p68 = scmp.ne.s32.totalorder %s56, %s57
      %p69 = scmp.eq.s32.totalorder %s26, 1
      %p70 = por %p68, %p69
      %p72 = scmp.ne.s32.totalorder %s57, %s71
      %p73 = scmp.eq.s32.totalorder %s26, 0
      %p74 = por %p72, %p73
      %s76 = sadd.s32 %s75, 1
      %p79 = scmp.eq.s32.totalorder %s20, 1
      %p80 = scmp.ne.s32.totalorder %s75, %s77
      %p81 = scmp.eq.s32.totalorder %s20, 0
      %p82 = por %p80, %p81
      %p83 = scmp.ne.s32.totalorder %s75, %s77
      %p84 = scmp.eq.s32.totalorder %s25, 1
      %p85 = por %p83, %p84
      %p86 = scmp.ne.s32.totalorder %s77, %s78
      %p87 = scmp.eq.s32.totalorder %s25, 0
      %p88 = por %p86, %p87
      %p89 = scmp.ne.s32.totalorder %s77, %s78
      %p90 = scmp.eq.s32.totalorder %s26, 1
      %p91 = por %p89, %p90
      %p93 = scmp.ne.s32.totalorder %s78, %s92
      %p94 = scmp.eq.s32.totalorder %s26, 0
      %p95 = por %p93, %p94
      %s97 = sadd.s32 %s96, 1
      %p100 = scmp.eq.s32.totalorder %s20, 1
      %p101 = scmp.ne.s32.totalorder %s96, %s98
      %p102 = scmp.eq.s32.totalorder %s20, 0
      %p103 = por %p101, %p102
      %p104 = scmp.ne.s32.totalorder %s96, %s98
      %p105 = scmp.eq.s32.totalorder %s25, 1
      %p106 = por %p104, %p105
      %p107 = scmp.ne.s32.totalorder %s98, %s99
      %p108 = scmp.eq.s32.totalorder %s25, 0
      %p109 = por %p107, %p108
      %p110 = scmp.ne.s32.totalorder %s98, %s99
      %p111 = scmp.eq.s32.totalorder %s26, 1
      %p112 = por %p110, %p111
      %p114 = scmp.ne.s32.totalorder %s99, %s113
      %p115 = scmp.eq.s32.totalorder %s26, 0
      %p116 = por %p114, %p115
      %s118 = sadd.s32 %s117, 1
      %p121 = scmp.eq.s32.totalorder %s20, 1
      %p122 = scmp.ne.s32.totalorder %s117, %s119
      %p123 = scmp.eq.s32.totalorder %s20, 0
      %p124 = por %p122, %p123
      %p125 = scmp.ne.s32.totalorder %s117, %s119
      %p126 = scmp.eq.s32.totalorder %s25, 1
      %p127 = por %p125, %p126
      %p128 = scmp.ne.s32.totalorder %s119, %s120
      %p129 = scmp.eq.s32.totalorder %s25, 0
      %p130 = por %p128, %p129
      %p131 = scmp.ne.s32.totalorder %s119, %s120
      %p132 = scmp.eq.s32.totalorder %s26, 1
      %p133 = por %p131, %p132
      %p135 = scmp.ne.s32.totalorder %s120, %s134
      %p136 = scmp.eq.s32.totalorder %s26, 0
      %p137 = por %p135, %p136
      %s139 = sadd.s32 %s138, 1
      %p142 = scmp.eq.s32.totalorder %s20, 1
      %p143 = scmp.ne.s32.totalorder %s138, %s140
      %p144 = scmp.eq.s32.totalorder %s20, 0
      %p145 = por %p143, %p144
      %p146 = scmp.ne.s32.totalorder %s138, %s140
      %p147 = scmp.eq.s32.totalorder %s25, 1
      %p148 = por %p146, %p147
      %p149 = scmp.ne.s32.totalorder %s140, %s141
      %p150 = scmp.eq.s32.totalorder %s25, 0
      %p151 = por %p149, %p150
      %p152 = scmp.ne.s32.totalorder %s140, %s141
      %p153 = scmp.eq.s32.totalorder %s26, 1
      %p154 = por %p152, %p153
      %p156 = scmp.ne.s32.totalorder %s141, %s155
      %p157 = scmp.eq.s32.totalorder %s26, 0
      %p158 = por %p156, %p157
      %s160 = sadd.s32 %s159, 1
      %p163 = scmp.eq.s32.totalorder %s20, 1
      %p164 = scmp.ne.s32.totalorder %s159, %s161
      %p165 = scmp.eq.s32.totalorder %s20, 0
      %p166 = por %p164, %p165
      %p167 = scmp.ne.s32.totalorder %s159, %s161
      %p168 = scmp.eq.s32.totalorder %s25, 1
      %p169 = por %p167, %p168
      %p170 = scmp.ne.s32.totalorder %s161, %s162
      %p171 = scmp.eq.s32.totalorder %s25, 0
      %p172 = por %p170, %p171
      %p173 = scmp.ne.s32.totalorder %s161, %s162
      %p174 = scmp.eq.s32.totalorder %s26, 1
      %p175 = por %p173, %p174
      %p177 = scmp.ne.s32.totalorder %s162, %s176
      %p178 = scmp.eq.s32.totalorder %s26, 0
      %p179 = por %p177, %p178
      %s181 = sadd.s32 %s180, 1
      %p184 = scmp.eq.s32.totalorder %s20, 1
      %p185 = scmp.ne.s32.totalorder %s180, %s182
      %p186 = scmp.eq.s32.totalorder %s20, 0
      %p187 = por %p185, %p186
      %p188 = scmp.ne.s32.totalorder %s180, %s182
      %p189 = scmp.eq.s32.totalorder %s25, 1
      %p190 = por %p188, %p189
      %p191 = scmp.ne.s32.totalorder %s182, %s183
      %p192 = scmp.eq.s32.totalorder %s25, 0
      %p193 = por %p191, %p192
      %p194 = scmp.ne.s32.totalorder %s182, %s183
      %p195 = scmp.eq.s32.totalorder %s26, 1
      %p196 = por %p194, %p195
      %p198 = scmp.ne.s32.totalorder %s183, %s197
      %p199 = scmp.eq.s32.totalorder %s26, 0
      %p200 = por %p198, %p199
      %s202 = sadd.s32 %s201, 1
      %p205 = scmp.eq.s32.totalorder %s20, 1
      %p206 = scmp.ne.s32.totalorder %s201, %s203
      %p207 = scmp.eq.s32.totalorder %s20, 0
      %p208 = por %p206, %p207
      %p209 = scmp.ne.s32.totalorder %s201, %s203
      %p210 = scmp.eq.s32.totalorder %s25, 1
      %p211 = por %p209, %p210
      %p212 = scmp.ne.s32.totalorder %s203, %s204
      %p213 = scmp.eq.s32.totalorder %s25, 0
      %p214 = por %p212, %p213
      %p215 = scmp.ne.s32.totalorder %s203, %s204
      %p216 = scmp.eq.s32.totalorder %s26, 1
      %p217 = por %p215, %p216
      %p219 = scmp.ne.s32.totalorder %s204, %s218
      %p220 = scmp.eq.s32.totalorder %s26, 0
      %p221 = por %p219, %p220
      %s222 = ssub.s32 %s20, %s27
      %p223 = scmp.eq.s32.totalorder %s222, 0
      %s225 = sadd.s32 %s224, 1
      %s226 = scalar_select %p223, %s224, %s225
      %p229 = pneg %p223
      %p230 = scmp.eq.s32.totalorder %s20, 1
      %p231 = por %p229, %p230
      %p232 = scmp.ne.s32.totalorder %s224, %s227
      %p233 = scmp.eq.s32.totalorder %s20, 0
      %p234 = por %p232, %p233
      %p235 = scmp.ne.s32.totalorder %s224, %s227
      %p236 = scmp.eq.s32.totalorder %s25, 1
      %p237 = por %p235, %p236
      %p238 = scmp.ne.s32.totalorder %s227, %s228
      %p239 = scmp.eq.s32.totalorder %s25, 0
      %p240 = por %p238, %p239
      %p241 = scmp.ne.s32.totalorder %s227, %s228
      %p242 = scmp.eq.s32.totalorder %s26, 1
      %p243 = por %p241, %p242
      %p245 = scmp.ne.s32.totalorder %s228, %s244
      %p246 = scmp.eq.s32.totalorder %s26, 0
      %p247 = por %p245, %p246
      %s248 = ssub.s32 %s20, %s27
      %p249 = scmp.eq.s32.totalorder %s248, 0
      %s251 = sadd.s32 %s250, 1
      %s252 = scalar_select %p249, %s250, %s251
      %p255 = pneg %p249
      %p256 = scmp.eq.s32.totalorder %s20, 1
      %p257 = por %p255, %p256
      %p258 = scmp.ne.s32.totalorder %s250, %s253
      %p259 = scmp.eq.s32.totalorder %s20, 0
      %p260 = por %p258, %p259
      %p261 = scmp.ne.s32.totalorder %s250, %s253
      %p262 = scmp.eq.s32.totalorder %s25, 1
      %p263 = por %p261, %p262
      %p264 = scmp.ne.s32.totalorder %s253, %s254
      %p265 = scmp.eq.s32.totalorder %s25, 0
      %p266 = por %p264, %p265
      %p267 = scmp.ne.s32.totalorder %s253, %s254
      %p268 = scmp.eq.s32.totalorder %s26, 1
      %p269 = por %p267, %p268
      %p271 = scmp.ne.s32.totalorder %s254, %s270
      %p272 = scmp.eq.s32.totalorder %s26, 0
      %p273 = por %p271, %p272
      %p274 = scmp.le.s32.totalorder 1, %s20
      %p275 = scmp.lt.s32.totalorder %s20, 3
      %p276 = pnand %p274, %p275
      %p277 = pneg %p276
      // Predicated region
      $region9: #{_dense_forward.3} parent=5 // pred_check
        _
      $region10: #{_dense_forward.3} parent=5 // pred_check_branch
        %279 = sbr.rel (%p276) target = $region12
      $region11: #{_dense_forward.3} parent=5 // pred_region
        %s280 = ssub.s32 %s20, 1
        // Predicated region
        $region13: #{_dense_forward.3} parent=11 // pred_check
          %p281 = pneg %p67
        $region14: #{_dense_forward.3} parent=11 // pred_check_branch
          %283 = sbr.rel (%p281) target = $region16
        $region15: #{_dense_forward.3} parent=11 // pred_region
          _
        $region16: #{_dense_forward.3} parent=11 // pred_fallthru
          _
        // Predicated region
        $region17: #{_dense_forward.3} parent=11 // pred_check
          %p284 = pneg %p88
        $region18: #{_dense_forward.3} parent=11 // pred_check_branch
          %286 = sbr.rel (%p284) target = $region20
        $region19: #{_dense_forward.3} parent=11 // pred_region
          _
        $region20: #{_dense_forward.3} parent=11 // pred_fallthru
          _
        // Predicated region
        $region21: #{_dense_forward.3} parent=11 // pred_check
          %p287 = pneg %p109
        $region22: #{_dense_forward.3} parent=11 // pred_check_branch
          %289 = sbr.rel (%p287) target = $region24
        $region23: #{_dense_forward.3} parent=11 // pred_region
          _
        $region24: #{_dense_forward.3} parent=11 // pred_fallthru
          _
        // Predicated region
        $region25: #{_dense_forward.3} parent=11 // pred_check
          %p290 = pneg %p130
        $region26: #{_dense_forward.3} parent=11 // pred_check_branch
          %292 = sbr.rel (%p290) target = $region28
        $region27: #{_dense_forward.3} parent=11 // pred_region
          _
        $region28: #{_dense_forward.3} parent=11 // pred_fallthru
          _
        // Predicated region
        $region29: #{_dense_forward.3} parent=11 // pred_check
          %p293 = pneg %p151
        $region30: #{_dense_forward.3} parent=11 // pred_check_branch
          %295 = sbr.rel (%p293) target = $region32
        $region31: #{_dense_forward.3} parent=11 // pred_region
          _
        $region32: #{_dense_forward.3} parent=11 // pred_fallthru
          _
        // Predicated region
        $region33: #{_dense_forward.3} parent=11 // pred_check
          %p296 = pneg %p172
        $region34: #{_dense_forward.3} parent=11 // pred_check_branch
          %298 = sbr.rel (%p296) target = $region36
        $region35: #{_dense_forward.3} parent=11 // pred_region
          _
        $region36: #{_dense_forward.3} parent=11 // pred_fallthru
          _
        // Predicated region
        $region37: #{_dense_forward.3} parent=11 // pred_check
          %p299 = pneg %p193
        $region38: #{_dense_forward.3} parent=11 // pred_check_branch
          %301 = sbr.rel (%p299) target = $region40
        $region39: #{_dense_forward.3} parent=11 // pred_region
          _
        $region40: #{_dense_forward.3} parent=11 // pred_fallthru
          _
        // Predicated region
        $region41: #{_dense_forward.3} parent=11 // pred_check
          %p302 = pneg %p214
        $region42: #{_dense_forward.3} parent=11 // pred_check_branch
          %304 = sbr.rel (%p302) target = $region44
        $region43: #{_dense_forward.3} parent=11 // pred_region
          _
        $region44: #{_dense_forward.3} parent=11 // pred_fallthru
          _
      $region12: #{_dense_forward.3} parent=5 // pred_fallthru
        _
      %p305 = scmp.lt.s32.totalorder %s20, 2
      // Predicated region
      $region45: #{_dense_forward.3} parent=5 // pred_check
        %p306 = pneg %p305
      $region46: #{_dense_forward.3} parent=5 // pred_check_branch
        %308 = sbr.rel (%p306) target = $region48
      $region47: #{_dense_forward.3} parent=5 // pred_region
        // Predicated region
        $region49: #{_dense_forward.3} parent=47 // pred_check
          %p309 = pneg %p40
        $region50: #{_dense_forward.3} parent=47 // pred_check_branch
          %311 = sbr.rel (%p309) target = $region52
        $region51: #{_dense_forward.3} parent=47 // pred_region
          %p312 = scmp.lt.s32.totalorder %s20, 1
          %s313 = scalar_select %p312, %s20, 1
          %s314 = smul.addr %s313, 8
          %s315 = scalar_lea.vmem %s0, %s314
        $region52: #{_dense_forward.3} parent=47 // pred_fallthru
          _
      $region48: #{_dense_forward.3} parent=5 // pred_fallthru
        _
      %p316 = scmp.le.s32.totalorder 1, %s20
      %p317 = scmp.lt.s32.totalorder %s20, 3
      %p318 = pnand %p316, %p317
      %p319 = pneg %p318
      // Predicated region
      $region53: #{_dense_forward.3} parent=5 // pred_check
        _
      $region54: #{_dense_forward.3} parent=5 // pred_check_branch
        %321 = sbr.rel (%p318) target = $region56
      $region55: #{_dense_forward.3} parent=5 // pred_region
        %s322 = ssub.s32 %s20, 1
        %p323 = scmp.lt.s32.totalorder %s25, 1
        %s324 = scalar_select %p323, %s25, 1
        %s325 = smul.addr %s324, 8
        %s326 = scalar_lea.vmem %s0, %s325
        %p327 = pneg %p46
        %p328 = pneg %p43
        %p329 = pneg %p67
        %p330 = pneg %p64
        %p331 = pneg %p88
        %p332 = pneg %p85
        %p333 = pneg %p109
        %p334 = pneg %p106
        %p335 = pneg %p130
        %p336 = pneg %p127
        %p337 = pneg %p151
        %p338 = pneg %p148
        %p339 = pneg %p172
        %p340 = pneg %p169
        %p341 = pneg %p193
        %p342 = pneg %p190
        %p343 = pneg %p214
        %p344 = pneg %p211
        %p345 = pneg %p240
        %p346 = pneg %p237
        %s347 = sand.u32 %s227, 1
        %s348 = scalar_lea.sflag [#allocation3], %s347
        %s349 = sand.u32 %s227, 1
        %s350 = smul.addr %s349, 8
        %s351 = scalar_lea.vmem [#allocation2], %s350
        %p352 = pneg %p266
        %p353 = pneg %p263
        %p354 = scmp.lt.s32.totalorder %s25, 1
        %s355 = scalar_select %p354, %s25, 1
        %s356 = smul.addr %s355, 8
        %s357 = scalar_lea.vmem %s10, %s356
        %p358 = scmp.lt.s32.totalorder %s25, 1
        %s359 = scalar_select %p358, %s25, 1
        %s360 = smul.addr %s359, 8
        %s361 = scalar_lea.vmem %s0, %s360
        %p362 = scmp.lt.s32.totalorder %s25, 1
        %s363 = scalar_select %p362, %s25, 1
        %s364 = smul.addr %s363, 8
        %s365 = scalar_lea.vmem %s10, %s364
        %v367 = vld [vmem:[%s361] sm:$0xff]
        %v368 = vld [vmem:[%s7] sm:$0xff]
        %v369 = vld [vmem:[%s7 + $0x8] sm:$0xff]
        %v370 = vld [vmem:[%s7 + $0x10] sm:$0xff]
        %v371 = vld [vmem:[%s7 + $0x18] sm:$0xff]
        %v372 = vpack.c.bf16 %v367, %v367
        %v373 = vpack.c.bf16 %v369, %v368
        %v374 = vpack.c.bf16 %v371, %v370
        %v375 = vld [vmem:[%s8] sm:$0x1]
        %v377 = vlaneseq
        %v378 = vshrl.u32 %v377, 7
        %v379 = vsub.s32 0, %v378
        %v380 = vrot.slane %v375, %v379
        %vm382 = vcmask 261120
        %v384 = vsel %vm382, %v372, 0
        %386 = vmatprep.subr.bf16.mxu0 0
        %387 = vmatpush1.bf16.msra.mxu0 0
        %388 = vmatprep.subr.bf16.mxu0 0
        %389 = vmatpush1.bf16.msra.mxu0 0
        %390 = vmatprep.subr.bf16.mxu0 0
        %391 = vmatpush1.bf16.msra.mxu0 0
        %392 = vmatprep.subr.bf16.mxu0 0
        %393 = vmatpush1.bf16.msra.mxu0 0
        %394 = vmatprep.subr.bf16.mxu0 0
        %395 = vmatpush1.bf16.msra.mxu0 0
        %396 = vmatprep.subr.bf16.mxu0 0
        %397 = vmatpush1.bf16.msra.mxu0 0
        %398 = vmatprep.subr.bf16.mxu0 0
        %399 = vmatpush1.bf16.msra.mxu0 %v374
        %400 = vmatprep.subr.bf16.mxu0 0
        %401 = vmatpush1.bf16.msra.mxu0 %v373
        %402 = vmatprep.subr.bf16.mxu0 0
        %403 = vmatpush2.bf16.msra.mxu0 0
        %404 = vmatprep.subr.bf16.mxu0 0
        %405 = vmatpush2.bf16.msra.mxu0 0
        %406 = vmatprep.subr.bf16.mxu0 0
        %407 = vmatpush2.bf16.msra.mxu0 0
        %408 = vmatprep.subr.bf16.mxu0 0
        %409 = vmatpush2.bf16.msra.mxu0 0
        %410 = vmatprep.subr.bf16.mxu0 0
        %411 = vmatpush2.bf16.msra.mxu0 0
        %412 = vmatprep.subr.bf16.mxu0 0
        %413 = vmatpush2.bf16.msra.mxu0 0
        %414 = vmatprep.subr.bf16.mxu0 0
        %415 = vmatpush2.bf16.msra.mxu0 0
        %416 = vmatprep.subr.bf16.mxu0 0
        %417 = vmatpush2.bf16.msra.mxu0 0
        %418 = vmatprep.mubr.bf16.mxu0 0
        %419 = vmatmul.mubr.bf16.gmra.mxu0 %v384
        %v420 = vpop.f32.mrf.mxu0
        %v421 = vadd.f32 %v380, %v420
        %v422 = vpop.f32.mrf.mxu0
        %v423 = vpop.f32.mrf.mxu0
        %v424 = vpop.f32.mrf.mxu0
        %425 = vdwg.mxu0
        %426 = vst [vmem:[%s365] sm:$0xff] %v421
        %v427 = vld [vmem:[%s1] sm:$0xff]
        %v428 = vld [vmem:[%s1 + $0x8] sm:$0xff]
        %v429 = vld [vmem:[%s1 + $0x10] sm:$0xff]
        %v430 = vld [vmem:[%s1 + $0x18] sm:$0xff]
        %v431 = vpack.c.bf16 %v428, %v427
        %v432 = vpack.c.bf16 %v430, %v429
        %v433 = vld [vmem:[%s2] sm:$0x1]
        %v435 = vlaneseq
        %v436 = vshrl.u32 %v435, 7
        %v437 = vsub.s32 0, %v436
        %v438 = vrot.slane %v433, %v437
        %440 = vmatprep.subr.bf16.mxu0 0
        %441 = vmatpush1.bf16.msra.mxu0 0
        %442 = vmatprep.subr.bf16.mxu0 0
        %443 = vmatpush1.bf16.msra.mxu0 0
        %444 = vmatprep.subr.bf16.mxu0 0
        %445 = vmatpush1.bf16.msra.mxu0 0
        %446 = vmatprep.subr.bf16.mxu0 0
        %447 = vmatpush1.bf16.msra.mxu0 0
        %448 = vmatprep.subr.bf16.mxu0 0
        %449 = vmatpush1.bf16.msra.mxu0 0
        %450 = vmatprep.subr.bf16.mxu0 0
        %451 = vmatpush1.bf16.msra.mxu0 0
        %452 = vmatprep.subr.bf16.mxu0 0
        %453 = vmatpush1.bf16.msra.mxu0 %v432
        %454 = vmatprep.subr.bf16.mxu0 0
        %455 = vmatpush1.bf16.msra.mxu0 %v431
        %456 = vmatprep.subr.bf16.mxu0 0
        %457 = vmatpush2.bf16.msra.mxu0 0
        %458 = vmatprep.subr.bf16.mxu0 0
        %459 = vmatpush2.bf16.msra.mxu0 0
        %460 = vmatprep.subr.bf16.mxu0 0
        %461 = vmatpush2.bf16.msra.mxu0 0
        %462 = vmatprep.subr.bf16.mxu0 0
        %463 = vmatpush2.bf16.msra.mxu0 0
        %464 = vmatprep.subr.bf16.mxu0 0
        %465 = vmatpush2.bf16.msra.mxu0 0
        %466 = vmatprep.subr.bf16.mxu0 0
        %467 = vmatpush2.bf16.msra.mxu0 0
        %468 = vmatprep.subr.bf16.mxu0 0
        %469 = vmatpush2.bf16.msra.mxu0 0
        %470 = vmatprep.subr.bf16.mxu0 0
        %471 = vmatpush2.bf16.msra.mxu0 0
        %472 = vmatprep.mubr.bf16.mxu0 0
        %473 = vmatmul.mubr.bf16.gmra.mxu0 %v384
        %v474 = vpop.f32.mrf.mxu0
        %v475 = vadd.f32 %v438, %v474
        %v476 = vpop.f32.mrf.mxu0
        %v477 = vpop.f32.mrf.mxu0
        %v478 = vpop.f32.mrf.mxu0
        %479 = vdwg.mxu0
        %v480 = vmul.f32 %v475, 0.5
        %v481 = vmul.f32 %v475, 0.044715
        %v482 = vmul.f32 %v481, %v475
        %v483 = vmul.f32 %v482, %v475
        %v484 = vadd.f32 %v475, %v483
        %v485 = vmul.f32 %v484, 0.7978846
        %v486 = vtanh.pop %v485
        %v487 = vadd.f32 %v486, 1.0
        %v488 = vmul.f32 %v480, %v487
        %v489 = vld [vmem:[%s3] sm:$0x1]
        %v490 = vld [vmem:[%s4] sm:$0x1]
        %v491 = vsel %vm382, %v488, 0.0
        %492 = vadd.xlane.f32.xlu0 %v491
        %v493 = vpop.xlane.xlu0 %492
        %v494 = vrcp.pop 32.0
        %v495 = vmul.f32 %v493, %v494
        %v496 = vsub.f32 %v488, %v495
        %v497 = vmul.f32 %v496, %v496
        %v498 = vsel %vm382, %v497, 0.0
        %499 = vadd.xlane.f32.xlu0 %v498
        %v500 = vpop.xlane.xlu0 %499
        %v501 = vmul.f32 %v500, %v494
        %v502 = vadd.f32 %v501, 1e-12
        %v503 = vrsqrt.pop %v502
        %v504 = vmul.f32 %v496, %v503
        %v506 = vlaneseq
        %v507 = vshrl.u32 %v506, 7
        %v508 = vsub.s32 0, %v507
        %v509 = vrot.slane %v489, %v508
        %v511 = vmul.f32 %v504, %v509
        %v513 = vlaneseq
        %v514 = vshrl.u32 %v513, 7
        %v515 = vsub.s32 0, %v514
        %v516 = vrot.slane %v490, %v515
        %v518 = vadd.f32 %v511, %v516
        %v519 = vld [vmem:[%s5] sm:$0xff]
        %v520 = vld [vmem:[%s5 + $0x8] sm:$0xff]
        %v521 = vld [vmem:[%s5 + $0x10] sm:$0xff]
        %v522 = vld [vmem:[%s5 + $0x18] sm:$0xff]
        %v523 = vld [vmem:[%s5 + $0x20] sm:$0xff]
        %v524 = vld [vmem:[%s5 + $0x28] sm:$0xff]
        %v525 = vld [vmem:[%s5 + $0x30] sm:$0xff]
        %v526 = vld [vmem:[%s5 + $0x38] sm:$0xff]
        %v527 = vpack.c.bf16 %v518, %v518
        %v528 = vpack.c.bf16 %v520, %v519
        %v529 = vpack.c.bf16 %v522, %v521
        %v530 = vpack.c.bf16 %v524, %v523
        %v531 = vpack.c.bf16 %v526, %v525
        %v532 = vld [vmem:[%s6] sm:$0x1]
        %v534 = vlaneseq
        %v535 = vshrl.u32 %v534, 7
        %v536 = vsub.s32 0, %v535
        %v537 = vrot.slane %v532, %v536
        %v540 = vsel %vm382, %v527, 0
        %v543 = vsel %vm382, %v528, 0
        %v546 = vsel %vm382, %v529, 0
        %v549 = vsel %vm382, %v530, 0
        %v552 = vsel %vm382, %v531, 0
        %554 = vmatprep.subr.bf16.mxu0 0
        %555 = vmatpush1.bf16.xpose.msra.mxu0 0
        %556 = vmatprep.subr.bf16.mxu0 0
        %557 = vmatpush1.bf16.xpose.msra.mxu0 0
        %558 = vmatprep.subr.bf16.mxu0 0
        %559 = vmatpush1.bf16.xpose.msra.mxu0 0
        %560 = vmatprep.subr.bf16.mxu0 0
        %561 = vmatpush1.bf16.xpose.msra.mxu0 0
        %562 = vmatprep.subr.bf16.mxu0 0
        %563 = vmatpush1.bf16.xpose.msra.mxu0 %v552
        %564 = vmatprep.subr.bf16.mxu0 0
        %565 = vmatpush1.bf16.xpose.msra.mxu0 %v549
        %566 = vmatprep.subr.bf16.mxu0 0
        %567 = vmatpush1.bf16.xpose.msra.mxu0 %v546
        %568 = vmatprep.subr.bf16.mxu0 0
        %569 = vmatpush1.bf16.xpose.msra.mxu0 %v543
        %570 = vmatprep.subr.bf16.mxu0 0
        %571 = vmatpush2.bf16.xpose.msra.mxu0 0
        %572 = vmatprep.subr.bf16.mxu0 0
        %573 = vmatpush2.bf16.xpose.msra.mxu0 0
        %574 = vmatprep.subr.bf16.mxu0 0
        %575 = vmatpush2.bf16.xpose.msra.mxu0 0
        %576 = vmatprep.subr.bf16.mxu0 0
        %577 = vmatpush2.bf16.xpose.msra.mxu0 0
        %578 = vmatprep.subr.bf16.mxu0 0
        %579 = vmatpush2.bf16.xpose.msra.mxu0 0
        %580 = vmatprep.subr.bf16.mxu0 0
        %581 = vmatpush2.bf16.xpose.msra.mxu0 0
        %582 = vmatprep.subr.bf16.mxu0 0
        %583 = vmatpush2.bf16.xpose.msra.mxu0 0
        %584 = vmatprep.subr.bf16.mxu0 0
        %585 = vmatpush2.bf16.xpose.msra.mxu0 0
        %586 = vmatprep.mubr.bf16.mxu0 0
        %587 = vmatmul.mubr.bf16.gmra.mxu0 %v540
        %v588 = vpop.f32.mrf.mxu0
        %v589 = vadd.f32 %v537, %v588
        %v590 = vpop.f32.mrf.mxu0
        %v591 = vpop.f32.mrf.mxu0
        %v592 = vpop.f32.mrf.mxu0
        %593 = vdwg.mxu0
        %vm594 = vcmask 523264
        %595 = vst.msk [vmem:[%s351] sm:$0xff] %vm594, %v589
        %s596 = sand.u32 %s227, 1
        %s597 = scalar_lea.sflag [#allocation3], %s596
        %s598 = sand.u32 %s227, 1
        %s599 = smul.addr %s598, 8
        %s600 = scalar_lea.vmem [#allocation2], %s599
        %p601 = scmp.lt.s32.totalorder %s25, 1
        %s602 = scalar_select %p601, %s25, 1
        %s603 = smul.addr %s602, 8
        %s604 = scalar_lea.vmem %s10, %s603
        // Predicated region
        $region57: #{_dense_forward.3} parent=55 // pred_check
          %p605 = pneg %p237
        $region58: #{_dense_forward.3} parent=55 // pred_check_branch
          %607 = sbr.rel (%p605) target = $region60
        $region59: #{_dense_forward.3} parent=55 // pred_region
          %s609 = ssub.s32 128, 128
          %610 = vsyncadd %s597, %s609
          %s611 = smul.addr %s25, 128
          %s612 = scalar_lea.hbm %s9, %s611
          %s614 = sshll.u32 %s600, 4
          %s615 = int_to_ptr.vmem [resolvable:$true] %s614
          %617 = dma.vmem_to_hbm [thread:$0]  %s615, 128, %s612, %s597
        $region60: #{_dense_forward.3} parent=55 // pred_fallthru
          _
        // Predicated region
        $region61: #{_dense_forward.3} parent=55 // pred_check
          %p618 = pneg %p263
        $region62: #{_dense_forward.3} parent=55 // pred_check_branch
          %620 = sbr.rel (%p618) target = $region64
        $region63: #{_dense_forward.3} parent=55 // pred_region
          _
        $region64: #{_dense_forward.3} parent=55 // pred_fallthru
          _
      $region56: #{_dense_forward.3} parent=5 // pred_fallthru
        _
      %p621 = scmp.le.s32.totalorder 2, %s20
      // Predicated region
      $region65: #{_dense_forward.3} parent=5 // pred_check
        %p622 = pneg %p621
      $region66: #{_dense_forward.3} parent=5 // pred_check_branch
        %624 = sbr.rel (%p622) target = $region68
      $region67: #{_dense_forward.3} parent=5 // pred_region
        %s625 = ssub.s32 %s20, 2
        // Predicated region
        $region69: #{_dense_forward.3} parent=67 // pred_check
          %p626 = pneg %p243
        $region70: #{_dense_forward.3} parent=67 // pred_check_branch
          %628 = sbr.rel (%p626) target = $region72
        $region71: #{_dense_forward.3} parent=67 // pred_region
          %s629 = sand.u32 %s228, 1
          %s630 = scalar_lea.sflag [#allocation3], %s629
          %s631 = sand.u32 %s228, 1
          %s632 = smul.addr %s631, 8
          %s633 = scalar_lea.vmem [#allocation2], %s632
          %634 = dma.done %s630, 128
        $region72: #{_dense_forward.3} parent=67 // pred_fallthru
          _
        // Predicated region
        $region73: #{_dense_forward.3} parent=67 // pred_check
          %p635 = pneg %p269
        $region74: #{_dense_forward.3} parent=67 // pred_check_branch
          %637 = sbr.rel (%p635) target = $region76
        $region75: #{_dense_forward.3} parent=67 // pred_region
          %p638 = scmp.lt.s32.totalorder %s26, 1
          %s639 = scalar_select %p638, %s26, 1
          %s640 = smul.addr %s639, 8
          %s641 = scalar_lea.vmem %s10, %s640
        $region76: #{_dense_forward.3} parent=67 // pred_fallthru
          _
      $region68: #{_dense_forward.3} parent=5 // pred_fallthru
        _
    $region6: #{_dense_forward.3} parent=1 // loop_footer
      %s24 = sadd.s32 1, %s20
    $region7: #{_dense_forward.3} parent=1 // loop_footer_branch
      %19 = sbr.rel target = $region3
    $region8: #{_dense_forward.3} parent=1 // loop_exit
      _
    %642 = vsyncpa [#allocation3], 1
    %s643 = scalar_lea.sflag [#allocation3], 1
    %644 = vsyncpa %s643, 1

// kernel: _dense_forward.2
$region0: #{_dense_forward.2}
  #allocation0 [shape = 'u32[]', space=smem, size = 0x4, offset = 0x4, fixed_abs, tag = 'smem constant byte address 0x4 - core index']
  #allocation1 [shape = 'u32[144,128]{1,0:T(1,128)}', space=vmem, size = 0x12000, scoped, tag = 'internal scratch']
  %s0 = inlined_call_operand.vmem [shape: s32[2,1,8], index: 0, kind: input, shape index: {}]
  %s1 = inlined_call_operand.vmem [shape: s32[2,1,8], index: 1, kind: input, shape index: {}]
  %s2 = inlined_call_operand.vmem [shape: f32[16,32], index: 2, kind: input, shape index: {}]
  %s3 = inlined_call_operand.vmem [shape: f32[1,32], index: 3, kind: input, shape index: {}]
  %s4 = inlined_call_operand.vmem [shape: f32[1,32], index: 4, kind: input, shape index: {}]
  %s5 = inlined_call_operand.vmem [shape: f32[2,32,96], index: 5, kind: input, shape index: {}]
  %s6 = inlined_call_operand.vmem [shape: f32[2,1,96], index: 6, kind: input, shape index: {}]
  %s7 = inlined_call_operand.vmem [shape: f32[2,32,32], index: 7, kind: input, shape index: {}]
  %s8 = inlined_call_operand.vmem [shape: f32[2,1,32], index: 8, kind: input, shape index: {}]
  %s9 = inlined_call_operand.vmem [shape: f32[2,1,32], index: 9, kind: input, shape index: {}]
  %s10 = inlined_call_operand.vmem [shape: f32[2,1,32], index: 10, kind: input, shape index: {}]
  %s11 = inlined_call_operand.vmem [shape: f32[2,32,64], index: 11, kind: input, shape index: {}]
  %s12 = inlined_call_operand.vmem [shape: f32[2,1,64], index: 12, kind: input, shape index: {}]
  %s13 = inlined_call_operand.vmem [shape: f32[2,64,32], index: 13, kind: input, shape index: {}]
  %s14 = inlined_call_operand.vmem [shape: f32[2,1,32], index: 14, kind: input, shape index: {}]
  %s15 = inlined_call_operand.vmem [shape: f32[2,1,32], index: 15, kind: input, shape index: {}]
  %s16 = inlined_call_operand.vmem [shape: f32[2,1,32], index: 16, kind: input, shape index: {}]
  %s17 = inlined_call_operand.vmem [shape: f32[16,32], index: 17, kind: output, shape index: {}]
  %s18 = sld [smem:[#allocation0]]
  $region105: #{_dense_forward.2} parent=0
    _
  %s20 = ssub.s32 1, %s18
  %s21 = scalar_select 0, %s20, %s18
  loop: start=0, step=1, limit=6
  $region2: #{_dense_forward.2} parent=0 // loop_pre_header
    _
  $region3: #{_dense_forward.2} parent=0 // loop_header
    %s23 = sphi 0, %s27
    %p24 = scmp.ge.s32.totalorder %s23, 6
    %s30 = sphi 0, %s42
    %s31 = sphi 0, %s38
    %s32 = sphi 0, %s30
    %s33 = sphi 0, %s31
    %s34 = sphi 0, %s32
    %s35 = sphi 0, %s33
    %s45 = sphi 0, %s47
    %s48 = sphi 0, %s45
    %s49 = sphi 0, %s48
    %s65 = sphi 0, %s49
    %s71 = sphi 0, %s73
    %s74 = sphi 0, %s71
    %s75 = sphi 0, %s74
    %s91 = sphi 0, %s75
    %s97 = sphi 0, %s99
    %s100 = sphi 0, %s97
    %s101 = sphi 0, %s100
    %s117 = sphi 0, %s101
    %s121 = sphi 0, %s121
    %s123 = sphi 0, %s121
    %s124 = sphi 0, %s123
    %s138 = sphi 0, %s124
    %s142 = sphi 0, %s142
    %s144 = sphi 0, %s142
    %s145 = sphi 0, %s144
    %s159 = sphi 0, %s145
    %s165 = sphi 0, %s167
    %s168 = sphi 0, %s165
    %s169 = sphi 0, %s168
    %s185 = sphi 0, %s169
    %s191 = sphi 0, %s193
    %s194 = sphi 0, %s191
    %s195 = sphi 0, %s194
    %s211 = sphi 0, %s195
    %s217 = sphi 0, %s219
    %s220 = sphi 0, %s217
    %s221 = sphi 0, %s220
    %s237 = sphi 0, %s221
    %s243 = sphi 0, %s245
    %s246 = sphi 0, %s243
    %s247 = sphi 0, %s246
    %s263 = sphi 0, %s247
    %s269 = sphi 0, %s271
    %s272 = sphi 0, %s269
    %s273 = sphi 0, %s272
    %s289 = sphi 0, %s273
    %s295 = sphi 0, %s297
    %s298 = sphi 0, %s295
    %s299 = sphi 0, %s298
    %s315 = sphi 0, %s299
    %s321 = sphi 0, %s323
    %s324 = sphi 0, %s321
    %s325 = sphi 0, %s324
    %s341 = sphi 0, %s325
    %s347 = sphi 0, %s349
    %s350 = sphi 0, %s347
    %s351 = sphi 0, %s350
    %s367 = sphi 0, %s351
    %s373 = sphi 0, %s375
    %s376 = sphi 0, %s373
    %s377 = sphi 0, %s376
    %s393 = sphi 0, %s377
    %s399 = sphi 0, %s401
    %s402 = sphi 0, %s399
    %s403 = sphi 0, %s402
    %s419 = sphi 0, %s403
    %s425 = sphi 0, %s427
    %s428 = sphi 0, %s425
    %s429 = sphi 0, %s428
    %s445 = sphi 0, %s429
    %s451 = sphi 0, %s453
    %s454 = sphi 0, %s451
    %s455 = sphi 0, %s454
    %s471 = sphi 0, %s455
    %s477 = sphi 0, %s479
    %s480 = sphi 0, %s477
    %s481 = sphi 0, %s480
    %s497 = sphi 0, %s481
  $region4: #{_dense_forward.2} parent=0 // loop_header_branch
    %26 = sbr.rel (%p24) target = $region8
  $region5: #{_dense_forward.2} parent=0 // loop_body
    %s28 = ssub.s32 %s23, 1
    %s29 = ssub.s32 %s23, 2
    %s36 = sadd.s32 1, %s31
    %p37 = scmp.ge.s32.totalorder %s36, 2
    %s38 = scalar_select %p37, 0, %s36
    %s39 = sadd.s32 1, %s30
    %s40 = scalar_select %p37, %s39, %s30
    %p41 = scmp.ge.s32.totalorder %s40, 2
    %s42 = scalar_select %p41, 0, %s40
    %s43 = ssub.s32 %s30, %s42
    %p44 = scmp.eq.s32.totalorder %s43, 0
    %s46 = sadd.s32 %s45, 1
    %s47 = scalar_select %p44, %s45, %s46
    %p50 = pneg %p44
    %p51 = scmp.eq.s32.totalorder %s23, 3
    %p52 = por %p50, %p51
    %p53 = scmp.ne.s32.totalorder %s45, %s48
    %p54 = scmp.eq.s32.totalorder %s23, 0
    %p55 = por %p53, %p54
    %p56 = scmp.ne.s32.totalorder %s45, %s48
    %p57 = scmp.eq.s32.totalorder %s28, 3
    %p58 = por %p56, %p57
    %p59 = scmp.ne.s32.totalorder %s48, %s49
    %p60 = scmp.eq.s32.totalorder %s28, 0
    %p61 = por %p59, %p60
    %p62 = scmp.ne.s32.totalorder %s48, %s49
    %p63 = scmp.eq.s32.totalorder %s29, 3
    %p64 = por %p62, %p63
    %p66 = scmp.ne.s32.totalorder %s49, %s65
    %p67 = scmp.eq.s32.totalorder %s29, 0
    %p68 = por %p66, %p67
    %s69 = ssub.s32 %s30, %s42
    %p70 = scmp.eq.s32.totalorder %s69, 0
    %s72 = sadd.s32 %s71, 1
    %s73 = scalar_select %p70, %s71, %s72
    %p76 = pneg %p70
    %p77 = scmp.eq.s32.totalorder %s23, 3
    %p78 = por %p76, %p77
    %p79 = scmp.ne.s32.totalorder %s71, %s74
    %p80 = scmp.eq.s32.totalorder %s23, 0
    %p81 = por %p79, %p80
    %p82 = scmp.ne.s32.totalorder %s71, %s74
    %p83 = scmp.eq.s32.totalorder %s28, 3
    %p84 = por %p82, %p83
    %p85 = scmp.ne.s32.totalorder %s74, %s75
    %p86 = scmp.eq.s32.totalorder %s28, 0
    %p87 = por %p85, %p86
    %p88 = scmp.ne.s32.totalorder %s74, %s75
    %p89 = scmp.eq.s32.totalorder %s29, 3
    %p90 = por %p88, %p89
    %p92 = scmp.ne.s32.totalorder %s75, %s91
    %p93 = scmp.eq.s32.totalorder %s29, 0
    %p94 = por %p92, %p93
    %s95 = ssub.s32 %s30, %s42
    %p96 = scmp.eq.s32.totalorder %s95, 0
    %s98 = sadd.s32 %s97, 1
    %s99 = scalar_select %p96, %s97, %s98
    %p102 = pneg %p96
    %p103 = scmp.eq.s32.totalorder %s23, 3
    %p104 = por %p102, %p103
    %p105 = scmp.ne.s32.totalorder %s97, %s100
    %p106 = scmp.eq.s32.totalorder %s23, 0
    %p107 = por %p105, %p106
    %p108 = scmp.ne.s32.totalorder %s97, %s100
    %p109 = scmp.eq.s32.totalorder %s28, 3
    %p110 = por %p108, %p109
    %p111 = scmp.ne.s32.totalorder %s100, %s101
    %p112 = scmp.eq.s32.totalorder %s28, 0
    %p113 = por %p111, %p112
    %p114 = scmp.ne.s32.totalorder %s100, %s101
    %p115 = scmp.eq.s32.totalorder %s29, 3
    %p116 = por %p114, %p115
    %p118 = scmp.ne.s32.totalorder %s101, %s117
    %p119 = scmp.eq.s32.totalorder %s29, 0
    %p120 = por %p118, %p119
    %s122 = sadd.s32 %s121, 1
    %p125 = scmp.eq.s32.totalorder %s23, 3
    %p126 = scmp.ne.s32.totalorder %s121, %s123
    %p127 = scmp.eq.s32.totalorder %s23, 0
    %p128 = por %p126, %p127
    %p129 = scmp.ne.s32.totalorder %s121, %s123
    %p130 = scmp.eq.s32.totalorder %s28, 3
    %p131 = por %p129, %p130
    %p132 = scmp.ne.s32.totalorder %s123, %s124
    %p133 = scmp.eq.s32.totalorder %s28, 0
    %p134 = por %p132, %p133
    %p135 = scmp.ne.s32.totalorder %s123, %s124
    %p136 = scmp.eq.s32.totalorder %s29, 3
    %p137 = por %p135, %p136
    %p139 = scmp.ne.s32.totalorder %s124, %s138
    %p140 = scmp.eq.s32.totalorder %s29, 0
    %p141 = por %p139, %p140
    %s143 = sadd.s32 %s142, 1
    %p146 = scmp.eq.s32.totalorder %s23, 3
    %p147 = scmp.ne.s32.totalorder %s142, %s144
    %p148 = scmp.eq.s32.totalorder %s23, 0
    %p149 = por %p147, %p148
    %p150 = scmp.ne.s32.totalorder %s142, %s144
    %p151 = scmp.eq.s32.totalorder %s28, 3
    %p152 = por %p150, %p151
    %p153 = scmp.ne.s32.totalorder %s144, %s145
    %p154 = scmp.eq.s32.totalorder %s28, 0
    %p155 = por %p153, %p154
    %p156 = scmp.ne.s32.totalorder %s144, %s145
    %p157 = scmp.eq.s32.totalorder %s29, 3
    %p158 = por %p156, %p157
    %p160 = scmp.ne.s32.totalorder %s145, %s159
    %p161 = scmp.eq.s32.totalorder %s29, 0
    %p162 = por %p160, %p161
    %s163 = ssub.s32 %s31, %s38
    %p164 = scmp.eq.s32.totalorder %s163, 0
    %s166 = sadd.s32 %s165, 1
    %s167 = scalar_select %p164, %s165, %s166
    %p170 = pneg %p164
    %p171 = scmp.eq.s32.totalorder %s23, 3
    %p172 = por %p170, %p171
    %p173 = scmp.ne.s32.totalorder %s165, %s168
    %p174 = scmp.eq.s32.totalorder %s23, 0
    %p175 = por %p173, %p174
    %p176 = scmp.ne.s32.totalorder %s165, %s168
    %p177 = scmp.eq.s32.totalorder %s28, 3
    %p178 = por %p176, %p177
    %p179 = scmp.ne.s32.totalorder %s168, %s169
    %p180 = scmp.eq.s32.totalorder %s28, 0
    %p181 = por %p179, %p180
    %p182 = scmp.ne.s32.totalorder %s168, %s169
    %p183 = scmp.eq.s32.totalorder %s29, 3
    %p184 = por %p182, %p183
    %p186 = scmp.ne.s32.totalorder %s169, %s185
    %p187 = scmp.eq.s32.totalorder %s29, 0
    %p188 = por %p186, %p187
    %s189 = ssub.s32 %s31, %s38
    %p190 = scmp.eq.s32.totalorder %s189, 0
    %s192 = sadd.s32 %s191, 1
    %s193 = scalar_select %p190, %s191, %s192
    %p196 = pneg %p190
    %p197 = scmp.eq.s32.totalorder %s23, 3
    %p198 = por %p196, %p197
    %p199 = scmp.ne.s32.totalorder %s191, %s194
    %p200 = scmp.eq.s32.totalorder %s23, 0
    %p201 = por %p199, %p200
    %p202 = scmp.ne.s32.totalorder %s191, %s194
    %p203 = scmp.eq.s32.totalorder %s28, 3
    %p204 = por %p202, %p203
    %p205 = scmp.ne.s32.totalorder %s194, %s195
    %p206 = scmp.eq.s32.totalorder %s28, 0
    %p207 = por %p205, %p206
    %p208 = scmp.ne.s32.totalorder %s194, %s195
    %p209 = scmp.eq.s32.totalorder %s29, 3
    %p210 = por %p208, %p209
    %p212 = scmp.ne.s32.totalorder %s195, %s211
    %p213 = scmp.eq.s32.totalorder %s29, 0
    %p214 = por %p212, %p213
    %s215 = ssub.s32 %s31, %s38
    %p216 = scmp.eq.s32.totalorder %s215, 0
    %s218 = sadd.s32 %s217, 1
    %s219 = scalar_select %p216, %s217, %s218
    %p222 = pneg %p216
    %p223 = scmp.eq.s32.totalorder %s23, 3
    %p224 = por %p222, %p223
    %p225 = scmp.ne.s32.totalorder %s217, %s220
    %p226 = scmp.eq.s32.totalorder %s23, 0
    %p227 = por %p225, %p226
    %p228 = scmp.ne.s32.totalorder %s217, %s220
    %p229 = scmp.eq.s32.totalorder %s28, 3
    %p230 = por %p228, %p229
    %p231 = scmp.ne.s32.totalorder %s220, %s221
    %p232 = scmp.eq.s32.totalorder %s28, 0
    %p233 = por %p231, %p232
    %p234 = scmp.ne.s32.totalorder %s220, %s221
    %p235 = scmp.eq.s32.totalorder %s29, 3
    %p236 = por %p234, %p235
    %p238 = scmp.ne.s32.totalorder %s221, %s237
    %p239 = scmp.eq.s32.totalorder %s29, 0
    %p240 = por %p238, %p239
    %s241 = ssub.s32 %s31, %s38
    %p242 = scmp.eq.s32.totalorder %s241, 0
    %s244 = sadd.s32 %s243, 1
    %s245 = scalar_select %p242, %s243, %s244
    %p248 = pneg %p242
    %p249 = scmp.eq.s32.totalorder %s23, 3
    %p250 = por %p248, %p249
    %p251 = scmp.ne.s32.totalorder %s243, %s246
    %p252 = scmp.eq.s32.totalorder %s23, 0
    %p253 = por %p251, %p252
    %p254 = scmp.ne.s32.totalorder %s243, %s246
    %p255 = scmp.eq.s32.totalorder %s28, 3
    %p256 = por %p254, %p255
    %p257 = scmp.ne.s32.totalorder %s246, %s247
    %p258 = scmp.eq.s32.totalorder %s28, 0
    %p259 = por %p257, %p258
    %p260 = scmp.ne.s32.totalorder %s246, %s247
    %p261 = scmp.eq.s32.totalorder %s29, 3
    %p262 = por %p260, %p261
    %p264 = scmp.ne.s32.totalorder %s247, %s263
    %p265 = scmp.eq.s32.totalorder %s29, 0
    %p266 = por %p264, %p265
    %s267 = ssub.s32 %s31, %s38
    %p268 = scmp.eq.s32.totalorder %s267, 0
    %s270 = sadd.s32 %s269, 1
    %s271 = scalar_select %p268, %s269, %s270
    %p274 = pneg %p268
    %p275 = scmp.eq.s32.totalorder %s23, 3
    %p276 = por %p274, %p275
    %p277 = scmp.ne.s32.totalorder %s269, %s272
    %p278 = scmp.eq.s32.totalorder %s23, 0
    %p279 = por %p277, %p278
    %p280 = scmp.ne.s32.totalorder %s269, %s272
    %p281 = scmp.eq.s32.totalorder %s28, 3
    %p282 = por %p280, %p281
    %p283 = scmp.ne.s32.totalorder %s272, %s273
    %p284 = scmp.eq.s32.totalorder %s28, 0
    %p285 = por %p283, %p284
    %p286 = scmp.ne.s32.totalorder %s272, %s273
    %p287 = scmp.eq.s32.totalorder %s29, 3
    %p288 = por %p286, %p287
    %p290 = scmp.ne.s32.totalorder %s273, %s289
    %p291 = scmp.eq.s32.totalorder %s29, 0
    %p292 = por %p290, %p291
    %s293 = ssub.s32 %s31, %s38
    %p294 = scmp.eq.s32.totalorder %s293, 0
    %s296 = sadd.s32 %s295, 1
    %s297 = scalar_select %p294, %s295, %s296
    %p300 = pneg %p294
    %p301 = scmp.eq.s32.totalorder %s23, 3
    %p302 = por %p300, %p301
    %p303 = scmp.ne.s32.totalorder %s295, %s298
    %p304 = scmp.eq.s32.totalorder %s23, 0
    %p305 = por %p303, %p304
    %p306 = scmp.ne.s32.totalorder %s295, %s298
    %p307 = scmp.eq.s32.totalorder %s28, 3
    %p308 = por %p306, %p307
    %p309 = scmp.ne.s32.totalorder %s298, %s299
    %p310 = scmp.eq.s32.totalorder %s28, 0
    %p311 = por %p309, %p310
    %p312 = scmp.ne.s32.totalorder %s298, %s299
    %p313 = scmp.eq.s32.totalorder %s29, 3
    %p314 = por %p312, %p313
    %p316 = scmp.ne.s32.totalorder %s299, %s315
    %p317 = scmp.eq.s32.totalorder %s29, 0
    %p318 = por %p316, %p317
    %s319 = ssub.s32 %s31, %s38
    %p320 = scmp.eq.s32.totalorder %s319, 0
    %s322 = sadd.s32 %s321, 1
    %s323 = scalar_select %p320, %s321, %s322
    %p326 = pneg %p320
    %p327 = scmp.eq.s32.totalorder %s23, 3
    %p328 = por %p326, %p327
    %p329 = scmp.ne.s32.totalorder %s321, %s324
    %p330 = scmp.eq.s32.totalorder %s23, 0
    %p331 = por %p329, %p330
    %p332 = scmp.ne.s32.totalorder %s321, %s324
    %p333 = scmp.eq.s32.totalorder %s28, 3
    %p334 = por %p332, %p333
    %p335 = scmp.ne.s32.totalorder %s324, %s325
    %p336 = scmp.eq.s32.totalorder %s28, 0
    %p337 = por %p335, %p336
    %p338 = scmp.ne.s32.totalorder %s324, %s325
    %p339 = scmp.eq.s32.totalorder %s29, 3
    %p340 = por %p338, %p339
    %p342 = scmp.ne.s32.totalorder %s325, %s341
    %p343 = scmp.eq.s32.totalorder %s29, 0
    %p344 = por %p342, %p343
    %s345 = ssub.s32 %s31, %s38
    %p346 = scmp.eq.s32.totalorder %s345, 0
    %s348 = sadd.s32 %s347, 1
    %s349 = scalar_select %p346, %s347, %s348
    %p352 = pneg %p346
    %p353 = scmp.eq.s32.totalorder %s23, 3
    %p354 = por %p352, %p353
    %p355 = scmp.ne.s32.totalorder %s347, %s350
    %p356 = scmp.eq.s32.totalorder %s23, 0
    %p357 = por %p355, %p356
    %p358 = scmp.ne.s32.totalorder %s347, %s350
    %p359 = scmp.eq.s32.totalorder %s28, 3
    %p360 = por %p358, %p359
    %p361 = scmp.ne.s32.totalorder %s350, %s351
    %p362 = scmp.eq.s32.totalorder %s28, 0
    %p363 = por %p361, %p362
    %p364 = scmp.ne.s32.totalorder %s350, %s351
    %p365 = scmp.eq.s32.totalorder %s29, 3
    %p366 = por %p364, %p365
    %p368 = scmp.ne.s32.totalorder %s351, %s367
    %p369 = scmp.eq.s32.totalorder %s29, 0
    %p370 = por %p368, %p369
    %s371 = ssub.s32 %s31, %s38
    %p372 = scmp.eq.s32.totalorder %s371, 0
    %s374 = sadd.s32 %s373, 1
    %s375 = scalar_select %p372, %s373, %s374
    %p378 = pneg %p372
    %p379 = scmp.eq.s32.totalorder %s23, 3
    %p380 = por %p378, %p379
    %p381 = scmp.ne.s32.totalorder %s373, %s376
    %p382 = scmp.eq.s32.totalorder %s23, 0
    %p383 = por %p381, %p382
    %p384 = scmp.ne.s32.totalorder %s373, %s376
    %p385 = scmp.eq.s32.totalorder %s28, 3
    %p386 = por %p384, %p385
    %p387 = scmp.ne.s32.totalorder %s376, %s377
    %p388 = scmp.eq.s32.totalorder %s28, 0
    %p389 = por %p387, %p388
    %p390 = scmp.ne.s32.totalorder %s376, %s377
    %p391 = scmp.eq.s32.totalorder %s29, 3
    %p392 = por %p390, %p391
    %p394 = scmp.ne.s32.totalorder %s377, %s393
    %p395 = scmp.eq.s32.totalorder %s29, 0
    %p396 = por %p394, %p395
    %s397 = ssub.s32 %s31, %s38
    %p398 = scmp.eq.s32.totalorder %s397, 0
    %s400 = sadd.s32 %s399, 1
    %s401 = scalar_select %p398, %s399, %s400
    %p404 = pneg %p398
    %p405 = scmp.eq.s32.totalorder %s23, 3
    %p406 = por %p404, %p405
    %p407 = scmp.ne.s32.totalorder %s399, %s402
    %p408 = scmp.eq.s32.totalorder %s23, 0
    %p409 = por %p407, %p408
    %p410 = scmp.ne.s32.totalorder %s399, %s402
    %p411 = scmp.eq.s32.totalorder %s28, 3
    %p412 = por %p410, %p411
    %p413 = scmp.ne.s32.totalorder %s402, %s403
    %p414 = scmp.eq.s32.totalorder %s28, 0
    %p415 = por %p413, %p414
    %p416 = scmp.ne.s32.totalorder %s402, %s403
    %p417 = scmp.eq.s32.totalorder %s29, 3
    %p418 = por %p416, %p417
    %p420 = scmp.ne.s32.totalorder %s403, %s419
    %p421 = scmp.eq.s32.totalorder %s29, 0
    %p422 = por %p420, %p421
    %s423 = ssub.s32 %s31, %s38
    %p424 = scmp.eq.s32.totalorder %s423, 0
    %s426 = sadd.s32 %s425, 1
    %s427 = scalar_select %p424, %s425, %s426
    %p430 = pneg %p424
    %p431 = scmp.eq.s32.totalorder %s23, 3
    %p432 = por %p430, %p431
    %p433 = scmp.ne.s32.totalorder %s425, %s428
    %p434 = scmp.eq.s32.totalorder %s23, 0
    %p435 = por %p433, %p434
    %p436 = scmp.ne.s32.totalorder %s425, %s428
    %p437 = scmp.eq.s32.totalorder %s28, 3
    %p438 = por %p436, %p437
    %p439 = scmp.ne.s32.totalorder %s428, %s429
    %p440 = scmp.eq.s32.totalorder %s28, 0
    %p441 = por %p439, %p440
    %p442 = scmp.ne.s32.totalorder %s428, %s429
    %p443 = scmp.eq.s32.totalorder %s29, 3
    %p444 = por %p442, %p443
    %p446 = scmp.ne.s32.totalorder %s429, %s445
    %p447 = scmp.eq.s32.totalorder %s29, 0
    %p448 = por %p446, %p447
    %s449 = ssub.s32 %s31, %s38
    %p450 = scmp.eq.s32.totalorder %s449, 0
    %s452 = sadd.s32 %s451, 1
    %s453 = scalar_select %p450, %s451, %s452
    %p456 = pneg %p450
    %p457 = scmp.eq.s32.totalorder %s23, 3
    %p458 = por %p456, %p457
    %p459 = scmp.ne.s32.totalorder %s451, %s454
    %p460 = scmp.eq.s32.totalorder %s23, 0
    %p461 = por %p459, %p460
    %p462 = scmp.ne.s32.totalorder %s451, %s454
    %p463 = scmp.eq.s32.totalorder %s28, 3
    %p464 = por %p462, %p463
    %p465 = scmp.ne.s32.totalorder %s454, %s455
    %p466 = scmp.eq.s32.totalorder %s28, 0
    %p467 = por %p465, %p466
    %p468 = scmp.ne.s32.totalorder %s454, %s455
    %p469 = scmp.eq.s32.totalorder %s29, 3
    %p470 = por %p468, %p469
    %p472 = scmp.ne.s32.totalorder %s455, %s471
    %p473 = scmp.eq.s32.totalorder %s29, 0
    %p474 = por %p472, %p473
    %s475 = ssub.s32 %s30, %s42
    %p476 = scmp.eq.s32.totalorder %s475, 0
    %s478 = sadd.s32 %s477, 1
    %s479 = scalar_select %p476, %s477, %s478
    %p482 = pneg %p476
    %p483 = scmp.eq.s32.totalorder %s23, 3
    %p484 = por %p482, %p483
    %p485 = scmp.ne.s32.totalorder %s477, %s480
    %p486 = scmp.eq.s32.totalorder %s23, 0
    %p487 = por %p485, %p486
    %p488 = scmp.ne.s32.totalorder %s477, %s480
    %p489 = scmp.eq.s32.totalorder %s28, 3
    %p490 = por %p488, %p489
    %p491 = scmp.ne.s32.totalorder %s480, %s481
    %p492 = scmp.eq.s32.totalorder %s28, 0
    %p493 = por %p491, %p492
    %p494 = scmp.ne.s32.totalorder %s480, %s481
    %p495 = scmp.eq.s32.totalorder %s29, 3
    %p496 = por %p494, %p495
    %p498 = scmp.ne.s32.totalorder %s481, %s497
    %p499 = scmp.eq.s32.totalorder %s29, 0
    %p500 = por %p498, %p499
    %p501 = scmp.le.s32.totalorder 1, %s23
    %p502 = scmp.lt.s32.totalorder %s23, 5
    %p503 = pnand %p501, %p502
    %p504 = pneg %p503
    // Predicated region
    $region9: #{_dense_forward.2} parent=5 // pred_check
      _
    $region10: #{_dense_forward.2} parent=5 // pred_check_branch
      %506 = sbr.rel (%p503) target = $region12
    $region11: #{_dense_forward.2} parent=5 // pred_region
      %s507 = ssub.s32 %s23, 1
      // Predicated region
      $region13: #{_dense_forward.2} parent=11 // pred_check
        %p508 = pneg %p134
      $region14: #{_dense_forward.2} parent=11 // pred_check_branch
        %510 = sbr.rel (%p508) target = $region16
      $region15: #{_dense_forward.2} parent=11 // pred_region
        _
      $region16: #{_dense_forward.2} parent=11 // pred_fallthru
        _
      // Predicated region
      $region17: #{_dense_forward.2} parent=11 // pred_check
        %p511 = pneg %p155
      $region18: #{_dense_forward.2} parent=11 // pred_check_branch
        %513 = sbr.rel (%p511) target = $region20
      $region19: #{_dense_forward.2} parent=11 // pred_region
        _
      $region20: #{_dense_forward.2} parent=11 // pred_fallthru
        _
    $region12: #{_dense_forward.2} parent=5 // pred_fallthru
      _
    %p514 = scmp.lt.s32.totalorder %s23, 4
    // Predicated region
    $region21: #{_dense_forward.2} parent=5 // pred_check
      %p515 = pneg %p514
    $region22: #{_dense_forward.2} parent=5 // pred_check_branch
      %517 = sbr.rel (%p515) target = $region24
    $region23: #{_dense_forward.2} parent=5 // pred_region
      // Predicated region
      $region25: #{_dense_forward.2} parent=23 // pred_check
        %p518 = pneg %p55
      $region26: #{_dense_forward.2} parent=23 // pred_check_branch
        %520 = sbr.rel (%p518) target = $region28
      $region27: #{_dense_forward.2} parent=23 // pred_region
        %p521 = scmp.lt.s32.totalorder %s30, 1
        %s522 = scalar_select %p521, %s30, 1
        %s523 = scalar_lea.vmem %s0, %s522
      $region28: #{_dense_forward.2} parent=23 // pred_fallthru
        _
      // Predicated region
      $region29: #{_dense_forward.2} parent=23 // pred_check
        %p524 = pneg %p81
      $region30: #{_dense_forward.2} parent=23 // pred_check_branch
        %526 = sbr.rel (%p524) target = $region32
      $region31: #{_dense_forward.2} parent=23 // pred_region
        %p527 = scmp.lt.s32.totalorder %s30, 1
        %s528 = scalar_select %p527, %s30, 1
        %s529 = scalar_lea.vmem %s1, %s528
      $region32: #{_dense_forward.2} parent=23 // pred_fallthru
        _
      // Predicated region
      $region33: #{_dense_forward.2} parent=23 // pred_check
        %p530 = pneg %p107
      $region34: #{_dense_forward.2} parent=23 // pred_check_branch
        %532 = sbr.rel (%p530) target = $region36
      $region35: #{_dense_forward.2} parent=23 // pred_region
        %p533 = scmp.lt.s32.totalorder %s30, 1
        %s534 = scalar_select %p533, %s30, 1
        %s535 = smul.addr %s534, 8
        %s536 = scalar_lea.vmem %s2, %s535
      $region36: #{_dense_forward.2} parent=23 // pred_fallthru
        _
      // Predicated region
      $region37: #{_dense_forward.2} parent=23 // pred_check
        %p537 = pneg %p175
      $region38: #{_dense_forward.2} parent=23 // pred_check_branch
        %539 = sbr.rel (%p537) target = $region40
      $region39: #{_dense_forward.2} parent=23 // pred_region
        %p540 = scmp.lt.s32.totalorder %s31, 1
        %s541 = scalar_select %p540, %s31, 1
        %s542 = smul.addr %s541, 4
        %s543 = smul.addr %s542, 8
        %s544 = scalar_lea.vmem %s5, %s543
      $region40: #{_dense_forward.2} parent=23 // pred_fallthru
        _
      // Predicated region
      $region41: #{_dense_forward.2} parent=23 // pred_check
        %p545 = pneg %p201
      $region42: #{_dense_forward.2} parent=23 // pred_check_branch
        %547 = sbr.rel (%p545) target = $region44
      $region43: #{_dense_forward.2} parent=23 // pred_region
        %p548 = scmp.lt.s32.totalorder %s31, 1
        %s549 = scalar_select %p548, %s31, 1
        %s550 = scalar_lea.vmem %s6, %s549
      $region44: #{_dense_forward.2} parent=23 // pred_fallthru
        _
      // Predicated region
      $region45: #{_dense_forward.2} parent=23 // pred_check
        %p551 = pneg %p227
      $region46: #{_dense_forward.2} parent=23 // pred_check_branch
        %553 = sbr.rel (%p551) target = $region48
      $region47: #{_dense_forward.2} parent=23 // pred_region
        %p554 = scmp.lt.s32.totalorder %s31, 1
        %s555 = scalar_select %p554, %s31, 1
        %s556 = smul.addr %s555, 4
        %s557 = smul.addr %s556, 8
        %s558 = scalar_lea.vmem %s7, %s557
      $region48: #{_dense_forward.2} parent=23 // pred_fallthru
        _
      // Predicated region
      $region49: #{_dense_forward.2} parent=23 // pred_check
        %p559 = pneg %p253
      $region50: #{_dense_forward.2} parent=23 // pred_check_branch
        %561 = sbr.rel (%p559) target = $region52
      $region51: #{_dense_forward.2} parent=23 // pred_region
        %p562 = scmp.lt.s32.totalorder %s31, 1
        %s563 = scalar_select %p562, %s31, 1
        %s564 = scalar_lea.vmem %s8, %s563
      $region52: #{_dense_forward.2} parent=23 // pred_fallthru
        _
      // Predicated region
      $region53: #{_dense_forward.2} parent=23 // pred_check
        %p565 = pneg %p279
      $region54: #{_dense_forward.2} parent=23 // pred_check_branch
        %567 = sbr.rel (%p565) target = $region56
      $region55: #{_dense_forward.2} parent=23 // pred_region
        %p568 = scmp.lt.s32.totalorder %s31, 1
        %s569 = scalar_select %p568, %s31, 1
        %s570 = scalar_lea.vmem %s9, %s569
      $region56: #{_dense_forward.2} parent=23 // pred_fallthru
        _
      // Predicated region
      $region57: #{_dense_forward.2} parent=23 // pred_check
        %p571 = pneg %p305
      $region58: #{_dense_forward.2} parent=23 // pred_check_branch
        %573 = sbr.rel (%p571) target = $region60
      $region59: #{_dense_forward.2} parent=23 // pred_region
        %p574 = scmp.lt.s32.totalorder %s31, 1
        %s575 = scalar_select %p574, %s31, 1
        %s576 = scalar_lea.vmem %s10, %s575
      $region60: #{_dense_forward.2} parent=23 // pred_fallthru
        _
      // Predicated region
      $region61: #{_dense_forward.2} parent=23 // pred_check
        %p577 = pneg %p331
      $region62: #{_dense_forward.2} parent=23 // pred_check_branch
        %579 = sbr.rel (%p577) target = $region64
      $region63: #{_dense_forward.2} parent=23 // pred_region
        %p580 = scmp.lt.s32.totalorder %s31, 1
        %s581 = scalar_select %p580, %s31, 1
        %s582 = smul.addr %s581, 4
        %s583 = smul.addr %s582, 8
        %s584 = scalar_lea.vmem %s11, %s583
      $region64: #{_dense_forward.2} parent=23 // pred_fallthru
        _
      // Predicated region
      $region65: #{_dense_forward.2} parent=23 // pred_check
        %p585 = pneg %p357
      $region66: #{_dense_forward.2} parent=23 // pred_check_branch
        %587 = sbr.rel (%p585) target = $region68
      $region67: #{_dense_forward.2} parent=23 // pred_region
        %p588 = scmp.lt.s32.totalorder %s31, 1
        %s589 = scalar_select %p588, %s31, 1
        %s590 = scalar_lea.vmem %s12, %s589
      $region68: #{_dense_forward.2} parent=23 // pred_fallthru
        _
      // Predicated region
      $region69: #{_dense_forward.2} parent=23 // pred_check
        %p591 = pneg %p383
      $region70: #{_dense_forward.2} parent=23 // pred_check_branch
        %593 = sbr.rel (%p591) target = $region72
      $region71: #{_dense_forward.2} parent=23 // pred_region
        %p594 = scmp.lt.s32.totalorder %s31, 1
        %s595 = scalar_select %p594, %s31, 1
        %s596 = smul.addr %s595, 8
        %s597 = smul.addr %s596, 8
        %s598 = scalar_lea.vmem %s13, %s597
      $region72: #{_dense_forward.2} parent=23 // pred_fallthru
        _
      // Predicated region
      $region73: #{_dense_forward.2} parent=23 // pred_check
        %p599 = pneg %p409
      $region74: #{_dense_forward.2} parent=23 // pred_check_branch
        %601 = sbr.rel (%p599) target = $region76
      $region75: #{_dense_forward.2} parent=23 // pred_region
        %p602 = scmp.lt.s32.totalorder %s31, 1
        %s603 = scalar_select %p602, %s31, 1
        %s604 = scalar_lea.vmem %s14, %s603
      $region76: #{_dense_forward.2} parent=23 // pred_fallthru
        _
      // Predicated region
      $region77: #{_dense_forward.2} parent=23 // pred_check
        %p605 = pneg %p435
      $region78: #{_dense_forward.2} parent=23 // pred_check_branch
        %607 = sbr.rel (%p605) target = $region80
      $region79: #{_dense_forward.2} parent=23 // pred_region
        %p608 = scmp.lt.s32.totalorder %s31, 1
        %s609 = scalar_select %p608, %s31, 1
        %s610 = scalar_lea.vmem %s15, %s609
      $region80: #{_dense_forward.2} parent=23 // pred_fallthru
        _
      // Predicated region
      $region81: #{_dense_forward.2} parent=23 // pred_check
        %p611 = pneg %p461
      $region82: #{_dense_forward.2} parent=23 // pred_check_branch
        %613 = sbr.rel (%p611) target = $region84
      $region83: #{_dense_forward.2} parent=23 // pred_region
        %p614 = scmp.lt.s32.totalorder %s31, 1
        %s615 = scalar_select %p614, %s31, 1
        %s616 = scalar_lea.vmem %s16, %s615
      $region84: #{_dense_forward.2} parent=23 // pred_fallthru
        _
    $region24: #{_dense_forward.2} parent=5 // pred_fallthru
      _
    %p617 = scmp.le.s32.totalorder 1, %s23
    %p618 = scmp.lt.s32.totalorder %s23, 5
    %p619 = pnand %p617, %p618
    %p620 = pneg %p619
    // Predicated region
    $region85: #{_dense_forward.2} parent=5 // pred_check
      _
    $region86: #{_dense_forward.2} parent=5 // pred_check_branch
      %622 = sbr.rel (%p619) target = $region88
    $region87: #{_dense_forward.2} parent=5 // pred_region
      %s623 = ssub.s32 %s23, 1
      %p624 = scmp.lt.s32.totalorder %s32, 1
      %s625 = scalar_select %p624, %s32, 1
      %s626 = scalar_lea.vmem %s0, %s625
      %p627 = pneg %p61
      %p628 = pneg %p58
      %p629 = scmp.lt.s32.totalorder %s32, 1
      %s630 = scalar_select %p629, %s32, 1
      %s631 = scalar_lea.vmem %s1, %s630
      %p632 = pneg %p87
      %p633 = pneg %p84
      %p634 = scmp.lt.s32.totalorder %s32, 1
      %s635 = scalar_select %p634, %s32, 1
      %s636 = smul.addr %s635, 8
      %s637 = scalar_lea.vmem %s2, %s636
      %p638 = pneg %p113
      %p639 = pneg %p110
      %p640 = pneg %p134
      %p641 = pneg %p131
      %p642 = pneg %p155
      %p643 = pneg %p152
      %p644 = scmp.lt.s32.totalorder %s33, 1
      %s645 = scalar_select %p644, %s33, 1
      %s646 = smul.addr %s645, 4
      %s647 = smul.addr %s646, 8
      %s648 = scalar_lea.vmem %s5, %s647
      %p649 = pneg %p181
      %p650 = pneg %p178
      %p651 = scmp.lt.s32.totalorder %s33, 1
      %s652 = scalar_select %p651, %s33, 1
      %s653 = scalar_lea.vmem %s6, %s652
      %p654 = pneg %p207
      %p655 = pneg %p204
      %p656 = scmp.lt.s32.totalorder %s33, 1
      %s657 = scalar_select %p656, %s33, 1
      %s658 = smul.addr %s657, 4
      %s659 = smul.addr %s658, 8
      %s660 = scalar_lea.vmem %s7, %s659
      %p661 = pneg %p233
      %p662 = pneg %p230
      %p663 = scmp.lt.s32.totalorder %s33, 1
      %s664 = scalar_select %p663, %s33, 1
      %s665 = scalar_lea.vmem %s8, %s664
      %p666 = pneg %p259
      %p667 = pneg %p256
      %p668 = scmp.lt.s32.totalorder %s33, 1
      %s669 = scalar_select %p668, %s33, 1
      %s670 = scalar_lea.vmem %s9, %s669
      %p671 = pneg %p285
      %p672 = pneg %p282
      %p673 = scmp.lt.s32.totalorder %s33, 1
      %s674 = scalar_select %p673, %s33, 1
      %s675 = scalar_lea.vmem %s10, %s674
      %p676 = pneg %p311
      %p677 = pneg %p308
      %p678 = scmp.lt.s32.totalorder %s33, 1
      %s679 = scalar_select %p678, %s33, 1
      %s680 = smul.addr %s679, 4
      %s681 = smul.addr %s680, 8
      %s682 = scalar_lea.vmem %s11, %s681
      %p683 = pneg %p337
      %p684 = pneg %p334
      %p685 = scmp.lt.s32.totalorder %s33, 1
      %s686 = scalar_select %p685, %s33, 1
      %s687 = scalar_lea.vmem %s12, %s686
      %p688 = pneg %p363
      %p689 = pneg %p360
      %p690 = scmp.lt.s32.totalorder %s33, 1
      %s691 = scalar_select %p690, %s33, 1
      %s692 = smul.addr %s691, 8
      %s693 = smul.addr %s692, 8
      %s694 = scalar_lea.vmem %s13, %s693
      %p695 = pneg %p389
      %p696 = pneg %p386
      %p697 = scmp.lt.s32.totalorder %s33, 1
      %s698 = scalar_select %p697, %s33, 1
      %s699 = scalar_lea.vmem %s14, %s698
      %p700 = pneg %p415
      %p701 = pneg %p412
      %p702 = scmp.lt.s32.totalorder %s33, 1
      %s703 = scalar_select %p702, %s33, 1
      %s704 = scalar_lea.vmem %s15, %s703
      %p705 = pneg %p441
      %p706 = pneg %p438
      %p707 = scmp.lt.s32.totalorder %s33, 1
      %s708 = scalar_select %p707, %s33, 1
      %s709 = scalar_lea.vmem %s16, %s708
      %p710 = pneg %p467
      %p711 = pneg %p464
      %p712 = pneg %p493
      %p713 = pneg %p490
      %p714 = scmp.lt.s32.totalorder %s32, 1
      %s715 = scalar_select %p714, %s32, 1
      %s716 = smul.addr %s715, 8
      %s717 = scalar_lea.vmem %s17, %s716
      %p718 = scmp.lt.s32.totalorder %s32, 1
      %s719 = scalar_select %p718, %s32, 1
      %s720 = scalar_lea.vmem %s0, %s719
      %p721 = scmp.lt.s32.totalorder %s32, 1
      %s722 = scalar_select %p721, %s32, 1
      %s723 = scalar_lea.vmem %s1, %s722
      %p724 = scmp.lt.s32.totalorder %s32, 1
      %s725 = scalar_select %p724, %s32, 1
      %s726 = smul.addr %s725, 8
      %s727 = scalar_lea.vmem %s2, %s726
      %p728 = scmp.lt.s32.totalorder %s33, 1
      %s729 = scalar_select %p728, %s33, 1
      %s730 = smul.addr %s729, 4
      %s731 = smul.addr %s730, 8
      %s732 = scalar_lea.vmem %s5, %s731
      %p733 = scmp.lt.s32.totalorder %s33, 1
      %s734 = scalar_select %p733, %s33, 1
      %s735 = scalar_lea.vmem %s6, %s734
      %p736 = scmp.lt.s32.totalorder %s33, 1
      %s737 = scalar_select %p736, %s33, 1
      %s738 = smul.addr %s737, 4
      %s739 = smul.addr %s738, 8
      %s740 = scalar_lea.vmem %s7, %s739
      %p741 = scmp.lt.s32.totalorder %s33, 1
      %s742 = scalar_select %p741, %s33, 1
      %s743 = scalar_lea.vmem %s8, %s742
      %p744 = scmp.lt.s32.totalorder %s33, 1
      %s745 = scalar_select %p744, %s33, 1
      %s746 = scalar_lea.vmem %s9, %s745
      %p747 = scmp.lt.s32.totalorder %s33, 1
      %s748 = scalar_select %p747, %s33, 1
      %s749 = scalar_lea.vmem %s10, %s748
      %p750 = scmp.lt.s32.totalorder %s33, 1
      %s751 = scalar_select %p750, %s33, 1
      %s752 = smul.addr %s751, 4
      %s753 = smul.addr %s752, 8
      %s754 = scalar_lea.vmem %s11, %s753
      %p755 = scmp.lt.s32.totalorder %s33, 1
      %s756 = scalar_select %p755, %s33, 1
      %s757 = scalar_lea.vmem %s12, %s756
      %p758 = scmp.lt.s32.totalorder %s33, 1
      %s759 = scalar_select %p758, %s33, 1
      %s760 = smul.addr %s759, 8
      %s761 = smul.addr %s760, 8
      %s762 = scalar_lea.vmem %s13, %s761
      %p763 = scmp.lt.s32.totalorder %s33, 1
      %s764 = scalar_select %p763, %s33, 1
      %s765 = scalar_lea.vmem %s14, %s764
      %p766 = scmp.lt.s32.totalorder %s33, 1
      %s767 = scalar_select %p766, %s33, 1
      %s768 = scalar_lea.vmem %s15, %s767
      %p769 = scmp.lt.s32.totalorder %s33, 1
      %s770 = scalar_select %p769, %s33, 1
      %s771 = scalar_lea.vmem %s16, %s770
      %p772 = scmp.lt.s32.totalorder %s32, 1
      %s773 = scalar_select %p772, %s32, 1
      %s774 = smul.addr %s773, 8
      %s775 = scalar_lea.vmem %s17, %s774
      %p777 = scmp.eq.s32.totalorder %s33, 0
      // Predicated region
      $region89: #{_dense_forward.2} parent=87 // pred_check
        %p778 = pneg %p777
      $region90: #{_dense_forward.2} parent=87 // pred_check_branch
        %780 = sbr.rel (%p778) target = $region92
      $region91: #{_dense_forward.2} parent=87 // pred_region
        %v781 = vld [vmem:[%s727] sm:$0xff]
        %v782 = vld [vmem:[%s3] sm:$0x1]
        %v783 = vld [vmem:[%s4] sm:$0x1]
        %vm784 = vcmask 261120
        %v785 = vsel %vm784, %v781, 0.0
        %786 = vadd.xlane.f32.xlu0 %v785
        %v787 = vpop.xlane.xlu0 %786
        %v788 = vrcp.pop 32.0
        %v789 = vmul.f32 %v787, %v788
        %v790 = vsub.f32 %v781, %v789
        %v791 = vmul.f32 %v790, %v790
        %v792 = vsel %vm784, %v791, 0.0
        %793 = vadd.xlane.f32.xlu0 %v792
        %v794 = vpop.xlane.xlu0 %793
        %v795 = vmul.f32 %v794, %v788
        %v796 = vadd.f32 %v795, 1e-12
        %v797 = vrsqrt.pop %v796
        %v798 = vmul.f32 %v790, %v797
        %v800 = vlaneseq
        %v801 = vshrl.u32 %v800, 7
        %v802 = vsub.s32 0, %v801
        %v803 = vrot.slane %v782, %v802
        %v805 = vmul.f32 %v798, %v803
        %v807 = vlaneseq
        %v808 = vshrl.u32 %v807, 7
        %v809 = vsub.s32 0, %v808
        %v810 = vrot.slane %v783, %v809
        %v812 = vadd.f32 %v805, %v810
        %813 = vst.msk [vmem:[%s775] sm:$0xff] %vm784, %v812
      $region92: #{_dense_forward.2} parent=87 // pred_fallthru
        _
      %v814 = vld [vmem:[%s775] sm:$0xff]
      %v815 = vld [vmem:[%s732] sm:$0xff]
      %v816 = vld [vmem:[%s732 + $0x8] sm:$0xff]
      %v817 = vld [vmem:[%s732 + $0x10] sm:$0xff]
      %v818 = vld [vmem:[%s732 + $0x18] sm:$0xff]
      %v819 = vpack.c.bf16 %v814, %v814
      %v820 = vpack.c.bf16 %v816, %v815
      %v821 = vpack.c.bf16 %v818, %v817
      %v822 = vld [vmem:[%s735] sm:$0x1]
      %v824 = vlaneseq
      %v825 = vshrl.u32 %v824, 7
      %v826 = vsub.s32 0, %v825
      %v827 = vrot.slane %v822, %v826
      %vm829 = vcmask 261120
      %v831 = vsel %vm829, %v819, 0
      %833 = vmatprep.subr.bf16.mxu0 0
      %834 = vmatpush1.bf16.msra.mxu0 0
      %835 = vmatprep.subr.bf16.mxu0 0
      %836 = vmatpush1.bf16.msra.mxu0 0
      %837 = vmatprep.subr.bf16.mxu0 0
      %838 = vmatpush1.bf16.msra.mxu0 0
      %839 = vmatprep.subr.bf16.mxu0 0
      %840 = vmatpush1.bf16.msra.mxu0 0
      %841 = vmatprep.subr.bf16.mxu0 0
      %842 = vmatpush1.bf16.msra.mxu0 0
      %843 = vmatprep.subr.bf16.mxu0 0
      %844 = vmatpush1.bf16.msra.mxu0 0
      %845 = vmatprep.subr.bf16.mxu0 0
      %846 = vmatpush1.bf16.msra.mxu0 %v821
      %847 = vmatprep.subr.bf16.mxu0 0
      %848 = vmatpush1.bf16.msra.mxu0 %v820
      %849 = vmatprep.subr.bf16.mxu0 0
      %850 = vmatpush2.bf16.msra.mxu0 0
      %851 = vmatprep.subr.bf16.mxu0 0
      %852 = vmatpush2.bf16.msra.mxu0 0
      %853 = vmatprep.subr.bf16.mxu0 0
      %854 = vmatpush2.bf16.msra.mxu0 0
      %855 = vmatprep.subr.bf16.mxu0 0
      %856 = vmatpush2.bf16.msra.mxu0 0
      %857 = vmatprep.subr.bf16.mxu0 0
      %858 = vmatpush2.bf16.msra.mxu0 0
      %859 = vmatprep.subr.bf16.mxu0 0
      %860 = vmatpush2.bf16.msra.mxu0 0
      %861 = vmatprep.subr.bf16.mxu0 0
      %862 = vmatpush2.bf16.msra.mxu0 0
      %863 = vmatprep.subr.bf16.mxu0 0
      %864 = vmatpush2.bf16.msra.mxu0 0
      %865 = vmatprep.mubr.bf16.mxu0 0
      %866 = vmatmul.mubr.bf16.gmra.mxu0 %v831
      %v867 = vpop.f32.mrf.mxu0
      %v868 = vadd.f32 %v827, %v867
      %v869 = vpop.f32.mrf.mxu0
      %v870 = vpop.f32.mrf.mxu0
      %v871 = vpop.f32.mrf.mxu0
      %872 = vdwg.mxu0
      %v873 = vld [vmem:[%s720] sm:$0x1]
      %vm874 = vcmp.ne.s32.totalorder %v873, 0
      %v875 = vsel %vm874, 1, 0
      %v876 = vlaneseq
      %v877 = vshrl.u32 %v876, 7
      %v878 = vsub.s32 0, %v877
      %v879 = vrot.slane %v875, %v878
      %vm880 = vcmp.eq.s32.totalorder %v879, 1
      %v881 = vlaneseq
      %v882 = vshrl.u32 %v881, 7
      %v883 = vlaneseq
      %v884 = vand.u32 %v883, 127
      %vm885 = vcmp.gt.s32.totalorder %v884, %v882
      %v886 = vld [vmem:[%s723] sm:$0x1]
      %vm887 = vcmp.eq.s32.totalorder %v886, 1
      %v888 = vsel %vm887, 1, 0
      %v889 = vlaneseq
      %v890 = vshrl.u32 %v889, 7
      %v891 = vsub.s32 0, %v890
      %v892 = vrot.slane %v888, %v891
      %vm893 = vcmp.eq.s32.totalorder %v892, 1
      %vm894 = vmand %vm885, %vm893
      %vm895 = vmor %vm894, %vm880
      %v896 = vsel %vm895, -10000.0, 0.0
      %v897 = vld [vmem:[%s740] sm:$0xff]
      %v898 = vld [vmem:[%s740 + $0x8] sm:$0xff]
      %v899 = vld [vmem:[%s740 + $0x10] sm:$0xff]
      %v900 = vld [vmem:[%s740 + $0x18] sm:$0xff]
      %v901 = vmul.f32 %v868, 0.35355338
      %v902 = vpack.c.bf16 %v901, %v901
      %v903 = vpack.c.bf16 %v868, %v868
      %905 = vrot.lane.b32.xlu0 %v903, 96
      %v906 = vpop.permute.xlu0 %905
      %vm907 = vcmask 64512
      %v909 = vsel %vm907, %v902, 0
      %v912 = vsel %vm907, %v906, 0
      %914 = vmatprep.subr.bf16.mxu0 0
      %915 = vmatpush1.bf16.xpose.msra.mxu0 0
      %916 = vmatprep.subr.bf16.mxu0 0
      %917 = vmatpush1.bf16.xpose.msra.mxu0 0
      %918 = vmatprep.subr.bf16.mxu0 0
      %919 = vmatpush1.bf16.xpose.msra.mxu0 0
      %920 = vmatprep.subr.bf16.mxu0 0
      %921 = vmatpush1.bf16.xpose.msra.mxu0 0
      %922 = vmatprep.subr.bf16.mxu0 0
      %923 = vmatpush1.bf16.xpose.msra.mxu0 0
      %924 = vmatprep.subr.bf16.mxu0 0
      %925 = vmatpush1.bf16.xpose.msra.mxu0 0
      %926 = vmatprep.subr.bf16.mxu0 0
      %927 = vmatpush1.bf16.xpose.msra.mxu0 0
      %928 = vmatprep.subr.bf16.mxu0 0
      %929 = vmatpush1.bf16.xpose.msra.mxu0 %v912
      %930 = vmatprep.subr.bf16.mxu0 0
      %931 = vmatpush2.bf16.xpose.msra.mxu0 0
      %932 = vmatprep.subr.bf16.mxu0 0
      %933 = vmatpush2.bf16.xpose.msra.mxu0 0
      %934 = vmatprep.subr.bf16.mxu0 0
      %935 = vmatpush2.bf16.xpose.msra.mxu0 0
      %936 = vmatprep.subr.bf16.mxu0 0
      %937 = vmatpush2.bf16.xpose.msra.mxu0 0
      %938 = vmatprep.subr.bf16.mxu0 0
      %939 = vmatpush2.bf16.xpose.msra.mxu0 0
      %940 = vmatprep.subr.bf16.mxu0 0
      %941 = vmatpush2.bf16.xpose.msra.mxu0 0
      %942 = vmatprep.subr.bf16.mxu0 0
      %943 = vmatpush2.bf16.xpose.msra.mxu0 0
      %944 = vmatprep.subr.bf16.mxu0 0
      %945 = vmatpush2.bf16.xpose.msra.mxu0 0
      %946 = vmatprep.mubr.bf16.mxu0 0
      %947 = vmatmul.mubr.bf16.gmra.mxu0 %v909
      %v948 = vpop.f32.mrf.mxu0
      %v949 = vadd.f32 %v896, %v948
      %v950 = vpop.f32.mrf.mxu0
      %v951 = vpop.f32.mrf.mxu0
      %v952 = vpop.f32.mrf.mxu0
      %953 = vdwg.mxu0
      %v954 = vsel %vm907, %v949, -inf
      %955 = vmax.xlane.f32.xlu0 %v954
      %v956 = vpop.xlane.xlu0 %955
      %v957 = vsub.f32 %v949, %v956
      %v958 = vmul.f32 %v957, 1.442695
      %v959 = vpow.pop %v958
      %v960 = vsel %vm907, %v959, 0.0
      %961 = vadd.xlane.f32.xlu0 %v960
      %v962 = vpop.xlane.xlu0 %961
      %v963 = vrcp.pop %v962
      %v964 = vmul.f32 %v959, %v963
      %v965 = vpack.c.bf16 %v964, %v964
      %966 = vrot.lane.b32.xlu0 %v903, 64
      %v967 = vpop.permute.xlu0 %966
      %v969 = vsel %vm907, %v965, 0
      %vm971 = vcmask 1043456
      %v973 = vsel %vm971, %v967, 0
      %975 = vmatprep.subr.bf16.mxu0 0
      %976 = vmatpush1.bf16.msra.mxu0 0
      %977 = vmatprep.subr.bf16.mxu0 0
      %978 = vmatpush1.bf16.msra.mxu0 0
      %979 = vmatprep.subr.bf16.mxu0 0
      %980 = vmatpush1.bf16.msra.mxu0 0
      %981 = vmatprep.subr.bf16.mxu0 0
      %982 = vmatpush1.bf16.msra.mxu0 0
      %983 = vmatprep.subr.bf16.mxu0 0
      %984 = vmatpush1.bf16.msra.mxu0 0
      %985 = vmatprep.subr.bf16.mxu0 0
      %986 = vmatpush1.bf16.msra.mxu0 0
      %987 = vmatprep.subr.bf16.mxu0 0
      %988 = vmatpush1.bf16.msra.mxu0 0
      %989 = vmatprep.subr.bf16.mxu0 0
      %990 = vmatpush1.bf16.msra.mxu0 %v973
      %991 = vmatprep.subr.bf16.mxu0 0
      %992 = vmatpush2.bf16.msra.mxu0 0
      %993 = vmatprep.subr.bf16.mxu0 0
      %994 = vmatpush2.bf16.msra.mxu0 0
      %995 = vmatprep.subr.bf16.mxu0 0
      %996 = vmatpush2.bf16.msra.mxu0 0
      %997 = vmatprep.subr.bf16.mxu0 0
      %998 = vmatpush2.bf16.msra.mxu0 0
      %999 = vmatprep.subr.bf16.mxu0 0
      %1000 = vmatpush2.bf16.msra.mxu0 0
      %1001 = vmatprep.subr.bf16.mxu0 0
      %1002 = vmatpush2.bf16.msra.mxu0 0
      %1003 = vmatprep.subr.bf16.mxu0 0
      %1004 = vmatpush2.bf16.msra.mxu0 0
      %1005 = vmatprep.subr.bf16.mxu0 0
      %1006 = vmatpush2.bf16.msra.mxu0 0
      %1007 = vmatprep.mubr.bf16.mxu0 0
      %1008 = vmatmul.mubr.bf16.gmra.mxu0 %v969
      %v1009 = vpop.f32.mrf.mxu0
      %v1010 = vadd.f32 0.0, %v1009
      %v1011 = vpop.f32.mrf.mxu0
      %v1012 = vpop.f32.mrf.mxu0
      %v1013 = vpop.f32.mrf.mxu0
      %1014 = vdwg.mxu0
      %v1015 = vpack.c.bf16 %v1010, %v1010
      %v1016 = vpack.c.bf16 %v897, %v897
      %1018 = vrot.lane.b32.xlu0 %v902, 120
      %v1019 = vpop.permute.xlu0 %1018
      %1020 = vrot.lane.b32.xlu0 %v903, 88
      %v1021 = vpop.permute.xlu0 %1020
      %v1023 = vsel %vm907, %v1019, 0
      %v1026 = vsel %vm907, %v1021, 0
      %1028 = vmatprep.subr.bf16.mxu0 0
      %1029 = vmatpush1.bf16.xpose.msra.mxu0 0
      %1030 = vmatprep.subr.bf16.mxu0 0
      %1031 = vmatpush1.bf16.xpose.msra.mxu0 0
      %1032 = vmatprep.subr.bf16.mxu0 0
      %1033 = vmatpush1.bf16.xpose.msra.mxu0 0
      %1034 = vmatprep.subr.bf16.mxu0 0
      %1035 = vmatpush1.bf16.xpose.msra.mxu0 0
      %1036 = vmatprep.subr.bf16.mxu0 0
      %1037 = vmatpush1.bf16.xpose.msra.mxu0 0
      %1038 = vmatprep.subr.bf16.mxu0 0
      %1039 = vmatpush1.bf16.xpose.msra.mxu0 0
      %1040 = vmatprep.subr.bf16.mxu0 0
      %1041 = vmatpush1.bf16.xpose.msra.mxu0 0
      %1042 = vmatprep.subr.bf16.mxu0 0
      %1043 = vmatpush1.bf16.xpose.msra.mxu0 %v1026
      %1044 = vmatprep.subr.bf16.mxu0 0
      %1045 = vmatpush2.bf16.xpose.msra.mxu0 0
      %1046 = vmatprep.subr.bf16.mxu0 0
      %1047 = vmatpush2.bf16.xpose.msra.mxu0 0
      %1048 = vmatprep.subr.bf16.mxu0 0
      %1049 = vmatpush2.bf16.xpose.msra.mxu0 0
      %1050 = vmatprep.subr.bf16.mxu0 0
      %1051 = vmatpush2.bf16.xpose.msra.mxu0 0
      %1052 = vmatprep.subr.bf16.mxu0 0
      %1053 = vmatpush2.bf16.xpose.msra.mxu0 0
      %1054 = vmatprep.subr.bf16.mxu0 0
      %1055 = vmatpush2.bf16.xpose.msra.mxu0 0
      %1056 = vmatprep.subr.bf16.mxu0 0
      %1057 = vmatpush2.bf16.xpose.msra.mxu0 0
      %1058 = vmatprep.subr.bf16.mxu0 0
      %1059 = vmatpush2.bf16.xpose.msra.mxu0 0
      %1060 = vmatprep.mubr.bf16.mxu0 0
      %1061 = vmatmul.mubr.bf16.gmra.mxu0 %v1023
      %v1062 = vpop.f32.mrf.mxu0
      %v1063 = vadd.f32 %v896, %v1062
      %v1064 = vpop.f32.mrf.mxu0
      %v1065 = vpop.f32.mrf.mxu0
      %v1066 = vpop.f32.mrf.mxu0
      %1067 = vdwg.mxu0
      %v1068 = vsel %vm907, %v1063, -inf
      %1069 = vmax.xlane.f32.xlu0 %v1068
      %v1070 = vpop.xlane.xlu0 %1069
      %v1071 = vsub.f32 %v1063, %v1070
      %v1072 = vmul.f32 %v1071, 1.442695
      %v1073 = vpow.pop %v1072
      %v1074 = vsel %vm907, %v1073, 0.0
      %1075 = vadd.xlane.f32.xlu0 %v1074
      %v1076 = vpop.xlane.xlu0 %1075
      %v1077 = vrcp.pop %v1076
      %v1078 = vmul.f32 %v1073, %v1077
      %v1079 = vpack.c.bf16 %v1078, %v1078
      %1080 = vrot.lane.b32.xlu0 %v903, 56
      %v1081 = vpop.permute.xlu0 %1080
      %v1083 = vsel %vm907, %v1079, 0
      %v1086 = vsel %vm971, %v1081, 0
      %1088 = vmatprep.subr.bf16.mxu0 0
      %1089 = vmatpush1.bf16.msra.mxu0 0
      %1090 = vmatprep.subr.bf16.mxu0 0
      %1091 = vmatpush1.bf16.msra.mxu0 0
      %1092 = vmatprep.subr.bf16.mxu0 0
      %1093 = vmatpush1.bf16.msra.mxu0 0
      %1094 = vmatprep.subr.bf16.mxu0 0
      %1095 = vmatpush1.bf16.msra.mxu0 0
      %1096 = vmatprep.subr.bf16.mxu0 0
      %1097 = vmatpush1.bf16.msra.mxu0 0
      %1098 = vmatprep.subr.bf16.mxu0 0
      %1099 = vmatpush1.bf16.msra.mxu0 0
      %1100 = vmatprep.subr.bf16.mxu0 0
      %1101 = vmatpush1.bf16.msra.mxu0 0
      %1102 = vmatprep.subr.bf16.mxu0 0
      %1103 = vmatpush1.bf16.msra.mxu0 %v1086
      %1104 = vmatprep.subr.bf16.mxu0 0
      %1105 = vmatpush2.bf16.msra.mxu0 0
      %1106 = vmatprep.subr.bf16.mxu0 0
      %1107 = vmatpush2.bf16.msra.mxu0 0
      %1108 = vmatprep.subr.bf16.mxu0 0
      %1109 = vmatpush2.bf16.msra.mxu0 0
      %1110 = vmatprep.subr.bf16.mxu0 0
      %1111 = vmatpush2.bf16.msra.mxu0 0
      %1112 = vmatprep.subr.bf16.mxu0 0
      %1113 = vmatpush2.bf16.msra.mxu0 0
      %1114 = vmatprep.subr.bf16.mxu0 0
      %1115 = vmatpush2.bf16.msra.mxu0 0
      %1116 = vmatprep.subr.bf16.mxu0 0
      %1117 = vmatpush2.bf16.msra.mxu0 0
      %1118 = vmatprep.subr.bf16.mxu0 0
      %1119 = vmatpush2.bf16.msra.mxu0 0
      %1120 = vmatprep.mubr.bf16.mxu0 0
      %1121 = vmatmul.mubr.bf16.gmra.mxu0 %v1083
      %v1122 = vpop.f32.mrf.mxu0
      %v1123 = vadd.f32 0.0, %v1122
      %v1124 = vpop.f32.mrf.mxu0
      %v1125 = vpop.f32.mrf.mxu0
      %v1126 = vpop.f32.mrf.mxu0
      %1127 = vdwg.mxu0
      %v1128 = vpack.c.bf16 %v1123, %v1123
      %v1129 = vpack.c.bf16 %v898, %v898
      %v1131 = vsel %vm907, %v1128, 0
      %v1134 = vsel %vm971, %v1129, 0
      %1136 = vmatprep.subr.bf16.mxu0 0
      %1137 = vmatpush1.bf16.msra.mxu0 0
      %1138 = vmatprep.subr.bf16.mxu0 0
      %1139 = vmatpush1.bf16.msra.mxu0 0
      %1140 = vmatprep.subr.bf16.mxu0 0
      %1141 = vmatpush1.bf16.msra.mxu0 0
      %1142 = vmatprep.subr.bf16.mxu0 0
      %1143 = vmatpush1.bf16.msra.mxu0 0
      %1144 = vmatprep.subr.bf16.mxu0 0
      %1145 = vmatpush1.bf16.msra.mxu0 0
      %1146 = vmatprep.subr.bf16.mxu0 0
      %1147 = vmatpush1.bf16.msra.mxu0 0
      %1148 = vmatprep.subr.bf16.mxu0 0
      %1149 = vmatpush1.bf16.msra.mxu0 0
      %1150 = vmatprep.subr.bf16.mxu0 0
      %1151 = vmatpush1.bf16.msra.mxu0 %v1134
      %1152 = vmatprep.subr.bf16.mxu0 0
      %1153 = vmatpush2.bf16.msra.mxu0 0
      %1154 = vmatprep.subr.bf16.mxu0 0
      %1155 = vmatpush2.bf16.msra.mxu0 0
      %1156 = vmatprep.subr.bf16.mxu0 0
      %1157 = vmatpush2.bf16.msra.mxu0 0
      %1158 = vmatprep.subr.bf16.mxu0 0
      %1159 = vmatpush2.bf16.msra.mxu0 0
      %1160 = vmatprep.subr.bf16.mxu0 0
      %1161 = vmatpush2.bf16.msra.mxu0 0
      %1162 = vmatprep.subr.bf16.mxu0 0
      %1163 = vmatpush2.bf16.msra.mxu0 0
      %1164 = vmatprep.subr.bf16.mxu0 0
      %1165 = vmatpush2.bf16.msra.mxu0 0
      %1166 = vmatprep.subr.bf16.mxu0 0
      %1167 = vmatpush2.bf16.msra.mxu0 0
      %1168 = vmatprep.mubr.bf16.mxu0 0
      %1169 = vmatmul.mubr.bf16.gmra.mxu0 %v1131
      %v1170 = vpop.f32.mrf.mxu0
      %v1171 = vadd.f32 0.0, %v1170
      %v1172 = vpop.f32.mrf.mxu0
      %v1173 = vpop.f32.mrf.mxu0
      %v1174 = vpop.f32.mrf.mxu0
      %1175 = vdwg.mxu0
      %v1177 = vsel %vm907, %v1015, 0
      %v1180 = vsel %vm971, %v1016, 0
      %1182 = vmatprep.subr.bf16.mxu0 0
      %1183 = vmatpush1.bf16.msra.mxu0 0
      %1184 = vmatprep.subr.bf16.mxu0 0
      %1185 = vmatpush1.bf16.msra.mxu0 0
      %1186 = vmatprep.subr.bf16.mxu0 0
      %1187 = vmatpush1.bf16.msra.mxu0 0
      %1188 = vmatprep.subr.bf16.mxu0 0
      %1189 = vmatpush1.bf16.msra.mxu0 0
      %1190 = vmatprep.subr.bf16.mxu0 0
      %1191 = vmatpush1.bf16.msra.mxu0 0
      %1192 = vmatprep.subr.bf16.mxu0 0
      %1193 = vmatpush1.bf16.msra.mxu0 0
      %1194 = vmatprep.subr.bf16.mxu0 0
      %1195 = vmatpush1.bf16.msra.mxu0 0
      %1196 = vmatprep.subr.bf16.mxu0 0
      %1197 = vmatpush1.bf16.msra.mxu0 %v1180
      %1198 = vmatprep.subr.bf16.mxu0 0
      %1199 = vmatpush2.bf16.msra.mxu0 0
      %1200 = vmatprep.subr.bf16.mxu0 0
      %1201 = vmatpush2.bf16.msra.mxu0 0
      %1202 = vmatprep.subr.bf16.mxu0 0
      %1203 = vmatpush2.bf16.msra.mxu0 0
      %1204 = vmatprep.subr.bf16.mxu0 0
      %1205 = vmatpush2.bf16.msra.mxu0 0
      %1206 = vmatprep.subr.bf16.mxu0 0
      %1207 = vmatpush2.bf16.msra.mxu0 0
      %1208 = vmatprep.subr.bf16.mxu0 0
      %1209 = vmatpush2.bf16.msra.mxu0 0
      %1210 = vmatprep.subr.bf16.mxu0 0
      %1211 = vmatpush2.bf16.msra.mxu0 0
      %1212 = vmatprep.subr.bf16.mxu0 0
      %1213 = vmatpush2.bf16.msra.mxu0 0
      %1214 = vmatprep.mubr.bf16.mxu0 0
      %1215 = vmatmul.mubr.bf16.gmra.mxu0 %v1177
      %v1216 = vpop.f32.mrf.mxu0
      %v1217 = vadd.f32 %v1171, %v1216
      %v1218 = vpop.f32.mrf.mxu0
      %v1219 = vpop.f32.mrf.mxu0
      %v1220 = vpop.f32.mrf.mxu0
      %1221 = vdwg.mxu0
      %1222 = vrot.lane.b32.xlu0 %v902, 112
      %v1223 = vpop.permute.xlu0 %1222
      %1224 = vrot.lane.b32.xlu0 %v903, 80
      %v1225 = vpop.permute.xlu0 %1224
      %v1227 = vsel %vm907, %v1223, 0
      %v1230 = vsel %vm907, %v1225, 0
      %1232 = vmatprep.subr.bf16.mxu0 0
      %1233 = vmatpush1.bf16.xpose.msra.mxu0 0
      %1234 = vmatprep.subr.bf16.mxu0 0
      %1235 = vmatpush1.bf16.xpose.msra.mxu0 0
      %1236 = vmatprep.subr.bf16.mxu0 0
      %1237 = vmatpush1.bf16.xpose.msra.mxu0 0
      %1238 = vmatprep.subr.bf16.mxu0 0
      %1239 = vmatpush1.bf16.xpose.msra.mxu0 0
      %1240 = vmatprep.subr.bf16.mxu0 0
      %1241 = vmatpush1.bf16.xpose.msra.mxu0 0
      %1242 = vmatprep.subr.bf16.mxu0 0
      %1243 = vmatpush1.bf16.xpose.msra.mxu0 0
      %1244 = vmatprep.subr.bf16.mxu0 0
      %1245 = vmatpush1.bf16.xpose.msra.mxu0 0
      %1246 = vmatprep.subr.bf16.mxu0 0
      %1247 = vmatpush1.bf16.xpose.msra.mxu0 %v1230
      %1248 = vmatprep.subr.bf16.mxu0 0
      %1249 = vmatpush2.bf16.xpose.msra.mxu0 0
      %1250 = vmatprep.subr.bf16.mxu0 0
      %1251 = vmatpush2.bf16.xpose.msra.mxu0 0
      %1252 = vmatprep.subr.bf16.mxu0 0
      %1253 = vmatpush2.bf16.xpose.msra.mxu0 0
      %1254 = vmatprep.subr.bf16.mxu0 0
      %1255 = vmatpush2.bf16.xpose.msra.mxu0 0
      %1256 = vmatprep.subr.bf16.mxu0 0
      %1257 = vmatpush2.bf16.xpose.msra.mxu0 0
      %1258 = vmatprep.subr.bf16.mxu0 0
      %1259 = vmatpush2.bf16.xpose.msra.mxu0 0
      %1260 = vmatprep.subr.bf16.mxu0 0
      %1261 = vmatpush2.bf16.xpose.msra.mxu0 0
      %1262 = vmatprep.subr.bf16.mxu0 0
      %1263 = vmatpush2.bf16.xpose.msra.mxu0 0
      %1264 = vmatprep.mubr.bf16.mxu0 0
      %1265 = vmatmul.mubr.bf16.gmra.mxu0 %v1227
      %v1266 = vpop.f32.mrf.mxu0
      %v1267 = vadd.f32 %v896, %v1266
      %v1268 = vpop.f32.mrf.mxu0
      %v1269 = vpop.f32.mrf.mxu0
      %v1270 = vpop.f32.mrf.mxu0
      %1271 = vdwg.mxu0
      %v1272 = vsel %vm907, %v1267, -inf
      %1273 = vmax.xlane.f32.xlu0 %v1272
      %v1274 = vpop.xlane.xlu0 %1273
      %v1275 = vsub.f32 %v1267, %v1274
      %v1276 = vmul.f32 %v1275, 1.442695
      %v1277 = vpow.pop %v1276
      %v1278 = vsel %vm907, %v1277, 0.0
      %1279 = vadd.xlane.f32.xlu0 %v1278
      %v1280 = vpop.xlane.xlu0 %1279
      %v1281 = vrcp.pop %v1280
      %v1282 = vmul.f32 %v1277, %v1281
      %v1283 = vpack.c.bf16 %v1282, %v1282
      %1284 = vrot.lane.b32.xlu0 %v903, 48
      %v1285 = vpop.permute.xlu0 %1284
      %v1287 = vsel %vm907, %v1283, 0
      %v1290 = vsel %vm971, %v1285, 0
      %1292 = vmatprep.subr.bf16.mxu0 0
      %1293 = vmatpush1.bf16.msra.mxu0 0
      %1294 = vmatprep.subr.bf16.mxu0 0
      %1295 = vmatpush1.bf16.msra.mxu0 0
      %1296 = vmatprep.subr.bf16.mxu0 0
      %1297 = vmatpush1.bf16.msra.mxu0 0
      %1298 = vmatprep.subr.bf16.mxu0 0
      %1299 = vmatpush1.bf16.msra.mxu0 0
      %1300 = vmatprep.subr.bf16.mxu0 0
      %1301 = vmatpush1.bf16.msra.mxu0 0
      %1302 = vmatprep.subr.bf16.mxu0 0
      %1303 = vmatpush1.bf16.msra.mxu0 0
      %1304 = vmatprep.subr.bf16.mxu0 0
      %1305 = vmatpush1.bf16.msra.mxu0 0
      %1306 = vmatprep.subr.bf16.mxu0 0
      %1307 = vmatpush1.bf16.msra.mxu0 %v1290
      %1308 = vmatprep.subr.bf16.mxu0 0
      %1309 = vmatpush2.bf16.msra.mxu0 0
      %1310 = vmatprep.subr.bf16.mxu0 0
      %1311 = vmatpush2.bf16.msra.mxu0 0
      %1312 = vmatprep.subr.bf16.mxu0 0
      %1313 = vmatpush2.bf16.msra.mxu0 0
      %1314 = vmatprep.subr.bf16.mxu0 0
      %1315 = vmatpush2.bf16.msra.mxu0 0
      %1316 = vmatprep.subr.bf16.mxu0 0
      %1317 = vmatpush2.bf16.msra.mxu0 0
      %1318 = vmatprep.subr.bf16.mxu0 0
      %1319 = vmatpush2.bf16.msra.mxu0 0
      %1320 = vmatprep.subr.bf16.mxu0 0
      %1321 = vmatpush2.bf16.msra.mxu0 0
      %1322 = vmatprep.subr.bf16.mxu0 0
      %1323 = vmatpush2.bf16.msra.mxu0 0
      %1324 = vmatprep.mubr.bf16.mxu0 0
      %1325 = vmatmul.mubr.bf16.gmra.mxu0 %v1287
      %v1326 = vpop.f32.mrf.mxu0
      %v1327 = vadd.f32 0.0, %v1326
      %v1328 = vpop.f32.mrf.mxu0
      %v1329 = vpop.f32.mrf.mxu0
      %v1330 = vpop.f32.mrf.mxu0
      %1331 = vdwg.mxu0
      %v1332 = vpack.c.bf16 %v1327, %v1327
      %v1333 = vpack.c.bf16 %v899, %v899
      %v1335 = vsel %vm907, %v1332, 0
      %v1338 = vsel %vm971, %v1333, 0
      %1340 = vmatprep.subr.bf16.mxu0 0
      %1341 = vmatpush1.bf16.msra.mxu0 0
      %1342 = vmatprep.subr.bf16.mxu0 0
      %1343 = vmatpush1.bf16.msra.mxu0 0
      %1344 = vmatprep.subr.bf16.mxu0 0
      %1345 = vmatpush1.bf16.msra.mxu0 0
      %1346 = vmatprep.subr.bf16.mxu0 0
      %1347 = vmatpush1.bf16.msra.mxu0 0
      %1348 = vmatprep.subr.bf16.mxu0 0
      %1349 = vmatpush1.bf16.msra.mxu0 0
      %1350 = vmatprep.subr.bf16.mxu0 0
      %1351 = vmatpush1.bf16.msra.mxu0 0
      %1352 = vmatprep.subr.bf16.mxu0 0
      %1353 = vmatpush1.bf16.msra.mxu0 0
      %1354 = vmatprep.subr.bf16.mxu0 0
      %1355 = vmatpush1.bf16.msra.mxu0 %v1338
      %1356 = vmatprep.subr.bf16.mxu0 0
      %1357 = vmatpush2.bf16.msra.mxu0 0
      %1358 = vmatprep.subr.bf16.mxu0 0
      %1359 = vmatpush2.bf16.msra.mxu0 0
      %1360 = vmatprep.subr.bf16.mxu0 0
      %1361 = vmatpush2.bf16.msra.mxu0 0
      %1362 = vmatprep.subr.bf16.mxu0 0
      %1363 = vmatpush2.bf16.msra.mxu0 0
      %1364 = vmatprep.subr.bf16.mxu0 0
      %1365 = vmatpush2.bf16.msra.mxu0 0
      %1366 = vmatprep.subr.bf16.mxu0 0
      %1367 = vmatpush2.bf16.msra.mxu0 0
      %1368 = vmatprep.subr.bf16.mxu0 0
      %1369 = vmatpush2.bf16.msra.mxu0 0
      %1370 = vmatprep.subr.bf16.mxu0 0
      %1371 = vmatpush2.bf16.msra.mxu0 0
      %1372 = vmatprep.mubr.bf16.mxu0 0
      %1373 = vmatmul.mubr.bf16.gmra.mxu0 %v1335
      %v1374 = vpop.f32.mrf.mxu0
      %v1375 = vadd.f32 0.0, %v1374
      %v1376 = vpop.f32.mrf.mxu0
      %v1377 = vpop.f32.mrf.mxu0
      %v1378 = vpop.f32.mrf.mxu0
      %1379 = vdwg.mxu0
      %v1380 = vadd.f32 %v1217, %v1375
      %1381 = vrot.lane.b32.xlu0 %v902, 104
      %v1382 = vpop.permute.xlu0 %1381
      %1383 = vrot.lane.b32.xlu0 %v903, 72
      %v1384 = vpop.permute.xlu0 %1383
      %v1386 = vsel %vm907, %v1382, 0
      %v1389 = vsel %vm907, %v1384, 0
      %1391 = vmatprep.subr.bf16.mxu0 0
      %1392 = vmatpush1.bf16.xpose.msra.mxu0 0
      %1393 = vmatprep.subr.bf16.mxu0 0
      %1394 = vmatpush1.bf16.xpose.msra.mxu0 0
      %1395 = vmatprep.subr.bf16.mxu0 0
      %1396 = vmatpush1.bf16.xpose.msra.mxu0 0
      %1397 = vmatprep.subr.bf16.mxu0 0
      %1398 = vmatpush1.bf16.xpose.msra.mxu0 0
      %1399 = vmatprep.subr.bf16.mxu0 0
      %1400 = vmatpush1.bf16.xpose.msra.mxu0 0
      %1401 = vmatprep.subr.bf16.mxu0 0
      %1402 = vmatpush1.bf16.xpose.msra.mxu0 0
      %1403 = vmatprep.subr.bf16.mxu0 0
      %1404 = vmatpush1.bf16.xpose.msra.mxu0 0
      %1405 = vmatprep.subr.bf16.mxu0 0
      %1406 = vmatpush1.bf16.xpose.msra.mxu0 %v1389
      %1407 = vmatprep.subr.bf16.mxu0 0
      %1408 = vmatpush2.bf16.xpose.msra.mxu0 0
      %1409 = vmatprep.subr.bf16.mxu0 0
      %1410 = vmatpush2.bf16.xpose.msra.mxu0 0
      %1411 = vmatprep.subr.bf16.mxu0 0
      %1412 = vmatpush2.bf16.xpose.msra.mxu0 0
      %1413 = vmatprep.subr.bf16.mxu0 0
      %1414 = vmatpush2.bf16.xpose.msra.mxu0 0
      %1415 = vmatprep.subr.bf16.mxu0 0
      %1416 = vmatpush2.bf16.xpose.msra.mxu0 0
      %1417 = vmatprep.subr.bf16.mxu0 0
      %1418 = vmatpush2.bf16.xpose.msra.mxu0 0
      %1419 = vmatprep.subr.bf16.mxu0 0
      %1420 = vmatpush2.bf16.xpose.msra.mxu0 0
      %1421 = vmatprep.subr.bf16.mxu0 0
      %1422 = vmatpush2.bf16.xpose.msra.mxu0 0
      %1423 = vmatprep.mubr.bf16.mxu0 0
      %1424 = vmatmul.mubr.bf16.gmra.mxu0 %v1386
      %v1425 = vpop.f32.mrf.mxu0
      %v1426 = vadd.f32 %v896, %v1425
      %v1427 = vpop.f32.mrf.mxu0
      %v1428 = vpop.f32.mrf.mxu0
      %v1429 = vpop.f32.mrf.mxu0
      %1430 = vdwg.mxu0
      %v1431 = vsel %vm907, %v1426, -inf
      %1432 = vmax.xlane.f32.xlu0 %v1431
      %v1433 = vpop.xlane.xlu0 %1432
      %v1434 = vsub.f32 %v1426, %v1433
      %v1435 = vmul.f32 %v1434, 1.442695
      %v1436 = vpow.pop %v1435
      %v1437 = vsel %vm907, %v1436, 0.0
      %1438 = vadd.xlane.f32.xlu0 %v1437
      %v1439 = vpop.xlane.xlu0 %1438
      %v1440 = vrcp.pop %v1439
      %v1441 = vmul.f32 %v1436, %v1440
      %v1442 = vpack.c.bf16 %v1441, %v1441
      %1443 = vrot.lane.b32.xlu0 %v903, 40
      %v1444 = vpop.permute.xlu0 %1443
      %v1446 = vsel %vm907, %v1442, 0
      %v1449 = vsel %vm971, %v1444, 0
      %1451 = vmatprep.subr.bf16.mxu0 0
      %1452 = vmatpush1.bf16.msra.mxu0 0
      %1453 = vmatprep.subr.bf16.mxu0 0
      %1454 = vmatpush1.bf16.msra.mxu0 0
      %1455 = vmatprep.subr.bf16.mxu0 0
      %1456 = vmatpush1.bf16.msra.mxu0 0
      %1457 = vmatprep.subr.bf16.mxu0 0
      %1458 = vmatpush1.bf16.msra.mxu0 0
      %1459 = vmatprep.subr.bf16.mxu0 0
      %1460 = vmatpush1.bf16.msra.mxu0 0
      %1461 = vmatprep.subr.bf16.mxu0 0
      %1462 = vmatpush1.bf16.msra.mxu0 0
      %1463 = vmatprep.subr.bf16.mxu0 0
      %1464 = vmatpush1.bf16.msra.mxu0 0
      %1465 = vmatprep.subr.bf16.mxu0 0
      %1466 = vmatpush1.bf16.msra.mxu0 %v1449
      %1467 = vmatprep.subr.bf16.mxu0 0
      %1468 = vmatpush2.bf16.msra.mxu0 0
      %1469 = vmatprep.subr.bf16.mxu0 0
      %1470 = vmatpush2.bf16.msra.mxu0 0
      %1471 = vmatprep.subr.bf16.mxu0 0
      %1472 = vmatpush2.bf16.msra.mxu0 0
      %1473 = vmatprep.subr.bf16.mxu0 0
      %1474 = vmatpush2.bf16.msra.mxu0 0
      %1475 = vmatprep.subr.bf16.mxu0 0
      %1476 = vmatpush2.bf16.msra.mxu0 0
      %1477 = vmatprep.subr.bf16.mxu0 0
      %1478 = vmatpush2.bf16.msra.mxu0 0
      %1479 = vmatprep.subr.bf16.mxu0 0
      %1480 = vmatpush2.bf16.msra.mxu0 0
      %1481 = vmatprep.subr.bf16.mxu0 0
      %1482 = vmatpush2.bf16.msra.mxu0 0
      %1483 = vmatprep.mubr.bf16.mxu0 0
      %1484 = vmatmul.mubr.bf16.gmra.mxu0 %v1446
      %v1485 = vpop.f32.mrf.mxu0
      %v1486 = vadd.f32 0.0, %v1485
      %v1487 = vpop.f32.mrf.mxu0
      %v1488 = vpop.f32.mrf.mxu0
      %v1489 = vpop.f32.mrf.mxu0
      %1490 = vdwg.mxu0
      %v1491 = vpack.c.bf16 %v1486, %v1486
      %v1492 = vpack.c.bf16 %v900, %v900
      %v1494 = vsel %vm907, %v1491, 0
      %v1497 = vsel %vm971, %v1492, 0
      %1499 = vmatprep.subr.bf16.mxu0 0
      %1500 = vmatpush1.bf16.msra.mxu0 0
      %1501 = vmatprep.subr.bf16.mxu0 0
      %1502 = vmatpush1.bf16.msra.mxu0 0
      %1503 = vmatprep.subr.bf16.mxu0 0
      %1504 = vmatpush1.bf16.msra.mxu0 0
      %1505 = vmatprep.subr.bf16.mxu0 0
      %1506 = vmatpush1.bf16.msra.mxu0 0
      %1507 = vmatprep.subr.bf16.mxu0 0
      %1508 = vmatpush1.bf16.msra.mxu0 0
      %1509 = vmatprep.subr.bf16.mxu0 0
      %1510 = vmatpush1.bf16.msra.mxu0 0
      %1511 = vmatprep.subr.bf16.mxu0 0
      %1512 = vmatpush1.bf16.msra.mxu0 0
      %1513 = vmatprep.subr.bf16.mxu0 0
      %1514 = vmatpush1.bf16.msra.mxu0 %v1497
      %1515 = vmatprep.subr.bf16.mxu0 0
      %1516 = vmatpush2.bf16.msra.mxu0 0
      %1517 = vmatprep.subr.bf16.mxu0 0
      %1518 = vmatpush2.bf16.msra.mxu0 0
      %1519 = vmatprep.subr.bf16.mxu0 0
      %1520 = vmatpush2.bf16.msra.mxu0 0
      %1521 = vmatprep.subr.bf16.mxu0 0
      %1522 = vmatpush2.bf16.msra.mxu0 0
      %1523 = vmatprep.subr.bf16.mxu0 0
      %1524 = vmatpush2.bf16.msra.mxu0 0
      %1525 = vmatprep.subr.bf16.mxu0 0
      %1526 = vmatpush2.bf16.msra.mxu0 0
      %1527 = vmatprep.subr.bf16.mxu0 0
      %1528 = vmatpush2.bf16.msra.mxu0 0
      %1529 = vmatprep.subr.bf16.mxu0 0
      %1530 = vmatpush2.bf16.msra.mxu0 0
      %1531 = vmatprep.mubr.bf16.mxu0 0
      %1532 = vmatmul.mubr.bf16.gmra.mxu0 %v1494
      %v1533 = vpop.f32.mrf.mxu0
      %v1534 = vadd.f32 0.0, %v1533
      %v1535 = vpop.f32.mrf.mxu0
      %v1536 = vpop.f32.mrf.mxu0
      %v1537 = vpop.f32.mrf.mxu0
      %1538 = vdwg.mxu0
      %v1539 = vadd.f32 %v1380, %v1534
      %v1540 = vld [vmem:[%s743] sm:$0x1]
      %v1542 = vlaneseq
      %v1543 = vshrl.u32 %v1542, 7
      %v1544 = vsub.s32 0, %v1543
      %v1545 = vrot.slane %v1540, %v1544
      %v1547 = vadd.f32 %v1539, %v1545
      %v1548 = vadd.f32 %v1547, %v814
      %v1549 = vld [vmem:[%s746] sm:$0x1]
      %v1550 = vld [vmem:[%s749] sm:$0x1]
      %v1551 = vsel %vm829, %v1548, 0.0
      %1552 = vadd.xlane.f32.xlu0 %v1551
      %v1553 = vpop.xlane.xlu0 %1552
      %v1554 = vrcp.pop 32.0
      %v1555 = vmul.f32 %v1553, %v1554
      %v1556 = vsub.f32 %v1548, %v1555
      %v1557 = vmul.f32 %v1556, %v1556
      %v1558 = vsel %vm829, %v1557, 0.0
      %1559 = vadd.xlane.f32.xlu0 %v1558
      %v1560 = vpop.xlane.xlu0 %1559
      %v1561 = vmul.f32 %v1560, %v1554
      %v1562 = vadd.f32 %v1561, 1e-12
      %v1563 = vrsqrt.pop %v1562
      %v1564 = vmul.f32 %v1556, %v1563
      %v1566 = vlaneseq
      %v1567 = vshrl.u32 %v1566, 7
      %v1568 = vsub.s32 0, %v1567
      %v1569 = vrot.slane %v1549, %v1568
      %v1571 = vmul.f32 %v1564, %v1569
      %v1573 = vlaneseq
      %v1574 = vshrl.u32 %v1573, 7
      %v1575 = vsub.s32 0, %v1574
      %v1576 = vrot.slane %v1550, %v1575
      %v1578 = vadd.f32 %v1571, %v1576
      %v1579 = vld [vmem:[%s754] sm:$0xff]
      %v1580 = vld [vmem:[%s754 + $0x8] sm:$0xff]
      %v1581 = vld [vmem:[%s754 + $0x10] sm:$0xff]
      %v1582 = vld [vmem:[%s754 + $0x18] sm:$0xff]
      %v1583 = vpack.c.bf16 %v1578, %v1578
      %v1584 = vpack.c.bf16 %v1580, %v1579
      %v1585 = vpack.c.bf16 %v1582, %v1581
      %v1586 = vld [vmem:[%s757] sm:$0x1]
      %v1588 = vlaneseq
      %v1589 = vshrl.u32 %v1588, 7
      %v1590 = vsub.s32 0, %v1589
      %v1591 = vrot.slane %v1586, %v1590
      %v1594 = vsel %vm829, %v1583, 0
      %1596 = vmatprep.subr.bf16.mxu0 0
      %1597 = vmatpush1.bf16.msra.mxu0 0
      %1598 = vmatprep.subr.bf16.mxu0 0
      %1599 = vmatpush1.bf16.msra.mxu0 0
      %1600 = vmatprep.subr.bf16.mxu0 0
      %1601 = vmatpush1.bf16.msra.mxu0 0
      %1602 = vmatprep.subr.bf16.mxu0 0
      %1603 = vmatpush1.bf16.msra.mxu0 0
      %1604 = vmatprep.subr.bf16.mxu0 0
      %1605 = vmatpush1.bf16.msra.mxu0 0
      %1606 = vmatprep.subr.bf16.mxu0 0
      %1607 = vmatpush1.bf16.msra.mxu0 0
      %1608 = vmatprep.subr.bf16.mxu0 0
      %1609 = vmatpush1.bf16.msra.mxu0 %v1585
      %1610 = vmatprep.subr.bf16.mxu0 0
      %1611 = vmatpush1.bf16.msra.mxu0 %v1584
      %1612 = vmatprep.subr.bf16.mxu0 0
      %1613 = vmatpush2.bf16.msra.mxu0 0
      %1614 = vmatprep.subr.bf16.mxu0 0
      %1615 = vmatpush2.bf16.msra.mxu0 0
      %1616 = vmatprep.subr.bf16.mxu0 0
      %1617 = vmatpush2.bf16.msra.mxu0 0
      %1618 = vmatprep.subr.bf16.mxu0 0
      %1619 = vmatpush2.bf16.msra.mxu0 0
      %1620 = vmatprep.subr.bf16.mxu0 0
      %1621 = vmatpush2.bf16.msra.mxu0 0
      %1622 = vmatprep.subr.bf16.mxu0 0
      %1623 = vmatpush2.bf16.msra.mxu0 0
      %1624 = vmatprep.subr.bf16.mxu0 0
      %1625 = vmatpush2.bf16.msra.mxu0 0
      %1626 = vmatprep.subr.bf16.mxu0 0
      %1627 = vmatpush2.bf16.msra.mxu0 0
      %1628 = vmatprep.mubr.bf16.mxu0 0
      %1629 = vmatmul.mubr.bf16.gmra.mxu0 %v1594
      %v1630 = vpop.f32.mrf.mxu0
      %v1631 = vadd.f32 %v1591, %v1630
      %v1632 = vpop.f32.mrf.mxu0
      %v1633 = vpop.f32.mrf.mxu0
      %v1634 = vpop.f32.mrf.mxu0
      %1635 = vdwg.mxu0
      %v1636 = vmul.f32 %v1631, 0.5
      %v1637 = vmul.f32 %v1631, 0.044715
      %v1638 = vmul.f32 %v1637, %v1631
      %v1639 = vmul.f32 %v1638, %v1631
      %v1640 = vadd.f32 %v1631, %v1639
      %v1641 = vmul.f32 %v1640, 0.7978846
      %v1642 = vtanh.pop %v1641
      %v1643 = vadd.f32 %v1642, 1.0
      %v1644 = vmul.f32 %v1636, %v1643
      %v1645 = vld [vmem:[%s762] sm:$0xff]
      %v1646 = vld [vmem:[%s762 + $0x8] sm:$0xff]
      %v1647 = vld [vmem:[%s762 + $0x10] sm:$0xff]
      %v1648 = vld [vmem:[%s762 + $0x18] sm:$0xff]
      %v1649 = vld [vmem:[%s762 + $0x20] sm:$0xff]
      %v1650 = vld [vmem:[%s762 + $0x28] sm:$0xff]
      %v1651 = vld [vmem:[%s762 + $0x30] sm:$0xff]
      %v1652 = vld [vmem:[%s762 + $0x38] sm:$0xff]
      %v1653 = vpack.c.bf16 %v1644, %v1644
      %v1654 = vpack.c.bf16 %v1646, %v1645
      %v1655 = vpack.c.bf16 %v1648, %v1647
      %v1656 = vpack.c.bf16 %v1650, %v1649
      %v1657 = vpack.c.bf16 %v1652, %v1651
      %v1658 = vld [vmem:[%s765] sm:$0x1]
      %v1660 = vlaneseq
      %v1661 = vshrl.u32 %v1660, 7
      %v1662 = vsub.s32 0, %v1661
      %v1663 = vrot.slane %v1658, %v1662
      %vm1665 = vcmask 523264
      %v1667 = vsel %vm1665, %v1653, 0
      %1669 = vmatprep.subr.bf16.mxu0 0
      %1670 = vmatpush1.bf16.msra.mxu0 0
      %1671 = vmatprep.subr.bf16.mxu0 0
      %1672 = vmatpush1.bf16.msra.mxu0 0
      %1673 = vmatprep.subr.bf16.mxu0 0
      %1674 = vmatpush1.bf16.msra.mxu0 0
      %1675 = vmatprep.subr.bf16.mxu0 0
      %1676 = vmatpush1.bf16.msra.mxu0 0
      %1677 = vmatprep.subr.bf16.mxu0 0
      %1678 = vmatpush1.bf16.msra.mxu0 %v1657
      %1679 = vmatprep.subr.bf16.mxu0 0
      %1680 = vmatpush1.bf16.msra.mxu0 %v1656
      %1681 = vmatprep.subr.bf16.mxu0 0
      %1682 = vmatpush1.bf16.msra.mxu0 %v1655
      %1683 = vmatprep.subr.bf16.mxu0 0
      %1684 = vmatpush1.bf16.msra.mxu0 %v1654
      %1685 = vmatprep.subr.bf16.mxu0 0
      %1686 = vmatpush2.bf16.msra.mxu0 0
      %1687 = vmatprep.subr.bf16.mxu0 0
      %1688 = vmatpush2.bf16.msra.mxu0 0
      %1689 = vmatprep.subr.bf16.mxu0 0
      %1690 = vmatpush2.bf16.msra.mxu0 0
      %1691 = vmatprep.subr.bf16.mxu0 0
      %1692 = vmatpush2.bf16.msra.mxu0 0
      %1693 = vmatprep.subr.bf16.mxu0 0
      %1694 = vmatpush2.bf16.msra.mxu0 0
      %1695 = vmatprep.subr.bf16.mxu0 0
      %1696 = vmatpush2.bf16.msra.mxu0 0
      %1697 = vmatprep.subr.bf16.mxu0 0
      %1698 = vmatpush2.bf16.msra.mxu0 0
      %1699 = vmatprep.subr.bf16.mxu0 0
      %1700 = vmatpush2.bf16.msra.mxu0 0
      %1701 = vmatprep.mubr.bf16.mxu0 0
      %1702 = vmatmul.mubr.bf16.gmra.mxu0 %v1667
      %v1703 = vpop.f32.mrf.mxu0
      %v1704 = vadd.f32 %v1663, %v1703
      %v1705 = vpop.f32.mrf.mxu0
      %v1706 = vpop.f32.mrf.mxu0
      %v1707 = vpop.f32.mrf.mxu0
      %1708 = vdwg.mxu0
      %v1709 = vadd.f32 %v1704, %v1578
      %v1710 = vld [vmem:[%s768] sm:$0x1]
      %v1711 = vld [vmem:[%s771] sm:$0x1]
      %v1712 = vsel %vm829, %v1709, 0.0
      %1713 = vadd.xlane.f32.xlu0 %v1712
      %v1714 = vpop.xlane.xlu0 %1713
      %v1715 = vmul.f32 %v1714, %v1554
      %v1716 = vsub.f32 %v1709, %v1715
      %v1717 = vmul.f32 %v1716, %v1716
      %v1718 = vsel %vm829, %v1717, 0.0
      %1719 = vadd.xlane.f32.xlu0 %v1718
      %v1720 = vpop.xlane.xlu0 %1719
      %v1721 = vmul.f32 %v1720, %v1554
      %v1722 = vadd.f32 %v1721, 1e-12
      %v1723 = vrsqrt.pop %v1722
      %v1724 = vmul.f32 %v1716, %v1723
      %v1726 = vlaneseq
      %v1727 = vshrl.u32 %v1726, 7
      %v1728 = vsub.s32 0, %v1727
      %v1729 = vrot.slane %v1710, %v1728
      %v1731 = vmul.f32 %v1724, %v1729
      %v1733 = vlaneseq
      %v1734 = vshrl.u32 %v1733, 7
      %v1735 = vsub.s32 0, %v1734
      %v1736 = vrot.slane %v1711, %v1735
      %v1738 = vadd.f32 %v1731, %v1736
      %1739 = vst.msk [vmem:[%s775] sm:$0xff] %vm829, %v1738
      %p1740 = scmp.lt.s32.totalorder %s32, 1
      %s1741 = scalar_select %p1740, %s32, 1
      %s1742 = smul.addr %s1741, 8
      %s1743 = scalar_lea.vmem %s17, %s1742
      // Predicated region
      $region93: #{_dense_forward.2} parent=87 // pred_check
        %p1744 = pneg %p490
      $region94: #{_dense_forward.2} parent=87 // pred_check_branch
        %1746 = sbr.rel (%p1744) target = $region96
      $region95: #{_dense_forward.2} parent=87 // pred_region
        _
      $region96: #{_dense_forward.2} parent=87 // pred_fallthru
        _
    $region88: #{_dense_forward.2} parent=5 // pred_fallthru
      _
    %p1747 = scmp.le.s32.totalorder 2, %s23
    // Predicated region
    $region97: #{_dense_forward.2} parent=5 // pred_check
      %p1748 = pneg %p1747
    $region98: #{_dense_forward.2} parent=5 // pred_check_branch
      %1750 = sbr.rel (%p1748) target = $region100
    $region99: #{_dense_forward.2} parent=5 // pred_region
      %s1751 = ssub.s32 %s23, 2
      // Predicated region
      $region101: #{_dense_forward.2} parent=99 // pred_check
        %p1752 = pneg %p496
      $region102: #{_dense_forward.2} parent=99 // pred_check_branch
        %1754 = sbr.rel (%p1752) target = $region104
      $region103: #{_dense_forward.2} parent=99 // pred_region
        %p1755 = scmp.lt.s32.totalorder %s34, 1
        %s1756 = scalar_select %p1755, %s34, 1
        %s1757 = smul.addr %s1756, 8
        %s1758 = scalar_lea.vmem %s17, %s1757
      $region104: #{_dense_forward.2} parent=99 // pred_fallthru
        _
    $region100: #{_dense_forward.2} parent=5 // pred_fallthru
      _
  $region6: #{_dense_forward.2} parent=0 // loop_footer
    %s27 = sadd.s32 1, %s23
  $region7: #{_dense_forward.2} parent=0 // loop_footer_branch
    %22 = sbr.rel target = $region3
  $region8: #{_dense_forward.2} parent=0 // loop_exit
    _

</llo_original>
